<compile_context>
chip_gen: v7x
topology: tpu7x:2x2x1
jax: 0.10.0
libtpu: 0.0.40
codegen_flags: <defaults>
</compile_context>

<pallas_src>
import jax
import jax.numpy as jnp
from jax import lax
from jax.experimental import pallas as pl
from jax.experimental.pallas import tpu as pltpu

F32 = jnp.float32
BF16 = jnp.bfloat16

_C0 = (((0,), (0,)), ((), ()))   # contract lhs axis 0 with rhs axis 0
_C1 = (((1,), (1,)), ((), ()))   # contract lhs axis 1 with rhs axis 1


def _round_up(v, m):
    return ((v + m - 1) // m) * m


# ----------------------------- fused Pallas kernel -----------------------------

def _fused_gnn_kernel(
    x_ref,        # [N, Fn]      f32   node features
    nm_ref,       # [N, 2]       f32   (job_mask, route_mask)
    ea_ref,       # [Ep, Fe]     f32   edge attrs, zero-padded to Ep
    idx_ref,      # [Ea, 2]      int32 (src, dst) incl. self loops; padded edges use index N
    enc_wb_ref,   # [Fn+1, 2H]   f32   rows 0..Fn-1: [jw|rw], row Fn: [jb|rb]
    w16_ref,      # [6H, H]      bf16  c1_wl | c1_wr | c2_wl | c2_wr | sc_w1s | sc_w1d
    fsl_ref,      # [3*Fe+11, H] f32   c1_we|c2_we|sc_w1e | biases/att rows | w2 | b2
    out_ref,      # [1, Ep]      f32   lane-dense scores
    ea_aug_scr,   # [Ea, Fe]     f32   scratch: edge attrs + self-loop 'mean' fill
):
    N, Fn = x_ref.shape
    Ep, Fe = ea_ref.shape
    Ea = idx_ref.shape[0]
    H = w16_ref.shape[1]

    # ---- one-hot gather/scatter selectors built ONCE from the (src,dst) index slab.
    # bf16 copies feed every MXU gather/scatter; an f32 copy feeds the softmax glue.
    # Padded edges carry index N -> all-zero selector rows (no graph contribution).
    col = lax.broadcasted_iota(jnp.int32, (Ea, N), 1)
    idx = idx_ref[...]
    ssrc_f = (col == idx[:, 0:1]).astype(F32)
    sdst_f = (col == idx[:, 1:2]).astype(F32)
    ssrc16 = ssrc_f.astype(BF16)
    sdst16 = sdst_f.astype(BF16)

    # ---- fused job/route encoders: one K=Fn matmul into [N, 2H], slice halves, mask-merge.
    x = x_ref[...]
    henc = jnp.dot(x, enc_wb_ref[0:Fn, :], preferred_element_type=F32) + enc_wb_ref[Fn:Fn + 1, :]
    henc = jnp.maximum(henc, 0.0)
    hj = henc[:, :H]
    hr = henc[:, H:]
    jm = nm_ref[:, 0:1]
    rm = nm_ref[:, 1:2]
    h = rm * hr + (1.0 - rm) * jm * hj          # route wins on overlap; unmasked nodes -> 0

    # ---- GATv2 self-loop edge_attr fill ('mean' of incoming edge attrs per dst node).
    ea = ea_ref[...]
    sdst_e = sdst_f[:Ep, :]                     # original (padded) edges only [Ep, N]
    ones_e = jnp.ones((Ep, 1), F32)
    deg = lax.dot_general(sdst_e, ones_e, _C0, preferred_element_type=F32)    # [N, 1]
    attr_sum = lax.dot_general(sdst_e, ea, _C0, preferred_element_type=F32)   # [N, Fe]
    loop_attr = attr_sum / jnp.maximum(deg, 1.0)                              # no-in-edge -> 0
    ea_aug_scr[pl.ds(0, Ep), :] = ea            # Ep is a multiple of 128 -> aligned stores
    ea_aug_scr[pl.ds(Ep, N), :] = loop_attr
    ea_aug = ea_aug_scr[...]                    # [Ea, Fe]

    # ---- static slices into the packed weight / bias slabs ----
    c1_wl = w16_ref[0 * H:1 * H, :]
    c1_wr = w16_ref[1 * H:2 * H, :]
    c2_wl = w16_ref[2 * H:3 * H, :]
    c2_wr = w16_ref[3 * H:4 * H, :]
    w1s = w16_ref[4 * H:5 * H, :]
    w1d = w16_ref[5 * H:6 * H, :]
    c1_we = fsl_ref[0 * Fe:1 * Fe, :]
    c2_we = fsl_ref[1 * Fe:2 * Fe, :]
    sc_we = fsl_ref[2 * Fe:3 * Fe, :]
    B = 3 * Fe
    c1_bl = fsl_ref[B + 0:B + 1, :]
    c1_br = fsl_ref[B + 1:B + 2, :]
    c1_att = fsl_ref[B + 2:B + 3, :]
    c1_bias = fsl_ref[B + 3:B + 4, :]
    c2_bl = fsl_ref[B + 4:B + 5, :]
    c2_br = fsl_ref[B + 5:B + 6, :]
    c2_att = fsl_ref[B + 6:B + 7, :]
    c2_bias = fsl_ref[B + 7:B + 8, :]
    sc_b1 = fsl_ref[B + 8:B + 9, :]
    sc_w2t = fsl_ref[B + 9:B + 10, :]
    sc_b2 = fsl_ref[B + 10:B + 11, 0:1]

    # ---- one GATv2Conv(H, H, edge_dim) head (heads=1, concat) followed by F.relu ----
    def gat_layer(h, wl16, wr16, we, bl, br, att_row, bias):
        h16 = h.astype(BF16)                                              # hoisted: once per layer
        xl = jnp.dot(h16, wl16, preferred_element_type=F32) + bl          # lin_l(x)  [N, H]
        xr = jnp.dot(h16, wr16, preferred_element_type=F32) + br          # lin_r(x)  [N, H]
        e_src = jnp.dot(ssrc16, xl.astype(BF16), preferred_element_type=F32)   # x_j = x_l[src] [Ea, H]
        e_dst = jnp.dot(sdst16, xr.astype(BF16), preferred_element_type=F32)   # x_i = x_r[dst] [Ea, H]
        e_edge = jnp.dot(ea_aug, we, preferred_element_type=F32)               # lin_edge(edge_attr)
        m = e_src + e_dst + e_edge
        m = jnp.where(m > 0.0, m, 0.2 * m)                                # LeakyReLU(0.2)
        # attention logit: VPU multiply + lane reduce (f32 throughout; v5e has no bf16 VPU)
        logit = jnp.sum(m * att_row, axis=-1, keepdims=True)              # [Ea, 1]
        # segment softmax over edges sharing a dst (self loops guarantee >=1 edge per node)
        masked = jnp.where(sdst_f > 0.5, logit, -1e30)                    # [Ea, N]
        node_max = jnp.max(masked, axis=0, keepdims=True)                 # [1, N]  (XLU)
        edge_max = jnp.sum(sdst_f * node_max, axis=1, keepdims=True)      # [Ea, 1]
        expv = jnp.exp(logit - edge_max)                                  # [Ea, 1]
        # per-node sum and gather-back on the MXU (f32 one-hot contractions are exact)
        node_sum = lax.dot_general(sdst_f, expv, _C0, preferred_element_type=F32)   # [N, 1]
        edge_sum = jnp.dot(sdst_f, node_sum, preferred_element_type=F32)            # [Ea, 1]
        alpha = expv / jnp.maximum(edge_sum, 1e-20)          # exact divide; clamp guards padded rows
        msg = (alpha * e_src).astype(BF16)                   # alpha * x_j
        agg = lax.dot_general(sdst16, msg, _C0, preferred_element_type=F32)         # scatter-add [N, H]
        return jnp.maximum(agg + bias, 0.0)                  # + bias, F.relu

    h = gat_layer(h, c1_wl, c1_wr, c1_we, c1_bl, c1_br, c1_att, c1_bias)
    h = gat_layer(h, c2_wl, c2_wr, c2_we, c2_bl, c2_br, c2_att, c2_bias)

    # ---- edge scorer on the (padded) original edges: MLP(cat([x[src], x[dst], edge_attr])) ----
    h16 = h.astype(BF16)
    xs = jnp.dot(ssrc16[:Ep, :], h16, preferred_element_type=F32)        # x[src]  [Ep, H]
    xd = jnp.dot(sdst16[:Ep, :], h16, preferred_element_type=F32)        # x[dst]  [Ep, H]
    hmid = (jnp.dot(xs.astype(BF16), w1s, preferred_element_type=F32)
            + jnp.dot(xd.astype(BF16), w1d, preferred_element_type=F32)
            + jnp.dot(ea, sc_we, preferred_element_type=F32) + sc_b1)
    hmid = jnp.maximum(hmid, 0.0)                                        # [Ep, H]
    # lane-dense output: [1, Ep], Ep a multiple of 128 -> unmasked vst
    out_ref[...] = lax.dot_general(sc_w2t, hmid, _C1, preferred_element_type=F32) + sc_b2


# ----------------------------- parameters -----------------------------

def init_params(key, node_feat=3, edge_feat=4, hidden=128):
    ks = jax.random.split(key, 20)
    s = 0.1

    def lin(k, fan_in, fan_out):
        kw, kb = jax.random.split(k)
        return (jax.random.normal(kw, (fan_in, fan_out), F32) * s,
                jax.random.normal(kb, (1, fan_out), F32) * s)

    p = {}
    p["job_w"], p["job_b"] = lin(ks[0], node_feat, hidden)
    p["route_w"], p["route_b"] = lin(ks[1], node_feat, hidden)
    for li, base in ((2, "conv1"), (8, "conv2")):
        p[base + "_wl"], p[base + "_bl"] = lin(ks[li], hidden, hidden)
        p[base + "_wr"], p[base + "_br"] = lin(ks[li + 1], hidden, hidden)
        p[base + "_we"] = jax.random.normal(ks[li + 2], (edge_feat, hidden), F32) * s  # no bias
        p[base + "_att"] = jax.random.normal(ks[li + 3], (1, hidden), F32) * s         # att row
        p[base + "_bias"] = jax.random.normal(ks[li + 4], (1, hidden), F32) * s
    # scorer: Linear(2H+edge_feat -> H) split into src/dst/edge blocks, then Linear(H -> 1)
    w1, b1 = lin(ks[14], 2 * hidden + edge_feat, hidden)
    p["sc_w1s"] = w1[:hidden]
    p["sc_w1d"] = w1[hidden:2 * hidden]
    p["sc_w1e"] = w1[2 * hidden:]
    p["sc_b1"] = b1
    w2, b2 = lin(ks[15], hidden, 1)
    p["sc_w2t"] = w2.T          # (1, H): final contraction emits a lane-dense [1, Ep]
    p["sc_b2"] = b2             # (1, 1)
    return p


def pack_params(params):
    """One-time slab packing: big weights as one bf16 slab, small weights/biases as one f32 slab."""
    H = params["job_w"].shape[1]
    enc_wb = jnp.concatenate([
        jnp.concatenate([params["job_w"], params["route_w"]], axis=1),   # [Fn, 2H]
        jnp.concatenate([params["job_b"], params["route_b"]], axis=1),   # [1,  2H]
    ], axis=0).astype(F32)
    w16 = jnp.concatenate([
        params["conv1_wl"], params["conv1_wr"],
        params["conv2_wl"], params["conv2_wr"],
        params["sc_w1s"], params["sc_w1d"],
    ], axis=0).astype(BF16)                                              # [6H, H]
    sc_b2_row = jnp.zeros((1, H), F32).at[0, 0].set(params["sc_b2"][0, 0])
    fsl = jnp.concatenate([
        params["conv1_we"], params["conv2_we"], params["sc_w1e"],
        params["conv1_bl"], params["conv1_br"], params["conv1_att"], params["conv1_bias"],
        params["conv2_bl"], params["conv2_br"], params["conv2_att"], params["conv2_bias"],
        params["sc_b1"], params["sc_w2t"], sc_b2_row,
    ], axis=0).astype(F32)                                               # [3*Fe + 11, H]
    return {"enc_wb": enc_wb, "w16": w16, "fsl": fsl}


# ----------------------------- forward -----------------------------

def schedule_gnn_forward(packed, x, edge_index, edge_attr, job_mask, route_mask):
    N, Fn = x.shape
    E = edge_index.shape[1]
    Fe = edge_attr.shape[1]
    H = packed["w16"].shape[1]
    Ep = max(_round_up(E, 128), 128)       # lane-dense output + aligned scratch stores
    Ea = Ep + N
    pad = Ep - E

    src = edge_index[0].astype(jnp.int32)
    dst = edge_index[1].astype(jnp.int32)
    # padded edges carry index N (never matches a node -> all-zero selector rows in-kernel)
    pad_idx = jnp.full((pad,), N, jnp.int32)
    self_idx = jnp.arange(N, dtype=jnp.int32)
    idx = jnp.stack([jnp.concatenate([src, pad_idx, self_idx]),
                     jnp.concatenate([dst, pad_idx, self_idx])], axis=1)            # [Ea, 2]
    ea = jnp.concatenate([edge_attr.astype(F32), jnp.zeros((pad, Fe), F32)], axis=0)  # [Ep, Fe]
    nm = jnp.stack([job_mask, route_mask], axis=1).astype(F32)                      # [N, 2]

    args = (x.astype(F32), nm, ea, idx, packed["enc_wb"], packed["w16"], packed["fsl"])

    # rough advisory cost estimate for XLA scheduling around the fused call
    flops = 2 * (N * Fn * 2 * H
                 + 2 * (2 * N * H * H + 3 * Ea * N * H + Ea * Fe * H + Ea * H + 2 * Ea * N)
                 + 2 * Ep * N * H + 2 * Ep * H * H + Ep * Fe * H + Ep * H)
    bytes_accessed = sum(int(a.size) * a.dtype.itemsize for a in args) + 4 * Ep
    cost = pl.CostEstimate(flops=int(flops), transcendentals=int(2 * Ea),
                           bytes_accessed=int(bytes_accessed))

    scores = pl.pallas_call(
        _fused_gnn_kernel,
        out_shape=jax.ShapeDtypeStruct((1, Ep), F32),
        in_specs=[pl.BlockSpec(memory_space=pltpu.MemorySpace.VMEM) for _ in args],
        out_specs=pl.BlockSpec(memory_space=pltpu.MemorySpace.VMEM),
        scratch_shapes=[pltpu.VMEM((Ea, Fe), F32)],   # augmented edge_attr (padded edges + self loops)
        cost_estimate=cost,
    )(*args)
    return scores.reshape(Ep)[:E]                     # drop padded edges -> .squeeze()


# ----------------------------- main -----------------------------

if __name__ == "__main__":
    NODE_FEAT, EDGE_FEAT, HIDDEN = 3, 4, 128
    N, E = 16, 24

    key = jax.random.PRNGKey(0)
    k_x, k_e1, k_e2, k_a, k_p = jax.random.split(key, 5)

    x = jax.random.normal(k_x, (N, NODE_FEAT), F32)
    src = jax.random.randint(k_e1, (E,), 0, N, dtype=jnp.int32)
    off = jax.random.randint(k_e2, (E,), 1, N, dtype=jnp.int32)
    dst = (src + off) % N                              # no self loops in the input graph
    edge_index = jnp.stack([src, dst], axis=0)         # [2, E]
    edge_attr = jax.random.normal(k_a, (E, EDGE_FEAT), F32)

    node_ids = jnp.arange(N)
    job_mask = node_ids < (N // 2)                     # first half are jobs
    route_mask = node_ids >= (N // 2)                  # second half are routes

    params = init_params(k_p, NODE_FEAT, EDGE_FEAT, HIDDEN)
    packed = pack_params(params)                       # one-time; outside the per-forward path

    fwd = jax.jit(schedule_gnn_forward)
    out = fwd(packed, x, edge_index, edge_attr, job_mask, route_mask)
    out = jax.block_until_ready(out)
    assert out.shape == (E,)
    print("KERNEL_OK")
</pallas_src>

<mosaic_0001>
module attributes {stable_mosaic.version = 11 : i64} {
  func.func @_fused_gnn_kernel(%arg0: memref<16x3xf32, #tpu.memory_space<vmem>>, %arg1: memref<16x2xf32, #tpu.memory_space<vmem>>, %arg2: memref<128x4xf32, #tpu.memory_space<vmem>>, %arg3: memref<144x2xi32, #tpu.memory_space<vmem>>, %arg4: memref<4x256xf32, #tpu.memory_space<vmem>>, %arg5: memref<768x128xbf16, #tpu.memory_space<vmem>>, %arg6: memref<23x128xf32, #tpu.memory_space<vmem>>, %arg7: memref<1x128xf32, #tpu.memory_space<vmem>>, %arg8: memref<144x4xf32, #tpu.memory_space<vmem>>) attributes {dimension_semantics = [], scalar_prefetch = 0 : i64, scratch_operands = 1 : i64, tpu.core_type = #tpu.core_type<tc>} {
    %0 = tpu.iota {dimensions = array<i32: 1>} : vector<144x16xi32>
    %c0 = arith.constant 0 : index
    %c0_0 = arith.constant 0 : index
    %1 = vector.load %arg3[%c0, %c0_0] : memref<144x2xi32, #tpu.memory_space<vmem>>, vector<144x2xi32>
    %2 = vector.extract_strided_slice %1 {offsets = [0, 0], sizes = [144, 1], strides = [1, 1]} : vector<144x2xi32> to vector<144x1xi32>
    %3 = vector.broadcast %2 : vector<144x1xi32> to vector<144x16xi32>
    %4 = arith.cmpi eq, %0, %3 : vector<144x16xi32>
    %5 = arith.extui %4 : vector<144x16xi1> to vector<144x16xi32>
    %6 = arith.sitofp %5 : vector<144x16xi32> to vector<144x16xf32>
    %7 = vector.extract_strided_slice %1 {offsets = [0, 1], sizes = [144, 1], strides = [1, 1]} : vector<144x2xi32> to vector<144x1xi32>
    %8 = vector.broadcast %7 : vector<144x1xi32> to vector<144x16xi32>
    %9 = arith.cmpi eq, %0, %8 : vector<144x16xi32>
    %10 = arith.extui %9 : vector<144x16xi1> to vector<144x16xi32>
    %11 = arith.sitofp %10 : vector<144x16xi32> to vector<144x16xf32>
    %12 = arith.truncf %6 : vector<144x16xf32> to vector<144x16xbf16>
    %13 = arith.truncf %11 : vector<144x16xf32> to vector<144x16xbf16>
    %c0_1 = arith.constant 0 : index
    %c0_2 = arith.constant 0 : index
    %14 = vector.load %arg0[%c0_1, %c0_2] : memref<16x3xf32, #tpu.memory_space<vmem>>, vector<16x3xf32>
    %c0_3 = arith.constant 0 : index
    %c0_4 = arith.constant 0 : index
    %15 = vector.load %arg4[%c0_3, %c0_4] : memref<4x256xf32, #tpu.memory_space<vmem>>, vector<3x256xf32>
    %cst = arith.constant dense<0.000000e+00> : vector<16x256xf32>
    %16 = tpu.matmul %14, %15, %cst {dimension_numbers = #tpu.dot_dimension_numbers<[1], [0], [0], [1], [0, 0, 1, 1], [], []>} : vector<16x3xf32>, vector<3x256xf32>, vector<16x256xf32> -> vector<16x256xf32>
    %c3 = arith.constant 3 : index
    %c0_5 = arith.constant 0 : index
    %17 = vector.load %arg4[%c3, %c0_5] : memref<4x256xf32, #tpu.memory_space<vmem>>, vector<1x256xf32>
    %18 = vector.broadcast %17 : vector<1x256xf32> to vector<16x256xf32>
    %19 = arith.addf %16, %18 : vector<16x256xf32>
    %cst_6 = arith.constant 0.000000e+00 : f32
    %20 = vector.broadcast %cst_6 : f32 to vector<16x256xf32>
    %21 = arith.maximumf %19, %20 : vector<16x256xf32>
    %22 = vector.extract_strided_slice %21 {offsets = [0, 0], sizes = [16, 128], strides = [1, 1]} : vector<16x256xf32> to vector<16x128xf32>
    %23 = vector.extract_strided_slice %21 {offsets = [0, 128], sizes = [16, 128], strides = [1, 1]} : vector<16x256xf32> to vector<16x128xf32>
    %c0_7 = arith.constant 0 : index
    %c0_8 = arith.constant 0 : index
    %24 = vector.load %arg1[%c0_7, %c0_8] : memref<16x2xf32, #tpu.memory_space<vmem>>, vector<16x1xf32>
    %c0_9 = arith.constant 0 : index
    %c1 = arith.constant 1 : index
    %25 = vector.load %arg1[%c0_9, %c1] : memref<16x2xf32, #tpu.memory_space<vmem>>, vector<16x1xf32>
    %26 = vector.broadcast %25 : vector<16x1xf32> to vector<16x128xf32>
    %27 = arith.mulf %26, %23 : vector<16x128xf32>
    %cst_10 = arith.constant 1.000000e+00 : f32
    %28 = vector.broadcast %cst_10 : f32 to vector<16x1xf32>
    %29 = arith.subf %28, %25 : vector<16x1xf32>
    %30 = arith.mulf %29, %24 : vector<16x1xf32>
    %31 = vector.broadcast %30 : vector<16x1xf32> to vector<16x128xf32>
    %32 = arith.mulf %31, %22 : vector<16x128xf32>
    %33 = arith.addf %27, %32 : vector<16x128xf32>
    %c0_11 = arith.constant 0 : index
    %c0_12 = arith.constant 0 : index
    %34 = vector.load %arg2[%c0_11, %c0_12] : memref<128x4xf32, #tpu.memory_space<vmem>>, vector<128x4xf32>
    %35 = vector.extract_strided_slice %11 {offsets = [0, 0], sizes = [128, 16], strides = [1, 1]} : vector<144x16xf32> to vector<128x16xf32>
    %cst_13 = arith.constant 1.000000e+00 : f32
    %36 = vector.broadcast %cst_13 : f32 to vector<128x1xf32>
    %cst_14 = arith.constant dense<0.000000e+00> : vector<16x1xf32>
    %37 = tpu.matmul %35, %36, %cst_14 {dimension_numbers = #tpu.dot_dimension_numbers<[0], [0], [1], [1], [0, 1, 1, 1], [], []>} : vector<128x16xf32>, vector<128x1xf32>, vector<16x1xf32> -> vector<16x1xf32>
    %cst_15 = arith.constant dense<0.000000e+00> : vector<16x4xf32>
    %38 = tpu.matmul %35, %34, %cst_15 {dimension_numbers = #tpu.dot_dimension_numbers<[0], [0], [1], [1], [0, 1, 1, 1], [], []>} : vector<128x16xf32>, vector<128x4xf32>, vector<16x4xf32> -> vector<16x4xf32>
    %cst_16 = arith.constant 1.000000e+00 : f32
    %39 = vector.broadcast %cst_16 : f32 to vector<16x1xf32>
    %40 = arith.maximumf %37, %39 : vector<16x1xf32>
    %41 = vector.broadcast %40 : vector<16x1xf32> to vector<16x4xf32>
    %42 = arith.divf %38, %41 : vector<16x4xf32>
    %c0_17 = arith.constant 0 : index
    %c0_18 = arith.constant 0 : index
    %43 = vector.load %arg8[%c0_17, %c0_18] : memref<144x4xf32, #tpu.memory_space<vmem>>, vector<128x4xf32>
    tpu.vector_store %arg8[%c0_17, %c0_18], %34 {strides = array<i32>} : memref<144x4xf32, #tpu.memory_space<vmem>>, vector<128x4xf32>,
    %c128 = arith.constant 128 : index
    %c0_19 = arith.constant 0 : index
    %44 = vector.load %arg8[%c128, %c0_19] : memref<144x4xf32, #tpu.memory_space<vmem>>, vector<16x4xf32>
    tpu.vector_store %arg8[%c128, %c0_19], %42 {strides = array<i32>} : memref<144x4xf32, #tpu.memory_space<vmem>>, vector<16x4xf32>,
    %c0_20 = arith.constant 0 : index
    %c0_21 = arith.constant 0 : index
    %45 = vector.load %arg8[%c0_20, %c0_21] : memref<144x4xf32, #tpu.memory_space<vmem>>, vector<144x4xf32>
    %c0_22 = arith.constant 0 : index
    %c0_23 = arith.constant 0 : index
    %46 = vector.load %arg5[%c0_22, %c0_23] : memref<768x128xbf16, #tpu.memory_space<vmem>>, vector<128x128xbf16>
    %c128_24 = arith.constant 128 : index
    %c0_25 = arith.constant 0 : index
    %47 = vector.load %arg5[%c128_24, %c0_25] : memref<768x128xbf16, #tpu.memory_space<vmem>>, vector<128x128xbf16>
    %c256 = arith.constant 256 : index
    %c0_26 = arith.constant 0 : index
    %48 = vector.load %arg5[%c256, %c0_26] : memref<768x128xbf16, #tpu.memory_space<vmem>>, vector<128x128xbf16>
    %c384 = arith.constant 384 : index
    %c0_27 = arith.constant 0 : index
    %49 = vector.load %arg5[%c384, %c0_27] : memref<768x128xbf16, #tpu.memory_space<vmem>>, vector<128x128xbf16>
    %c512 = arith.constant 512 : index
    %c0_28 = arith.constant 0 : index
    %50 = vector.load %arg5[%c512, %c0_28] : memref<768x128xbf16, #tpu.memory_space<vmem>>, vector<128x128xbf16>
    %c640 = arith.constant 640 : index
    %c0_29 = arith.constant 0 : index
    %51 = vector.load %arg5[%c640, %c0_29] : memref<768x128xbf16, #tpu.memory_space<vmem>>, vector<128x128xbf16>
    %c0_30 = arith.constant 0 : index
    %c0_31 = arith.constant 0 : index
    %52 = vector.load %arg6[%c0_30, %c0_31] : memref<23x128xf32, #tpu.memory_space<vmem>>, vector<4x128xf32>
    %c4 = arith.constant 4 : index
    %c0_32 = arith.constant 0 : index
    %53 = vector.load %arg6[%c4, %c0_32] : memref<23x128xf32, #tpu.memory_space<vmem>>, vector<4x128xf32>
    %c8 = arith.constant 8 : index
    %c0_33 = arith.constant 0 : index
    %54 = vector.load %arg6[%c8, %c0_33] : memref<23x128xf32, #tpu.memory_space<vmem>>, vector<4x128xf32>
    %c12 = arith.constant 12 : index
    %c0_34 = arith.constant 0 : index
    %55 = vector.load %arg6[%c12, %c0_34] : memref<23x128xf32, #tpu.memory_space<vmem>>, vector<1x128xf32>
    %c13 = arith.constant 13 : index
    %c0_35 = arith.constant 0 : index
    %56 = vector.load %arg6[%c13, %c0_35] : memref<23x128xf32, #tpu.memory_space<vmem>>, vector<1x128xf32>
    %c14 = arith.constant 14 : index
    %c0_36 = arith.constant 0 : index
    %57 = vector.load %arg6[%c14, %c0_36] : memref<23x128xf32, #tpu.memory_space<vmem>>, vector<1x128xf32>
    %c15 = arith.constant 15 : index
    %c0_37 = arith.constant 0 : index
    %58 = vector.load %arg6[%c15, %c0_37] : memref<23x128xf32, #tpu.memory_space<vmem>>, vector<1x128xf32>
    %c16 = arith.constant 16 : index
    %c0_38 = arith.constant 0 : index
    %59 = vector.load %arg6[%c16, %c0_38] : memref<23x128xf32, #tpu.memory_space<vmem>>, vector<1x128xf32>
    %c17 = arith.constant 17 : index
    %c0_39 = arith.constant 0 : index
    %60 = vector.load %arg6[%c17, %c0_39] : memref<23x128xf32, #tpu.memory_space<vmem>>, vector<1x128xf32>
    %c18 = arith.constant 18 : index
    %c0_40 = arith.constant 0 : index
    %61 = vector.load %arg6[%c18, %c0_40] : memref<23x128xf32, #tpu.memory_space<vmem>>, vector<1x128xf32>
    %c19 = arith.constant 19 : index
    %c0_41 = arith.constant 0 : index
    %62 = vector.load %arg6[%c19, %c0_41] : memref<23x128xf32, #tpu.memory_space<vmem>>, vector<1x128xf32>
    %c20 = arith.constant 20 : index
    %c0_42 = arith.constant 0 : index
    %63 = vector.load %arg6[%c20, %c0_42] : memref<23x128xf32, #tpu.memory_space<vmem>>, vector<1x128xf32>
    %c21 = arith.constant 21 : index
    %c0_43 = arith.constant 0 : index
    %64 = vector.load %arg6[%c21, %c0_43] : memref<23x128xf32, #tpu.memory_space<vmem>>, vector<1x128xf32>
    %c22 = arith.constant 22 : index
    %c0_44 = arith.constant 0 : index
    %65 = vector.load %arg6[%c22, %c0_44] : memref<23x128xf32, #tpu.memory_space<vmem>>, vector<1x1xf32>
    %66 = arith.truncf %33 : vector<16x128xf32> to vector<16x128xbf16>
    %cst_45 = arith.constant dense<0.000000e+00> : vector<16x128xf32>
    %67 = tpu.matmul %66, %46, %cst_45 {dimension_numbers = #tpu.dot_dimension_numbers<[1], [0], [0], [1], [0, 0, 1, 1], [], []>} : vector<16x128xbf16>, vector<128x128xbf16>, vector<16x128xf32> -> vector<16x128xf32>
    %68 = vector.broadcast %55 : vector<1x128xf32> to vector<16x128xf32>
    %69 = arith.addf %67, %68 : vector<16x128xf32>
    %cst_46 = arith.constant dense<0.000000e+00> : vector<16x128xf32>
    %70 = tpu.matmul %66, %47, %cst_46 {dimension_numbers = #tpu.dot_dimension_numbers<[1], [0], [0], [1], [0, 0, 1, 1], [], []>} : vector<16x128xbf16>, vector<128x128xbf16>, vector<16x128xf32> -> vector<16x128xf32>
    %71 = vector.broadcast %56 : vector<1x128xf32> to vector<16x128xf32>
    %72 = arith.addf %70, %71 : vector<16x128xf32>
    %73 = arith.truncf %69 : vector<16x128xf32> to vector<16x128xbf16>
    %cst_47 = arith.constant dense<0.000000e+00> : vector<144x128xf32>
    %74 = tpu.matmul %12, %73, %cst_47 {dimension_numbers = #tpu.dot_dimension_numbers<[1], [0], [0], [1], [0, 0, 1, 1], [], []>} : vector<144x16xbf16>, vector<16x128xbf16>, vector<144x128xf32> -> vector<144x128xf32>
    %75 = arith.truncf %72 : vector<16x128xf32> to vector<16x128xbf16>
    %cst_48 = arith.constant dense<0.000000e+00> : vector<144x128xf32>
    %76 = tpu.matmul %13, %75, %cst_48 {dimension_numbers = #tpu.dot_dimension_numbers<[1], [0], [0], [1], [0, 0, 1, 1], [], []>} : vector<144x16xbf16>, vector<16x128xbf16>, vector<144x128xf32> -> vector<144x128xf32>
    %cst_49 = arith.constant dense<0.000000e+00> : vector<144x128xf32>
    %77 = tpu.matmul %45, %52, %cst_49 {dimension_numbers = #tpu.dot_dimension_numbers<[1], [0], [0], [1], [0, 0, 1, 1], [], []>} : vector<144x4xf32>, vector<4x128xf32>, vector<144x128xf32> -> vector<144x128xf32>
    %78 = arith.addf %74, %76 : vector<144x128xf32>
    %79 = arith.addf %78, %77 : vector<144x128xf32>
    %cst_50 = arith.constant 0.000000e+00 : f32
    %80 = vector.broadcast %cst_50 : f32 to vector<144x128xf32>
    %81 = arith.cmpf ogt, %79, %80 : vector<144x128xf32>
    %cst_51 = arith.constant 2.000000e-01 : f32
    %82 = vector.broadcast %cst_51 : f32 to vector<144x128xf32>
    %83 = arith.mulf %82, %79 : vector<144x128xf32>
    %84 = arith.select %81, %79, %83 : vector<144x128xi1>, vector<144x128xf32>
    %85 = vector.broadcast %57 : vector<1x128xf32> to vector<144x128xf32>
    %86 = arith.mulf %84, %85 : vector<144x128xf32>
    %cst_52 = arith.constant dense<0.000000e+00> : vector<144xf32>
    %87 = vector.multi_reduction <add>, %86, %cst_52 [1] : vector<144x128xf32> to vector<144xf32>
    %88 = vector.shape_cast %87 : vector<144xf32> to vector<144x1xf32>
    %cst_53 = arith.constant 5.000000e-01 : f32
    %89 = vector.broadcast %cst_53 : f32 to vector<144x16xf32>
    %90 = arith.cmpf ogt, %11, %89 : vector<144x16xf32>
    %cst_54 = arith.constant -1.000000e+30 : f32
    %91 = vector.shape_cast %88 : vector<144x1xf32> to vector<144x1xf32>
    %92 = vector.broadcast %91 : vector<144x1xf32> to vector<144x16xf32>
    %93 = vector.broadcast %cst_54 : f32 to vector<144x16xf32>
    %94 = arith.select %90, %92, %93 : vector<144x16xi1>, vector<144x16xf32>
    %cst_55 = arith.constant dense<0xFF800000> : vector<16xf32>
    %95 = vector.multi_reduction <maximumf>, %94, %cst_55 [0] : vector<144x16xf32> to vector<16xf32>
    %96 = vector.shape_cast %95 : vector<16xf32> to vector<1x16xf32>
    %97 = vector.broadcast %96 : vector<1x16xf32> to vector<144x16xf32>
    %98 = arith.mulf %11, %97 : vector<144x16xf32>
    %cst_56 = arith.constant dense<0.000000e+00> : vector<144xf32>
    %99 = vector.multi_reduction <add>, %98, %cst_56 [1] : vector<144x16xf32> to vector<144xf32>
    %100 = vector.shape_cast %99 : vector<144xf32> to vector<144x1xf32>
    %101 = arith.subf %88, %100 : vector<144x1xf32>
    %102 = math.exp %101 : vector<144x1xf32>
    %cst_57 = arith.constant dense<0.000000e+00> : vector<16x1xf32>
    %103 = tpu.matmul %11, %102, %cst_57 {dimension_numbers = #tpu.dot_dimension_numbers<[0], [0], [1], [1], [0, 1, 1, 1], [], []>} : vector<144x16xf32>, vector<144x1xf32>, vector<16x1xf32> -> vector<16x1xf32>
    %cst_58 = arith.constant dense<0.000000e+00> : vector<144x1xf32>
    %104 = tpu.matmul %11, %103, %cst_58 {dimension_numbers = #tpu.dot_dimension_numbers<[1], [0], [0], [1], [0, 0, 1, 1], [], []>} : vector<144x16xf32>, vector<16x1xf32>, vector<144x1xf32> -> vector<144x1xf32>
    %cst_59 = arith.constant 9.99999968E-21 : f32
    %105 = vector.broadcast %cst_59 : f32 to vector<144x1xf32>
    %106 = arith.maximumf %104, %105 : vector<144x1xf32>
    %107 = arith.divf %102, %106 : vector<144x1xf32>
    %108 = vector.broadcast %107 : vector<144x1xf32> to vector<144x128xf32>
    %109 = arith.mulf %108, %74 : vector<144x128xf32>
    %110 = arith.truncf %109 : vector<144x128xf32> to vector<144x128xbf16>
    %cst_60 = arith.constant dense<0.000000e+00> : vector<16x128xf32>
    %111 = tpu.matmul %13, %110, %cst_60 {dimension_numbers = #tpu.dot_dimension_numbers<[0], [0], [1], [1], [0, 1, 1, 1], [], []>} : vector<144x16xbf16>, vector<144x128xbf16>, vector<16x128xf32> -> vector<16x128xf32>
    %112 = vector.broadcast %58 : vector<1x128xf32> to vector<16x128xf32>
    %113 = arith.addf %111, %112 : vector<16x128xf32>
    %cst_61 = arith.constant 0.000000e+00 : f32
    %114 = vector.broadcast %cst_61 : f32 to vector<16x128xf32>
    %115 = arith.maximumf %113, %114 : vector<16x128xf32>
    %116 = arith.truncf %115 : vector<16x128xf32> to vector<16x128xbf16>
    %cst_62 = arith.constant dense<0.000000e+00> : vector<16x128xf32>
    %117 = tpu.matmul %116, %48, %cst_62 {dimension_numbers = #tpu.dot_dimension_numbers<[1], [0], [0], [1], [0, 0, 1, 1], [], []>} : vector<16x128xbf16>, vector<128x128xbf16>, vector<16x128xf32> -> vector<16x128xf32>
    %118 = vector.broadcast %59 : vector<1x128xf32> to vector<16x128xf32>
    %119 = arith.addf %117, %118 : vector<16x128xf32>
    %cst_63 = arith.constant dense<0.000000e+00> : vector<16x128xf32>
    %120 = tpu.matmul %116, %49, %cst_63 {dimension_numbers = #tpu.dot_dimension_numbers<[1], [0], [0], [1], [0, 0, 1, 1], [], []>} : vector<16x128xbf16>, vector<128x128xbf16>, vector<16x128xf32> -> vector<16x128xf32>
    %121 = vector.broadcast %60 : vector<1x128xf32> to vector<16x128xf32>
    %122 = arith.addf %120, %121 : vector<16x128xf32>
    %123 = arith.truncf %119 : vector<16x128xf32> to vector<16x128xbf16>
    %cst_64 = arith.constant dense<0.000000e+00> : vector<144x128xf32>
    %124 = tpu.matmul %12, %123, %cst_64 {dimension_numbers = #tpu.dot_dimension_numbers<[1], [0], [0], [1], [0, 0, 1, 1], [], []>} : vector<144x16xbf16>, vector<16x128xbf16>, vector<144x128xf32> -> vector<144x128xf32>
    %125 = arith.truncf %122 : vector<16x128xf32> to vector<16x128xbf16>
    %cst_65 = arith.constant dense<0.000000e+00> : vector<144x128xf32>
    %126 = tpu.matmul %13, %125, %cst_65 {dimension_numbers = #tpu.dot_dimension_numbers<[1], [0], [0], [1], [0, 0, 1, 1], [], []>} : vector<144x16xbf16>, vector<16x128xbf16>, vector<144x128xf32> -> vector<144x128xf32>
    %cst_66 = arith.constant dense<0.000000e+00> : vector<144x128xf32>
    %127 = tpu.matmul %45, %53, %cst_66 {dimension_numbers = #tpu.dot_dimension_numbers<[1], [0], [0], [1], [0, 0, 1, 1], [], []>} : vector<144x4xf32>, vector<4x128xf32>, vector<144x128xf32> -> vector<144x128xf32>
    %128 = arith.addf %124, %126 : vector<144x128xf32>
    %129 = arith.addf %128, %127 : vector<144x128xf32>
    %cst_67 = arith.constant 0.000000e+00 : f32
    %130 = vector.broadcast %cst_67 : f32 to vector<144x128xf32>
    %131 = arith.cmpf ogt, %129, %130 : vector<144x128xf32>
    %cst_68 = arith.constant 2.000000e-01 : f32
    %132 = vector.broadcast %cst_68 : f32 to vector<144x128xf32>
    %133 = arith.mulf %132, %129 : vector<144x128xf32>
    %134 = arith.select %131, %129, %133 : vector<144x128xi1>, vector<144x128xf32>
    %135 = vector.broadcast %61 : vector<1x128xf32> to vector<144x128xf32>
    %136 = arith.mulf %134, %135 : vector<144x128xf32>
    %cst_69 = arith.constant dense<0.000000e+00> : vector<144xf32>
    %137 = vector.multi_reduction <add>, %136, %cst_69 [1] : vector<144x128xf32> to vector<144xf32>
    %138 = vector.shape_cast %137 : vector<144xf32> to vector<144x1xf32>
    %cst_70 = arith.constant 5.000000e-01 : f32
    %139 = vector.broadcast %cst_70 : f32 to vector<144x16xf32>
    %140 = arith.cmpf ogt, %11, %139 : vector<144x16xf32>
    %cst_71 = arith.constant -1.000000e+30 : f32
    %141 = vector.shape_cast %138 : vector<144x1xf32> to vector<144x1xf32>
    %142 = vector.broadcast %141 : vector<144x1xf32> to vector<144x16xf32>
    %143 = vector.broadcast %cst_71 : f32 to vector<144x16xf32>
    %144 = arith.select %140, %142, %143 : vector<144x16xi1>, vector<144x16xf32>
    %cst_72 = arith.constant dense<0xFF800000> : vector<16xf32>
    %145 = vector.multi_reduction <maximumf>, %144, %cst_72 [0] : vector<144x16xf32> to vector<16xf32>
    %146 = vector.shape_cast %145 : vector<16xf32> to vector<1x16xf32>
    %147 = vector.broadcast %146 : vector<1x16xf32> to vector<144x16xf32>
    %148 = arith.mulf %11, %147 : vector<144x16xf32>
    %cst_73 = arith.constant dense<0.000000e+00> : vector<144xf32>
    %149 = vector.multi_reduction <add>, %148, %cst_73 [1] : vector<144x16xf32> to vector<144xf32>
    %150 = vector.shape_cast %149 : vector<144xf32> to vector<144x1xf32>
    %151 = arith.subf %138, %150 : vector<144x1xf32>
    %152 = math.exp %151 : vector<144x1xf32>
    %cst_74 = arith.constant dense<0.000000e+00> : vector<16x1xf32>
    %153 = tpu.matmul %11, %152, %cst_74 {dimension_numbers = #tpu.dot_dimension_numbers<[0], [0], [1], [1], [0, 1, 1, 1], [], []>} : vector<144x16xf32>, vector<144x1xf32>, vector<16x1xf32> -> vector<16x1xf32>
    %cst_75 = arith.constant dense<0.000000e+00> : vector<144x1xf32>
    %154 = tpu.matmul %11, %153, %cst_75 {dimension_numbers = #tpu.dot_dimension_numbers<[1], [0], [0], [1], [0, 0, 1, 1], [], []>} : vector<144x16xf32>, vector<16x1xf32>, vector<144x1xf32> -> vector<144x1xf32>
    %cst_76 = arith.constant 9.99999968E-21 : f32
    %155 = vector.broadcast %cst_76 : f32 to vector<144x1xf32>
    %156 = arith.maximumf %154, %155 : vector<144x1xf32>
    %157 = arith.divf %152, %156 : vector<144x1xf32>
    %158 = vector.broadcast %157 : vector<144x1xf32> to vector<144x128xf32>
    %159 = arith.mulf %158, %124 : vector<144x128xf32>
    %160 = arith.truncf %159 : vector<144x128xf32> to vector<144x128xbf16>
    %cst_77 = arith.constant dense<0.000000e+00> : vector<16x128xf32>
    %161 = tpu.matmul %13, %160, %cst_77 {dimension_numbers = #tpu.dot_dimension_numbers<[0], [0], [1], [1], [0, 1, 1, 1], [], []>} : vector<144x16xbf16>, vector<144x128xbf16>, vector<16x128xf32> -> vector<16x128xf32>
    %162 = vector.broadcast %62 : vector<1x128xf32> to vector<16x128xf32>
    %163 = arith.addf %161, %162 : vector<16x128xf32>
    %cst_78 = arith.constant 0.000000e+00 : f32
    %164 = vector.broadcast %cst_78 : f32 to vector<16x128xf32>
    %165 = arith.maximumf %163, %164 : vector<16x128xf32>
    %166 = arith.truncf %165 : vector<16x128xf32> to vector<16x128xbf16>
    %167 = vector.extract_strided_slice %12 {offsets = [0, 0], sizes = [128, 16], strides = [1, 1]} : vector<144x16xbf16> to vector<128x16xbf16>
    %cst_79 = arith.constant dense<0.000000e+00> : vector<128x128xf32>
    %168 = tpu.matmul %167, %166, %cst_79 {dimension_numbers = #tpu.dot_dimension_numbers<[1], [0], [0], [1], [0, 0, 1, 1], [], []>} : vector<128x16xbf16>, vector<16x128xbf16>, vector<128x128xf32> -> vector<128x128xf32>
    %169 = vector.extract_strided_slice %13 {offsets = [0, 0], sizes = [128, 16], strides = [1, 1]} : vector<144x16xbf16> to vector<128x16xbf16>
    %cst_80 = arith.constant dense<0.000000e+00> : vector<128x128xf32>
    %170 = tpu.matmul %169, %166, %cst_80 {dimension_numbers = #tpu.dot_dimension_numbers<[1], [0], [0], [1], [0, 0, 1, 1], [], []>} : vector<128x16xbf16>, vector<16x128xbf16>, vector<128x128xf32> -> vector<128x128xf32>
    %171 = arith.truncf %168 : vector<128x128xf32> to vector<128x128xbf16>
    %cst_81 = arith.constant dense<0.000000e+00> : vector<128x128xf32>
    %172 = tpu.matmul %171, %50, %cst_81 {dimension_numbers = #tpu.dot_dimension_numbers<[1], [0], [0], [1], [0, 0, 1, 1], [], []>} : vector<128x128xbf16>, vector<128x128xbf16>, vector<128x128xf32> -> vector<128x128xf32>
    %173 = arith.truncf %170 : vector<128x128xf32> to vector<128x128xbf16>
    %cst_82 = arith.constant dense<0.000000e+00> : vector<128x128xf32>
    %174 = tpu.matmul %173, %51, %cst_82 {dimension_numbers = #tpu.dot_dimension_numbers<[1], [0], [0], [1], [0, 0, 1, 1], [], []>} : vector<128x128xbf16>, vector<128x128xbf16>, vector<128x128xf32> -> vector<128x128xf32>
    %175 = arith.addf %172, %174 : vector<128x128xf32>
    %cst_83 = arith.constant dense<0.000000e+00> : vector<128x128xf32>
    %176 = tpu.matmul %34, %54, %cst_83 {dimension_numbers = #tpu.dot_dimension_numbers<[1], [0], [0], [1], [0, 0, 1, 1], [], []>} : vector<128x4xf32>, vector<4x128xf32>, vector<128x128xf32> -> vector<128x128xf32>
    %177 = arith.addf %175, %176 : vector<128x128xf32>
    %178 = vector.broadcast %63 : vector<1x128xf32> to vector<128x128xf32>
    %179 = arith.addf %177, %178 : vector<128x128xf32>
    %cst_84 = arith.constant 0.000000e+00 : f32
    %180 = vector.broadcast %cst_84 : f32 to vector<128x128xf32>
    %181 = arith.maximumf %179, %180 : vector<128x128xf32>
    %cst_85 = arith.constant dense<0.000000e+00> : vector<1x128xf32>
    %182 = tpu.matmul %64, %181, %cst_85 {dimension_numbers = #tpu.dot_dimension_numbers<[1], [1], [0], [0], [0, 0, 1, 0], [], []>} : vector<1x128xf32>, vector<128x128xf32>, vector<1x128xf32> -> vector<1x128xf32>
    %183 = vector.broadcast %65 : vector<1x1xf32> to vector<1x128xf32>
    %184 = arith.addf %182, %183 : vector<1x128xf32>
    %c0_86 = arith.constant 0 : index
    %c0_87 = arith.constant 0 : index
    %185 = vector.load %arg7[%c0_86, %c0_87] : memref<1x128xf32, #tpu.memory_space<vmem>>, vector<1x128xf32>
    tpu.vector_store %arg7[%c0_86, %c0_87], %184 {strides = array<i32>} : memref<1x128xf32, #tpu.memory_space<vmem>>, vector<1x128xf32>,
    return
  }
}

</mosaic_0001>

<llo_original>
// kernel: schedule_gnn_forward.1
$region0: #{schedule_gnn_forward.1}
  #allocation0 [shape = 'u32[]', space=smem, size = 0x4, offset = 0x4, fixed_abs, tag = 'smem constant byte address 0x4 - core index']
  #allocation1 [shape = 'u32[144,128]{1,0:T(1,128)}', space=vmem, size = 0x12000, scoped, tag = 'internal scratch']
  #allocation2 [shape = 'f32[144,4]{1,0:T(8,128)}', space=vmem, size = 0x12000, scoped, tag = 'scratch operand']
  %s0 = inlined_call_operand.vmem [shape: f32[16,3], index: 0, kind: input, shape index: {}]
  %s1 = inlined_call_operand.vmem [shape: f32[16,2], index: 1, kind: input, shape index: {}]
  %s2 = inlined_call_operand.vmem [shape: f32[128,4], index: 2, kind: input, shape index: {}]
  %s3 = inlined_call_operand.vmem [shape: s32[144,2], index: 3, kind: input, shape index: {}]
  %s4 = inlined_call_operand.vmem [shape: f32[4,256], index: 4, kind: input, shape index: {}]
  %s5 = inlined_call_operand.vmem [shape: bf16[768,128], index: 5, kind: input, shape index: {}]
  %s6 = inlined_call_operand.vmem [shape: f32[23,128], index: 6, kind: input, shape index: {}]
  %s7 = inlined_call_operand.vmem [shape: f32[1,128], index: 7, kind: output, shape index: {}]
  %s8 = sld [smem:[#allocation0]]
  $region38: #{schedule_gnn_forward.1} parent=0
    _
  %s10 = ssub.s32 1, %s8
  %s11 = scalar_select 0, %s10, %s8
  // Predicated region
  $region2: #{schedule_gnn_forward.1} parent=0 // pred_check
    _
  $region3: #{schedule_gnn_forward.1} parent=0 // pred_check_branch
    %13 = sbr.rel (0) target = $region5
  $region4: #{schedule_gnn_forward.1} parent=0 // pred_region
    _
  $region5: #{schedule_gnn_forward.1} parent=0 // pred_fallthru
    _
  // Predicated region
  $region6: #{schedule_gnn_forward.1} parent=0 // pred_check
    _
  $region7: #{schedule_gnn_forward.1} parent=0 // pred_check_branch
    %15 = sbr.rel (0) target = $region9
  $region8: #{schedule_gnn_forward.1} parent=0 // pred_region
    _
  $region9: #{schedule_gnn_forward.1} parent=0 // pred_fallthru
    _
  // Predicated region
  $region10: #{schedule_gnn_forward.1} parent=0 // pred_check
    _
  $region11: #{schedule_gnn_forward.1} parent=0 // pred_check_branch
    %17 = sbr.rel (0) target = $region13
  $region12: #{schedule_gnn_forward.1} parent=0 // pred_region
    _
  $region13: #{schedule_gnn_forward.1} parent=0 // pred_fallthru
    _
  // Predicated region
  $region14: #{schedule_gnn_forward.1} parent=0 // pred_check
    _
  $region15: #{schedule_gnn_forward.1} parent=0 // pred_check_branch
    %19 = sbr.rel (0) target = $region17
  $region16: #{schedule_gnn_forward.1} parent=0 // pred_region
    _
  $region17: #{schedule_gnn_forward.1} parent=0 // pred_fallthru
    _
  // Predicated region
  $region18: #{schedule_gnn_forward.1} parent=0 // pred_check
    _
  $region19: #{schedule_gnn_forward.1} parent=0 // pred_check_branch
    %21 = sbr.rel (0) target = $region21
  $region20: #{schedule_gnn_forward.1} parent=0 // pred_region
    _
  $region21: #{schedule_gnn_forward.1} parent=0 // pred_fallthru
    _
  // Predicated region
  $region22: #{schedule_gnn_forward.1} parent=0 // pred_check
    _
  $region23: #{schedule_gnn_forward.1} parent=0 // pred_check_branch
    %23 = sbr.rel (0) target = $region25
  $region24: #{schedule_gnn_forward.1} parent=0 // pred_region
    _
  $region25: #{schedule_gnn_forward.1} parent=0 // pred_fallthru
    _
  // Predicated region
  $region26: #{schedule_gnn_forward.1} parent=0 // pred_check
    _
  $region27: #{schedule_gnn_forward.1} parent=0 // pred_check_branch
    %25 = sbr.rel (0) target = $region29
  $region28: #{schedule_gnn_forward.1} parent=0 // pred_region
    _
  $region29: #{schedule_gnn_forward.1} parent=0 // pred_fallthru
    _
  %v27 = vlaneseq
  %v28 = vand.u32 %v27, 127
  %v29 = vld [vmem:[%s3] sm:$0xff]
  %v30 = vld [vmem:[%s3 + $0x8] sm:$0xff]
  %v31 = vld [vmem:[%s3 + $0x10] sm:$0xff]
  %v32 = vld [vmem:[%s3 + $0x18] sm:$0xff]
  %v33 = vld [vmem:[%s3 + $0x20] sm:$0xff]
  %v34 = vld [vmem:[%s3 + $0x28] sm:$0xff]
  %v35 = vld [vmem:[%s3 + $0x30] sm:$0xff]
  %v36 = vld [vmem:[%s3 + $0x38] sm:$0xff]
  %v37 = vld [vmem:[%s3 + $0x40] sm:$0xff]
  %v38 = vld [vmem:[%s3 + $0x48] sm:$0xff]
  %v39 = vld [vmem:[%s3 + $0x50] sm:$0xff]
  %v40 = vld [vmem:[%s3 + $0x58] sm:$0xff]
  %v41 = vld [vmem:[%s3 + $0x60] sm:$0xff]
  %v42 = vld [vmem:[%s3 + $0x68] sm:$0xff]
  %v43 = vld [vmem:[%s3 + $0x70] sm:$0xff]
  %v44 = vld [vmem:[%s3 + $0x78] sm:$0xff]
  %v45 = vld [vmem:[%s3 + $0x80] sm:$0xff]
  %v46 = vld [vmem:[%s3 + $0x88] sm:$0xff]
  %47 = vset.pattern.permute.xlu0 0
  %48 = vperm.xlu0 %47, %v29
  %v49 = vpop.permute.xlu0 %48
  %50 = vset.pattern.permute.xlu0 0
  %51 = vperm.xlu0 %50, %v30
  %v52 = vpop.permute.xlu0 %51
  %53 = vset.pattern.permute.xlu0 0
  %54 = vperm.xlu0 %53, %v31
  %v55 = vpop.permute.xlu0 %54
  %56 = vset.pattern.permute.xlu0 0
  %57 = vperm.xlu0 %56, %v32
  %v58 = vpop.permute.xlu0 %57
  %59 = vset.pattern.permute.xlu0 0
  %60 = vperm.xlu0 %59, %v33
  %v61 = vpop.permute.xlu0 %60
  %62 = vset.pattern.permute.xlu0 0
  %63 = vperm.xlu0 %62, %v34
  %v64 = vpop.permute.xlu0 %63
  %65 = vset.pattern.permute.xlu0 0
  %66 = vperm.xlu0 %65, %v35
  %v67 = vpop.permute.xlu0 %66
  %68 = vset.pattern.permute.xlu0 0
  %69 = vperm.xlu0 %68, %v36
  %v70 = vpop.permute.xlu0 %69
  %71 = vset.pattern.permute.xlu0 0
  %72 = vperm.xlu0 %71, %v37
  %v73 = vpop.permute.xlu0 %72
  %74 = vset.pattern.permute.xlu0 0
  %75 = vperm.xlu0 %74, %v38
  %v76 = vpop.permute.xlu0 %75
  %77 = vset.pattern.permute.xlu0 0
  %78 = vperm.xlu0 %77, %v39
  %v79 = vpop.permute.xlu0 %78
  %80 = vset.pattern.permute.xlu0 0
  %81 = vperm.xlu0 %80, %v40
  %v82 = vpop.permute.xlu0 %81
  %83 = vset.pattern.permute.xlu0 0
  %84 = vperm.xlu0 %83, %v41
  %v85 = vpop.permute.xlu0 %84
  %86 = vset.pattern.permute.xlu0 0
  %87 = vperm.xlu0 %86, %v42
  %v88 = vpop.permute.xlu0 %87
  %89 = vset.pattern.permute.xlu0 0
  %90 = vperm.xlu0 %89, %v43
  %v91 = vpop.permute.xlu0 %90
  %92 = vset.pattern.permute.xlu0 0
  %93 = vperm.xlu0 %92, %v44
  %v94 = vpop.permute.xlu0 %93
  %95 = vset.pattern.permute.xlu0 0
  %96 = vperm.xlu0 %95, %v45
  %v97 = vpop.permute.xlu0 %96
  %98 = vset.pattern.permute.xlu0 0
  %99 = vperm.xlu0 %98, %v46
  %v100 = vpop.permute.xlu0 %99
  %vm101 = vcmp.eq.s32.totalorder %v28, %v49
  %vm102 = vcmp.eq.s32.totalorder %v28, %v52
  %vm103 = vcmp.eq.s32.totalorder %v28, %v55
  %vm104 = vcmp.eq.s32.totalorder %v28, %v58
  %vm105 = vcmp.eq.s32.totalorder %v28, %v61
  %vm106 = vcmp.eq.s32.totalorder %v28, %v64
  %vm107 = vcmp.eq.s32.totalorder %v28, %v67
  %vm108 = vcmp.eq.s32.totalorder %v28, %v70
  %vm109 = vcmp.eq.s32.totalorder %v28, %v73
  %vm110 = vcmp.eq.s32.totalorder %v28, %v76
  %vm111 = vcmp.eq.s32.totalorder %v28, %v79
  %vm112 = vcmp.eq.s32.totalorder %v28, %v82
  %vm113 = vcmp.eq.s32.totalorder %v28, %v85
  %vm114 = vcmp.eq.s32.totalorder %v28, %v88
  %vm115 = vcmp.eq.s32.totalorder %v28, %v91
  %vm116 = vcmp.eq.s32.totalorder %v28, %v94
  %vm117 = vcmp.eq.s32.totalorder %v28, %v97
  %vm118 = vcmp.eq.s32.totalorder %v28, %v100
  %119 = vset.pattern.permute.xlu0 1
  %120 = vperm.xlu0 %119, %v29
  %v121 = vpop.permute.xlu0 %120
  %122 = vset.pattern.permute.xlu0 1
  %123 = vperm.xlu0 %122, %v30
  %v124 = vpop.permute.xlu0 %123
  %125 = vset.pattern.permute.xlu0 1
  %126 = vperm.xlu0 %125, %v31
  %v127 = vpop.permute.xlu0 %126
  %128 = vset.pattern.permute.xlu0 1
  %129 = vperm.xlu0 %128, %v32
  %v130 = vpop.permute.xlu0 %129
  %131 = vset.pattern.permute.xlu0 1
  %132 = vperm.xlu0 %131, %v33
  %v133 = vpop.permute.xlu0 %132
  %134 = vset.pattern.permute.xlu0 1
  %135 = vperm.xlu0 %134, %v34
  %v136 = vpop.permute.xlu0 %135
  %137 = vset.pattern.permute.xlu0 1
  %138 = vperm.xlu0 %137, %v35
  %v139 = vpop.permute.xlu0 %138
  %140 = vset.pattern.permute.xlu0 1
  %141 = vperm.xlu0 %140, %v36
  %v142 = vpop.permute.xlu0 %141
  %143 = vset.pattern.permute.xlu0 1
  %144 = vperm.xlu0 %143, %v37
  %v145 = vpop.permute.xlu0 %144
  %146 = vset.pattern.permute.xlu0 1
  %147 = vperm.xlu0 %146, %v38
  %v148 = vpop.permute.xlu0 %147
  %149 = vset.pattern.permute.xlu0 1
  %150 = vperm.xlu0 %149, %v39
  %v151 = vpop.permute.xlu0 %150
  %152 = vset.pattern.permute.xlu0 1
  %153 = vperm.xlu0 %152, %v40
  %v154 = vpop.permute.xlu0 %153
  %155 = vset.pattern.permute.xlu0 1
  %156 = vperm.xlu0 %155, %v41
  %v157 = vpop.permute.xlu0 %156
  %158 = vset.pattern.permute.xlu0 1
  %159 = vperm.xlu0 %158, %v42
  %v160 = vpop.permute.xlu0 %159
  %161 = vset.pattern.permute.xlu0 1
  %162 = vperm.xlu0 %161, %v43
  %v163 = vpop.permute.xlu0 %162
  %164 = vset.pattern.permute.xlu0 1
  %165 = vperm.xlu0 %164, %v44
  %v166 = vpop.permute.xlu0 %165
  %167 = vset.pattern.permute.xlu0 1
  %168 = vperm.xlu0 %167, %v45
  %v169 = vpop.permute.xlu0 %168
  %170 = vset.pattern.permute.xlu0 1
  %171 = vperm.xlu0 %170, %v46
  %v172 = vpop.permute.xlu0 %171
  %vm173 = vcmp.eq.s32.totalorder %v28, %v121
  %vm174 = vcmp.eq.s32.totalorder %v28, %v124
  %vm175 = vcmp.eq.s32.totalorder %v28, %v127
  %vm176 = vcmp.eq.s32.totalorder %v28, %v130
  %vm177 = vcmp.eq.s32.totalorder %v28, %v133
  %vm178 = vcmp.eq.s32.totalorder %v28, %v136
  %vm179 = vcmp.eq.s32.totalorder %v28, %v139
  %vm180 = vcmp.eq.s32.totalorder %v28, %v142
  %vm181 = vcmp.eq.s32.totalorder %v28, %v145
  %vm182 = vcmp.eq.s32.totalorder %v28, %v148
  %vm183 = vcmp.eq.s32.totalorder %v28, %v151
  %vm184 = vcmp.eq.s32.totalorder %v28, %v154
  %vm185 = vcmp.eq.s32.totalorder %v28, %v157
  %vm186 = vcmp.eq.s32.totalorder %v28, %v160
  %vm187 = vcmp.eq.s32.totalorder %v28, %v163
  %vm188 = vcmp.eq.s32.totalorder %v28, %v166
  %vm189 = vcmp.eq.s32.totalorder %v28, %v169
  %vm190 = vcmp.eq.s32.totalorder %v28, %v172
  %v191 = vsel %vm173, 1, 0
  %v192 = vsel %vm174, 1, 0
  %v193 = vsel %vm175, 1, 0
  %v194 = vsel %vm176, 1, 0
  %v195 = vsel %vm177, 1, 0
  %v196 = vsel %vm178, 1, 0
  %v197 = vsel %vm179, 1, 0
  %v198 = vsel %vm180, 1, 0
  %v199 = vsel %vm181, 1, 0
  %v200 = vsel %vm182, 1, 0
  %v201 = vsel %vm183, 1, 0
  %v202 = vsel %vm184, 1, 0
  %v203 = vsel %vm185, 1, 0
  %v204 = vsel %vm186, 1, 0
  %v205 = vsel %vm187, 1, 0
  %v206 = vsel %vm188, 1, 0
  %v207 = vsel %vm189, 1, 0
  %v208 = vsel %vm190, 1, 0
  %v209 = vcvt.s32.f32 %v191
  %v210 = vcvt.s32.f32 %v192
  %v211 = vcvt.s32.f32 %v193
  %v212 = vcvt.s32.f32 %v194
  %v213 = vcvt.s32.f32 %v195
  %v214 = vcvt.s32.f32 %v196
  %v215 = vcvt.s32.f32 %v197
  %v216 = vcvt.s32.f32 %v198
  %v217 = vcvt.s32.f32 %v199
  %v218 = vcvt.s32.f32 %v200
  %v219 = vcvt.s32.f32 %v201
  %v220 = vcvt.s32.f32 %v202
  %v221 = vcvt.s32.f32 %v203
  %v222 = vcvt.s32.f32 %v204
  %v223 = vcvt.s32.f32 %v205
  %v224 = vcvt.s32.f32 %v206
  %v225 = vcvt.s32.f32 %v207
  %v226 = vcvt.s32.f32 %v208
  %v227 = vsel %vm101, 1, 0
  %v228 = vsel %vm102, 1, 0
  %v229 = vsel %vm103, 1, 0
  %v230 = vsel %vm104, 1, 0
  %v231 = vsel %vm105, 1, 0
  %v232 = vsel %vm106, 1, 0
  %v233 = vsel %vm107, 1, 0
  %v234 = vsel %vm108, 1, 0
  %v235 = vsel %vm109, 1, 0
  %v236 = vsel %vm110, 1, 0
  %v237 = vsel %vm111, 1, 0
  %v238 = vsel %vm112, 1, 0
  %v239 = vsel %vm113, 1, 0
  %v240 = vsel %vm114, 1, 0
  %v241 = vsel %vm115, 1, 0
  %v242 = vsel %vm116, 1, 0
  %v243 = vsel %vm117, 1, 0
  %v244 = vsel %vm118, 1, 0
  %v245 = vcvt.s32.f32 %v227
  %v246 = vcvt.s32.f32 %v228
  %v247 = vcvt.s32.f32 %v229
  %v248 = vcvt.s32.f32 %v230
  %v249 = vcvt.s32.f32 %v231
  %v250 = vcvt.s32.f32 %v232
  %v251 = vcvt.s32.f32 %v233
  %v252 = vcvt.s32.f32 %v234
  %v253 = vcvt.s32.f32 %v235
  %v254 = vcvt.s32.f32 %v236
  %v255 = vcvt.s32.f32 %v237
  %v256 = vcvt.s32.f32 %v238
  %v257 = vcvt.s32.f32 %v239
  %v258 = vcvt.s32.f32 %v240
  %v259 = vcvt.s32.f32 %v241
  %v260 = vcvt.s32.f32 %v242
  %v261 = vcvt.s32.f32 %v243
  %v262 = vcvt.s32.f32 %v244
  %v263 = vpack.c.bf16 %v246, %v245
  %v264 = vpack.c.bf16 %v248, %v247
  %v265 = vpack.c.bf16 %v250, %v249
  %v266 = vpack.c.bf16 %v252, %v251
  %v267 = vpack.c.bf16 %v254, %v253
  %v268 = vpack.c.bf16 %v256, %v255
  %v269 = vpack.c.bf16 %v258, %v257
  %v270 = vpack.c.bf16 %v260, %v259
  %v271 = vpack.c.bf16 %v262, %v261
  %v272 = vpack.c.bf16 %v210, %v209
  %v273 = vpack.c.bf16 %v212, %v211
  %v274 = vpack.c.bf16 %v214, %v213
  %v275 = vpack.c.bf16 %v216, %v215
  %v276 = vpack.c.bf16 %v218, %v217
  %v277 = vpack.c.bf16 %v220, %v219
  %v278 = vpack.c.bf16 %v222, %v221
  %v279 = vpack.c.bf16 %v224, %v223
  %v280 = vpack.c.bf16 %v226, %v225
  %v281 = vld [vmem:[%s0] sm:$0xff]
  %v282 = vld [vmem:[%s0 + $0x8] sm:$0xff]
  %v283 = vld [vmem:[%s4] sm:$0x77]
  %s284 = scalar_lea.vmem %s4, 3
  %v285 = vld [vmem:[%s284] ss:$4 sm:$0x3]
  %v287 = vlaneseq
  %v288 = vshrl.u32 %v287, 7
  %v289 = vsub.s32 0, %v288
  %v290 = vrot.slane %v285, %v289
  %v291 = vlaneseq
  %v292 = vshrl.u32 %v291, 7
  %v293 = vsub.s32 1, %v292
  %v294 = vrot.slane %v285, %v293
  %v298 = vcombine.high %v283, %v283
  %vm299 = vcmask 23552
  %v301 = vsel %vm299, %v281, 0
  %v304 = vsel %vm299, %v282, 0
  %vm306 = vcmask 1042432
  %v307 = vsel %vm306, %v283, 0
  %v309 = vsel %vm306, %v298, 0
  %311 = vmatprep.subr.mxu0 %v309
  %312 = vmatpush1.msra.mxu0 %v307
  %313 = vmatprep.subr.mxu0 0.0
  %314 = vmatpush1.msra.mxu0 0.0
  %315 = vmatprep.subr.mxu0 0.0
  %316 = vmatpush1.msra.mxu0 0.0
  %317 = vmatprep.subr.mxu0 0.0
  %318 = vmatpush1.msra.mxu0 0.0
  %319 = vmatprep.subr.mxu0 0.0
  %320 = vmatpush1.msra.mxu0 0.0
  %321 = vmatprep.subr.mxu0 0.0
  %322 = vmatpush1.msra.mxu0 0.0
  %323 = vmatprep.subr.mxu0 0.0
  %324 = vmatpush1.msra.mxu0 0.0
  %325 = vmatprep.subr.mxu0 0.0
  %326 = vmatpush1.msra.mxu0 0.0
  %327 = vmatprep.subr.mxu0 0.0
  %328 = vmatpush1.msra.mxu0 0.0
  %329 = vmatprep.subr.mxu0 0.0
  %330 = vmatpush1.msra.mxu0 0.0
  %331 = vmatprep.subr.mxu0 0.0
  %332 = vmatpush1.msra.mxu0 0.0
  %333 = vmatprep.subr.mxu0 0.0
  %334 = vmatpush1.msra.mxu0 0.0
  %335 = vmatprep.subr.mxu0 0.0
  %336 = vmatpush1.msra.mxu0 0.0
  %337 = vmatprep.subr.mxu0 0.0
  %338 = vmatpush1.msra.mxu0 0.0
  %339 = vmatprep.subr.mxu0 0.0
  %340 = vmatpush1.msra.mxu0 0.0
  %341 = vmatprep.subr.mxu0 0.0
  %342 = vmatpush1.msra.mxu0 0.0
  %343 = vmatprep.subr.mxu0 0.0
  %344 = vmatpush1.msra.mxu0 0.0
  %345 = vmatprep.subr.mxu0 0.0
  %346 = vmatpush1.msra.mxu0 0.0
  %347 = vmatprep.subr.mxu0 0.0
  %348 = vmatpush1.msra.mxu0 0.0
  %349 = vmatprep.subr.mxu0 0.0
  %350 = vmatpush1.msra.mxu0 0.0
  %351 = vmatprep.subr.mxu0 0.0
  %352 = vmatpush1.msra.mxu0 0.0
  %353 = vmatprep.subr.mxu0 0.0
  %354 = vmatpush1.msra.mxu0 0.0
  %355 = vmatprep.subr.mxu0 0.0
  %356 = vmatpush1.msra.mxu0 0.0
  %357 = vmatprep.subr.mxu0 0.0
  %358 = vmatpush1.msra.mxu0 0.0
  %359 = vmatprep.subr.mxu0 0.0
  %360 = vmatpush1.msra.mxu0 0.0
  %361 = vmatprep.subr.mxu0 0.0
  %362 = vmatpush1.msra.mxu0 0.0
  %363 = vmatprep.subr.mxu0 0.0
  %364 = vmatpush1.msra.mxu0 0.0
  %365 = vmatprep.subr.mxu0 0.0
  %366 = vmatpush1.msra.mxu0 0.0
  %367 = vmatprep.subr.mxu0 0.0
  %368 = vmatpush1.msra.mxu0 0.0
  %369 = vmatprep.subr.mxu0 0.0
  %370 = vmatpush1.msra.mxu0 0.0
  %371 = vmatprep.subr.mxu0 0.0
  %372 = vmatpush1.msra.mxu0 0.0
  %373 = vmatprep.subr.mxu0 0.0
  %374 = vmatpush1.msra.mxu0 0.0
  %375 = vmatprep.mubr.f32.mxu0 0.0
  %376 = vmatmul.mubr.f32.gmra.mrb[0].mxu0 %v301
  %v377 = vpop.f32.mrb[0].mxu0
  %v378 = vadd.f32 %v290, %v377
  %v379 = vpop.f32.mrb[0].mxu0
  %v380 = vadd.f32 %v294, %v379
  %381 = vmatprep.mubr.f32.mxu0 0.0
  %382 = vmatmul.mubr.f32.gmra.mrb[0].mxu0 %v304
  %v383 = vpop.f32.mrb[0].mxu0
  %v384 = vadd.f32 %v290, %v383
  %v385 = vpop.f32.mrb[0].mxu0
  %v386 = vadd.f32 %v294, %v385
  %387 = vdwg.mxu0
  %v388 = vmax.f32 %v378, 0.0
  %v389 = vmax.f32 %v380, 0.0
  %v390 = vmax.f32 %v384, 0.0
  %v391 = vmax.f32 %v386, 0.0
  %v392 = vld [vmem:[%s1] sm:$0xff]
  %v393 = vld [vmem:[%s1 + $0x8] sm:$0xff]
  %395 = vset.pattern.permute.xlu0 1
  %396 = vperm.xlu0 %395, %v392
  %v397 = vpop.permute.xlu0 %396
  %400 = vset.pattern.permute.xlu0 1
  %401 = vperm.xlu0 %400, %v393
  %v402 = vpop.permute.xlu0 %401
  %v404 = vmul.f32 %v397, %v389
  %v405 = vmul.f32 %v402, %v391
  %v406 = vsub.f32 1.0, %v392
  %v407 = vsub.f32 1.0, %v393
  %408 = vrot.lane.b32.xlu0 %v392, 1
  %v409 = vpop.permute.xlu0 %408
  %410 = vrot.lane.b32.xlu0 %v393, 1
  %v411 = vpop.permute.xlu0 %410
  %v414 = vmul.f32 %v406, %v409
  %v415 = vmul.f32 %v407, %v411
  %417 = vset.pattern.permute.xlu0 1
  %418 = vperm.xlu0 %417, %v414
  %v419 = vpop.permute.xlu0 %418
  %422 = vset.pattern.permute.xlu0 1
  %423 = vperm.xlu0 %422, %v415
  %v424 = vpop.permute.xlu0 %423
  %v426 = vmul.f32 %v419, %v388
  %v427 = vmul.f32 %v424, %v390
  %v428 = vadd.f32 %v404, %v426
  %v429 = vadd.f32 %v405, %v427
  %v430 = vld [vmem:[%s2] sm:$0xff]
  %v431 = vld [vmem:[%s2 + $0x8] sm:$0xff]
  %v432 = vld [vmem:[%s2 + $0x10] sm:$0xff]
  %v433 = vld [vmem:[%s2 + $0x18] sm:$0xff]
  %v434 = vld [vmem:[%s2 + $0x20] sm:$0xff]
  %v435 = vld [vmem:[%s2 + $0x28] sm:$0xff]
  %v436 = vld [vmem:[%s2 + $0x30] sm:$0xff]
  %v437 = vld [vmem:[%s2 + $0x38] sm:$0xff]
  %v438 = vld [vmem:[%s2 + $0x40] sm:$0xff]
  %v439 = vld [vmem:[%s2 + $0x48] sm:$0xff]
  %v440 = vld [vmem:[%s2 + $0x50] sm:$0xff]
  %v441 = vld [vmem:[%s2 + $0x58] sm:$0xff]
  %v442 = vld [vmem:[%s2 + $0x60] sm:$0xff]
  %v443 = vld [vmem:[%s2 + $0x68] sm:$0xff]
  %v444 = vld [vmem:[%s2 + $0x70] sm:$0xff]
  %v445 = vld [vmem:[%s2 + $0x78] sm:$0xff]
  %446 = vxpose.xlu0.b32.start [1/16] %v209, 128
  %447 = vxpose.xlu0.b32.cont [2/16] %v210, 128
  %448 = vxpose.xlu0.b32.cont [3/16] %v211, 128
  %449 = vxpose.xlu0.b32.cont [4/16] %v212, 128
  %450 = vxpose.xlu0.b32.cont [5/16] %v213, 128
  %451 = vxpose.xlu0.b32.cont [6/16] %v214, 128
  %452 = vxpose.xlu0.b32.cont [7/16] %v215, 128
  %453 = vxpose.xlu0.b32.cont [8/16] %v216, 128
  %454 = vxpose.xlu0.b32.cont [9/16] %v217, 128
  %455 = vxpose.xlu0.b32.cont [10/16] %v218, 128
  %456 = vxpose.xlu0.b32.cont [11/16] %v219, 128
  %457 = vxpose.xlu0.b32.cont [12/16] %v220, 128
  %458 = vxpose.xlu0.b32.cont [13/16] %v221, 128
  %459 = vxpose.xlu0.b32.cont [14/16] %v222, 128
  %460 = vxpose.xlu0.b32.cont [15/16] %v223, 128
  %461 = vxpose.xlu0.b32.end [16/16] %v224, 128
  %v462 = vpop.trf.xlu0
  %v463 = vpop.trf.xlu0
  %v464 = vpop.trf.xlu0
  %v465 = vpop.trf.xlu0
  %v466 = vpop.trf.xlu0
  %v467 = vpop.trf.xlu0
  %v468 = vpop.trf.xlu0
  %v469 = vpop.trf.xlu0
  %v470 = vpop.trf.xlu0
  %v471 = vpop.trf.xlu0
  %v472 = vpop.trf.xlu0
  %v473 = vpop.trf.xlu0
  %v474 = vpop.trf.xlu0
  %v475 = vpop.trf.xlu0
  %v476 = vpop.trf.xlu0
  %v477 = vpop.trf.xlu0
  %478 = vmatprep.subr.mxu0 0.0
  %479 = vmatpush1.msra.mxu0 1.0
  %480 = vmatprep.subr.mxu0 0.0
  %481 = vmatpush1.msra.mxu0 1.0
  %482 = vmatprep.subr.mxu0 0.0
  %483 = vmatpush1.msra.mxu0 1.0
  %484 = vmatprep.subr.mxu0 0.0
  %485 = vmatpush1.msra.mxu0 1.0
  %486 = vmatprep.subr.mxu0 0.0
  %487 = vmatpush1.msra.mxu0 1.0
  %488 = vmatprep.subr.mxu0 0.0
  %489 = vmatpush1.msra.mxu0 1.0
  %490 = vmatprep.subr.mxu0 0.0
  %491 = vmatpush1.msra.mxu0 1.0
  %492 = vmatprep.subr.mxu0 0.0
  %493 = vmatpush1.msra.mxu0 1.0
  %494 = vmatprep.subr.mxu0 0.0
  %495 = vmatpush1.msra.mxu0 1.0
  %496 = vmatprep.subr.mxu0 0.0
  %497 = vmatpush1.msra.mxu0 1.0
  %498 = vmatprep.subr.mxu0 0.0
  %499 = vmatpush1.msra.mxu0 1.0
  %500 = vmatprep.subr.mxu0 0.0
  %501 = vmatpush1.msra.mxu0 1.0
  %502 = vmatprep.subr.mxu0 0.0
  %503 = vmatpush1.msra.mxu0 1.0
  %504 = vmatprep.subr.mxu0 0.0
  %505 = vmatpush1.msra.mxu0 1.0
  %506 = vmatprep.subr.mxu0 0.0
  %507 = vmatpush1.msra.mxu0 1.0
  %508 = vmatprep.subr.mxu0 0.0
  %509 = vmatpush1.msra.mxu0 1.0
  %510 = vmatprep.subr.mxu0 0.0
  %511 = vmatpush1.msra.mxu0 0.0
  %512 = vmatprep.subr.mxu0 0.0
  %513 = vmatpush1.msra.mxu0 0.0
  %514 = vmatprep.subr.mxu0 0.0
  %515 = vmatpush1.msra.mxu0 0.0
  %516 = vmatprep.subr.mxu0 0.0
  %517 = vmatpush1.msra.mxu0 0.0
  %518 = vmatprep.subr.mxu0 0.0
  %519 = vmatpush1.msra.mxu0 0.0
  %520 = vmatprep.subr.mxu0 0.0
  %521 = vmatpush1.msra.mxu0 0.0
  %522 = vmatprep.subr.mxu0 0.0
  %523 = vmatpush1.msra.mxu0 0.0
  %524 = vmatprep.subr.mxu0 0.0
  %525 = vmatpush1.msra.mxu0 0.0
  %526 = vmatprep.subr.mxu0 0.0
  %527 = vmatpush1.msra.mxu0 0.0
  %528 = vmatprep.subr.mxu0 0.0
  %529 = vmatpush1.msra.mxu0 0.0
  %530 = vmatprep.subr.mxu0 0.0
  %531 = vmatpush1.msra.mxu0 0.0
  %532 = vmatprep.subr.mxu0 0.0
  %533 = vmatpush1.msra.mxu0 0.0
  %534 = vmatprep.subr.mxu0 0.0
  %535 = vmatpush1.msra.mxu0 0.0
  %536 = vmatprep.subr.mxu0 0.0
  %537 = vmatpush1.msra.mxu0 0.0
  %538 = vmatprep.subr.mxu0 0.0
  %539 = vmatpush1.msra.mxu0 0.0
  %540 = vmatprep.subr.mxu0 0.0
  %541 = vmatpush1.msra.mxu0 0.0
  %542 = vmatprep.mubr.f32.mxu0 0.0
  %543 = vmatmul.mubr.f32.gmra.mrb[0].mxu0 %v462
  %v544 = vpop.f32.mrb[0].mxu0
  %v545 = vadd.f32 0.0, %v544
  %v546 = vpop.f32.mrb[0].mxu0
  %547 = vmatprep.mubr.f32.mxu0 0.0
  %548 = vmatmul.mubr.f32.gmra.mrb[0].mxu0 %v463
  %v549 = vpop.f32.mrb[0].mxu0
  %v550 = vadd.f32 0.0, %v549
  %v551 = vpop.f32.mrb[0].mxu0
  %552 = vdwg.mxu0
  %553 = vmatprep.subr.mxu0 0.0
  %554 = vmatpush1.msra.mxu0 %v430
  %555 = vmatprep.subr.mxu0 0.0
  %556 = vmatpush1.msra.mxu0 %v431
  %557 = vmatprep.subr.mxu0 0.0
  %558 = vmatpush1.msra.mxu0 %v432
  %559 = vmatprep.subr.mxu0 0.0
  %560 = vmatpush1.msra.mxu0 %v433
  %561 = vmatprep.subr.mxu0 0.0
  %562 = vmatpush1.msra.mxu0 %v434
  %563 = vmatprep.subr.mxu0 0.0
  %564 = vmatpush1.msra.mxu0 %v435
  %565 = vmatprep.subr.mxu0 0.0
  %566 = vmatpush1.msra.mxu0 %v436
  %567 = vmatprep.subr.mxu0 0.0
  %568 = vmatpush1.msra.mxu0 %v437
  %569 = vmatprep.subr.mxu0 0.0
  %570 = vmatpush1.msra.mxu0 %v438
  %571 = vmatprep.subr.mxu0 0.0
  %572 = vmatpush1.msra.mxu0 %v439
  %573 = vmatprep.subr.mxu0 0.0
  %574 = vmatpush1.msra.mxu0 %v440
  %575 = vmatprep.subr.mxu0 0.0
  %576 = vmatpush1.msra.mxu0 %v441
  %577 = vmatprep.subr.mxu0 0.0
  %578 = vmatpush1.msra.mxu0 %v442
  %579 = vmatprep.subr.mxu0 0.0
  %580 = vmatpush1.msra.mxu0 %v443
  %581 = vmatprep.subr.mxu0 0.0
  %582 = vmatpush1.msra.mxu0 %v444
  %583 = vmatprep.subr.mxu0 0.0
  %584 = vmatpush1.msra.mxu0 %v445
  %585 = vmatprep.subr.mxu0 0.0
  %586 = vmatpush1.msra.mxu0 0.0
  %587 = vmatprep.subr.mxu0 0.0
  %588 = vmatpush1.msra.mxu0 0.0
  %589 = vmatprep.subr.mxu0 0.0
  %590 = vmatpush1.msra.mxu0 0.0
  %591 = vmatprep.subr.mxu0 0.0
  %592 = vmatpush1.msra.mxu0 0.0
  %593 = vmatprep.subr.mxu0 0.0
  %594 = vmatpush1.msra.mxu0 0.0
  %595 = vmatprep.subr.mxu0 0.0
  %596 = vmatpush1.msra.mxu0 0.0
  %597 = vmatprep.subr.mxu0 0.0
  %598 = vmatpush1.msra.mxu0 0.0
  %599 = vmatprep.subr.mxu0 0.0
  %600 = vmatpush1.msra.mxu0 0.0
  %601 = vmatprep.subr.mxu0 0.0
  %602 = vmatpush1.msra.mxu0 0.0
  %603 = vmatprep.subr.mxu0 0.0
  %604 = vmatpush1.msra.mxu0 0.0
  %605 = vmatprep.subr.mxu0 0.0
  %606 = vmatpush1.msra.mxu0 0.0
  %607 = vmatprep.subr.mxu0 0.0
  %608 = vmatpush1.msra.mxu0 0.0
  %609 = vmatprep.subr.mxu0 0.0
  %610 = vmatpush1.msra.mxu0 0.0
  %611 = vmatprep.subr.mxu0 0.0
  %612 = vmatpush1.msra.mxu0 0.0
  %613 = vmatprep.subr.mxu0 0.0
  %614 = vmatpush1.msra.mxu0 0.0
  %615 = vmatprep.subr.mxu0 0.0
  %616 = vmatpush1.msra.mxu0 0.0
  %617 = vmatprep.mubr.f32.mxu0 0.0
  %618 = vmatmul.mubr.f32.gmra.mrb[0].mxu0 %v462
  %v619 = vpop.f32.mrb[0].mxu0
  %v620 = vadd.f32 0.0, %v619
  %v621 = vpop.f32.mrb[0].mxu0
  %622 = vmatprep.mubr.f32.mxu0 0.0
  %623 = vmatmul.mubr.f32.gmra.mrb[0].mxu0 %v463
  %v624 = vpop.f32.mrb[0].mxu0
  %v625 = vadd.f32 0.0, %v624
  %v626 = vpop.f32.mrb[0].mxu0
  %627 = vdwg.mxu0
  %v628 = vmax.f32 %v545, 1.0
  %v629 = vmax.f32 %v550, 1.0
  %631 = vset.pattern.permute.xlu0 0
  %632 = vperm.xlu0 %631, %v628
  %v633 = vpop.permute.xlu0 %632
  %636 = vset.pattern.permute.xlu0 0
  %637 = vperm.xlu0 %636, %v629
  %v638 = vpop.permute.xlu0 %637
  %v640 = vrcp.pop %v633
  %v641 = vmul.f32 %v620, %v640
  %v642 = vrcp.pop %v638
  %v643 = vmul.f32 %v625, %v642
  %vm644 = vcmask 31744
  %645 = vst.msk [vmem:[#allocation2] sm:$0xff] %vm644, %v430
  %646 = vst.msk [vmem:[#allocation2 + $0x8] sm:$0xff] %vm644, %v431
  %647 = vst.msk [vmem:[#allocation2 + $0x10] sm:$0xff] %vm644, %v432
  %648 = vst.msk [vmem:[#allocation2 + $0x18] sm:$0xff] %vm644, %v433
  %649 = vst.msk [vmem:[#allocation2 + $0x20] sm:$0xff] %vm644, %v434
  %650 = vst.msk [vmem:[#allocation2 + $0x28] sm:$0xff] %vm644, %v435
  %651 = vst.msk [vmem:[#allocation2 + $0x30] sm:$0xff] %vm644, %v436
  %652 = vst.msk [vmem:[#allocation2 + $0x38] sm:$0xff] %vm644, %v437
  %653 = vst.msk [vmem:[#allocation2 + $0x40] sm:$0xff] %vm644, %v438
  %654 = vst.msk [vmem:[#allocation2 + $0x48] sm:$0xff] %vm644, %v439
  %655 = vst.msk [vmem:[#allocation2 + $0x50] sm:$0xff] %vm644, %v440
  %656 = vst.msk [vmem:[#allocation2 + $0x58] sm:$0xff] %vm644, %v441
  %657 = vst.msk [vmem:[#allocation2 + $0x60] sm:$0xff] %vm644, %v442
  %658 = vst.msk [vmem:[#allocation2 + $0x68] sm:$0xff] %vm644, %v443
  %659 = vst.msk [vmem:[#allocation2 + $0x70] sm:$0xff] %vm644, %v444
  %660 = vst.msk [vmem:[#allocation2 + $0x78] sm:$0xff] %vm644, %v445
  %661 = vst.msk [vmem:[#allocation2 + $0x80] sm:$0xff] %vm644, %v641
  %662 = vst.msk [vmem:[#allocation2 + $0x88] sm:$0xff] %vm644, %v643
  %v663 = vld [vmem:[#allocation2] sm:$0xff]
  %v664 = vld [vmem:[#allocation2 + $0x8] sm:$0xff]
  %v665 = vld [vmem:[#allocation2 + $0x10] sm:$0xff]
  %v666 = vld [vmem:[#allocation2 + $0x18] sm:$0xff]
  %v667 = vld [vmem:[#allocation2 + $0x20] sm:$0xff]
  %v668 = vld [vmem:[#allocation2 + $0x28] sm:$0xff]
  %v669 = vld [vmem:[#allocation2 + $0x30] sm:$0xff]
  %v670 = vld [vmem:[#allocation2 + $0x38] sm:$0xff]
  %v671 = vld [vmem:[#allocation2 + $0x40] sm:$0xff]
  %v672 = vld [vmem:[#allocation2 + $0x48] sm:$0xff]
  %v673 = vld [vmem:[#allocation2 + $0x50] sm:$0xff]
  %v674 = vld [vmem:[#allocation2 + $0x58] sm:$0xff]
  %v675 = vld [vmem:[#allocation2 + $0x60] sm:$0xff]
  %v676 = vld [vmem:[#allocation2 + $0x68] sm:$0xff]
  %v677 = vld [vmem:[#allocation2 + $0x70] sm:$0xff]
  %v678 = vld [vmem:[#allocation2 + $0x78] sm:$0xff]
  %v679 = vld [vmem:[#allocation2 + $0x80] sm:$0xff]
  %v680 = vld [vmem:[#allocation2 + $0x88] sm:$0xff]
  %v681 = vld [vmem:[%s5] sm:$0xf]
  %v682 = vld [vmem:[%s5 + $0x4] sm:$0xf]
  %v683 = vld [vmem:[%s5 + $0x8] sm:$0xf]
  %v684 = vld [vmem:[%s5 + $0xc] sm:$0xf]
  %v685 = vld [vmem:[%s5 + $0x10] sm:$0xf]
  %v686 = vld [vmem:[%s5 + $0x14] sm:$0xf]
  %v687 = vld [vmem:[%s5 + $0x18] sm:$0xf]
  %v688 = vld [vmem:[%s5 + $0x1c] sm:$0xf]
  %v689 = vld [vmem:[%s5 + $0x20] sm:$0xf]
  %v690 = vld [vmem:[%s5 + $0x24] sm:$0xf]
  %v691 = vld [vmem:[%s5 + $0x28] sm:$0xf]
  %v692 = vld [vmem:[%s5 + $0x2c] sm:$0xf]
  %v693 = vld [vmem:[%s5 + $0x30] sm:$0xf]
  %v694 = vld [vmem:[%s5 + $0x34] sm:$0xf]
  %v695 = vld [vmem:[%s5 + $0x38] sm:$0xf]
  %v696 = vld [vmem:[%s5 + $0x3c] sm:$0xf]
  %v697 = vld [vmem:[%s5 + $0x40] sm:$0xf]
  %v698 = vld [vmem:[%s5 + $0x44] sm:$0xf]
  %v699 = vld [vmem:[%s5 + $0x48] sm:$0xf]
  %v700 = vld [vmem:[%s5 + $0x4c] sm:$0xf]
  %v701 = vld [vmem:[%s5 + $0x50] sm:$0xf]
  %v702 = vld [vmem:[%s5 + $0x54] sm:$0xf]
  %v703 = vld [vmem:[%s5 + $0x58] sm:$0xf]
  %v704 = vld [vmem:[%s5 + $0x5c] sm:$0xf]
  %v705 = vld [vmem:[%s5 + $0x60] sm:$0xf]
  %v706 = vld [vmem:[%s5 + $0x64] sm:$0xf]
  %v707 = vld [vmem:[%s5 + $0x68] sm:$0xf]
  %v708 = vld [vmem:[%s5 + $0x6c] sm:$0xf]
  %v709 = vld [vmem:[%s5 + $0x70] sm:$0xf]
  %v710 = vld [vmem:[%s5 + $0x74] sm:$0xf]
  %v711 = vld [vmem:[%s5 + $0x78] sm:$0xf]
  %v712 = vld [vmem:[%s5 + $0x7c] sm:$0xf]
  %v713 = vld [vmem:[%s5 + $0x80] sm:$0xf]
  %v714 = vld [vmem:[%s5 + $0x84] sm:$0xf]
  %v715 = vld [vmem:[%s5 + $0x88] sm:$0xf]
  %v716 = vld [vmem:[%s5 + $0x8c] sm:$0xf]
  %v717 = vld [vmem:[%s5 + $0x90] sm:$0xf]
  %v718 = vld [vmem:[%s5 + $0x94] sm:$0xf]
  %v719 = vld [vmem:[%s5 + $0x98] sm:$0xf]
  %v720 = vld [vmem:[%s5 + $0x9c] sm:$0xf]
  %v721 = vld [vmem:[%s5 + $0xa0] sm:$0xf]
  %v722 = vld [vmem:[%s5 + $0xa4] sm:$0xf]
  %v723 = vld [vmem:[%s5 + $0xa8] sm:$0xf]
  %v724 = vld [vmem:[%s5 + $0xac] sm:$0xf]
  %v725 = vld [vmem:[%s5 + $0xb0] sm:$0xf]
  %v726 = vld [vmem:[%s5 + $0xb4] sm:$0xf]
  %v727 = vld [vmem:[%s5 + $0xb8] sm:$0xf]
  %v728 = vld [vmem:[%s5 + $0xbc] sm:$0xf]
  %v729 = vld [vmem:[%s5 + $0xc0] sm:$0xf]
  %v730 = vld [vmem:[%s5 + $0xc4] sm:$0xf]
  %v731 = vld [vmem:[%s5 + $0xc8] sm:$0xf]
  %v732 = vld [vmem:[%s5 + $0xcc] sm:$0xf]
  %v733 = vld [vmem:[%s5 + $0xd0] sm:$0xf]
  %v734 = vld [vmem:[%s5 + $0xd4] sm:$0xf]
  %v735 = vld [vmem:[%s5 + $0xd8] sm:$0xf]
  %v736 = vld [vmem:[%s5 + $0xdc] sm:$0xf]
  %v737 = vld [vmem:[%s5 + $0xe0] sm:$0xf]
  %v738 = vld [vmem:[%s5 + $0xe4] sm:$0xf]
  %v739 = vld [vmem:[%s5 + $0xe8] sm:$0xf]
  %v740 = vld [vmem:[%s5 + $0xec] sm:$0xf]
  %v741 = vld [vmem:[%s5 + $0xf0] sm:$0xf]
  %v742 = vld [vmem:[%s5 + $0xf4] sm:$0xf]
  %v743 = vld [vmem:[%s5 + $0xf8] sm:$0xf]
  %v744 = vld [vmem:[%s5 + $0xfc] sm:$0xf]
  %v745 = vld [vmem:[%s5 + $0x100] sm:$0xf]
  %v746 = vld [vmem:[%s5 + $0x104] sm:$0xf]
  %v747 = vld [vmem:[%s5 + $0x108] sm:$0xf]
  %v748 = vld [vmem:[%s5 + $0x10c] sm:$0xf]
  %v749 = vld [vmem:[%s5 + $0x110] sm:$0xf]
  %v750 = vld [vmem:[%s5 + $0x114] sm:$0xf]
  %v751 = vld [vmem:[%s5 + $0x118] sm:$0xf]
  %v752 = vld [vmem:[%s5 + $0x11c] sm:$0xf]
  %v753 = vld [vmem:[%s5 + $0x120] sm:$0xf]
  %v754 = vld [vmem:[%s5 + $0x124] sm:$0xf]
  %v755 = vld [vmem:[%s5 + $0x128] sm:$0xf]
  %v756 = vld [vmem:[%s5 + $0x12c] sm:$0xf]
  %v757 = vld [vmem:[%s5 + $0x130] sm:$0xf]
  %v758 = vld [vmem:[%s5 + $0x134] sm:$0xf]
  %v759 = vld [vmem:[%s5 + $0x138] sm:$0xf]
  %v760 = vld [vmem:[%s5 + $0x13c] sm:$0xf]
  %v761 = vld [vmem:[%s5 + $0x140] sm:$0xf]
  %v762 = vld [vmem:[%s5 + $0x144] sm:$0xf]
  %v763 = vld [vmem:[%s5 + $0x148] sm:$0xf]
  %v764 = vld [vmem:[%s5 + $0x14c] sm:$0xf]
  %v765 = vld [vmem:[%s5 + $0x150] sm:$0xf]
  %v766 = vld [vmem:[%s5 + $0x154] sm:$0xf]
  %v767 = vld [vmem:[%s5 + $0x158] sm:$0xf]
  %v768 = vld [vmem:[%s5 + $0x15c] sm:$0xf]
  %v769 = vld [vmem:[%s5 + $0x160] sm:$0xf]
  %v770 = vld [vmem:[%s5 + $0x164] sm:$0xf]
  %v771 = vld [vmem:[%s5 + $0x168] sm:$0xf]
  %v772 = vld [vmem:[%s5 + $0x16c] sm:$0xf]
  %v773 = vld [vmem:[%s5 + $0x170] sm:$0xf]
  %v774 = vld [vmem:[%s5 + $0x174] sm:$0xf]
  %v775 = vld [vmem:[%s5 + $0x178] sm:$0xf]
  %v776 = vld [vmem:[%s5 + $0x17c] sm:$0xf]
  %v777 = vld [vmem:[%s6] sm:$0xf]
  %v778 = vld [vmem:[%s6 + $0x4] sm:$0xf]
  %v779 = vld [vmem:[%s6 + $0x8] sm:$0xf]
  %v780 = vld [vmem:[%s6 + $0xc] sm:$0x1]
  %v781 = vld [vmem:[%s6 + $0xd] sm:$0x1]
  %v782 = vld [vmem:[%s6 + $0xe] sm:$0x1]
  %v783 = vld [vmem:[%s6 + $0xf] sm:$0x1]
  %v784 = vld [vmem:[%s6 + $0x10] sm:$0x1]
  %v785 = vld [vmem:[%s6 + $0x11] sm:$0x1]
  %v786 = vld [vmem:[%s6 + $0x12] sm:$0x1]
  %v787 = vld [vmem:[%s6 + $0x13] sm:$0x1]
  %v788 = vld [vmem:[%s6 + $0x14] sm:$0x1]
  %v789 = vld [vmem:[%s6 + $0x15] sm:$0x1]
  %v790 = vld [vmem:[%s6 + $0x16] sm:$0x1]
  %v791 = vpack.c.bf16 %v429, %v428
  %v792 = vlaneseq
  %v793 = vshrl.u32 %v792, 7
  %v794 = vsub.s32 0, %v793
  %v795 = vrot.slane %v780, %v794
  %v812 = vunpack.c.l.b16 %v681
  %v813 = vunpack.c.l.b16 %v682
  %v814 = vunpack.c.l.b16 %v683
  %v815 = vunpack.c.l.b16 %v684
  %v816 = vunpack.c.l.b16 %v685
  %v817 = vunpack.c.l.b16 %v686
  %v818 = vunpack.c.l.b16 %v687
  %v819 = vunpack.c.l.b16 %v688
  %v820 = vunpack.c.l.b16 %v689
  %v821 = vunpack.c.l.b16 %v690
  %v822 = vunpack.c.l.b16 %v691
  %v823 = vunpack.c.l.b16 %v692
  %v824 = vunpack.c.l.b16 %v693
  %v825 = vunpack.c.l.b16 %v694
  %v826 = vunpack.c.l.b16 %v695
  %v827 = vunpack.c.l.b16 %v696
  %v828 = vpack.c.b16 %v813, %v812
  %v829 = vpack.c.b16 %v815, %v814
  %v830 = vpack.c.b16 %v817, %v816
  %v831 = vpack.c.b16 %v819, %v818
  %v832 = vpack.c.b16 %v821, %v820
  %v833 = vpack.c.b16 %v823, %v822
  %v834 = vpack.c.b16 %v825, %v824
  %v835 = vpack.c.b16 %v827, %v826
  %844 = vmatprep.subr.bf16.mxu0 0
  %845 = vmatpush1.bf16.msra.mxu0 %v828
  %846 = vmatprep.subr.bf16.mxu0 0
  %847 = vmatpush1.bf16.msra.mxu0 %v829
  %848 = vmatprep.subr.bf16.mxu0 0
  %849 = vmatpush1.bf16.msra.mxu0 %v830
  %850 = vmatprep.subr.bf16.mxu0 0
  %851 = vmatpush1.bf16.msra.mxu0 %v831
  %852 = vmatprep.subr.bf16.mxu0 0
  %853 = vmatpush1.bf16.msra.mxu0 %v832
  %854 = vmatprep.subr.bf16.mxu0 0
  %855 = vmatpush1.bf16.msra.mxu0 %v833
  %856 = vmatprep.subr.bf16.mxu0 0
  %857 = vmatpush1.bf16.msra.mxu0 %v834
  %858 = vmatprep.subr.bf16.mxu0 0
  %859 = vmatpush1.bf16.msra.mxu0 %v835
  %860 = vmatprep.subr.bf16.mxu0 0
  %861 = vmatpush1.bf16.msra.mxu0 0
  %862 = vmatprep.subr.bf16.mxu0 0
  %863 = vmatpush1.bf16.msra.mxu0 0
  %864 = vmatprep.subr.bf16.mxu0 0
  %865 = vmatpush1.bf16.msra.mxu0 0
  %866 = vmatprep.subr.bf16.mxu0 0
  %867 = vmatpush1.bf16.msra.mxu0 0
  %868 = vmatprep.subr.bf16.mxu0 0
  %869 = vmatpush1.bf16.msra.mxu0 0
  %870 = vmatprep.subr.bf16.mxu0 0
  %871 = vmatpush1.bf16.msra.mxu0 0
  %872 = vmatprep.subr.bf16.mxu0 0
  %873 = vmatpush1.bf16.msra.mxu0 0
  %874 = vmatprep.subr.bf16.mxu0 0
  %875 = vmatpush1.bf16.msra.mxu0 0
  %876 = vmatprep.mubr.bf16.mxu0 0
  %877 = vmatmul.mubr.bf16.gmra.mrb[0].mxu0 %v791
  %v878 = vpop.f32.mrb[0].mxu0
  %v879 = vadd.f32 %v795, %v878
  %v880 = vpop.f32.mrb[0].mxu0
  %v881 = vpop.f32.mrb[0].mxu0
  %v882 = vadd.f32 %v795, %v881
  %v883 = vpop.f32.mrb[0].mxu0
  %884 = vdwg.mxu0
  %v885 = vlaneseq
  %v886 = vshrl.u32 %v885, 7
  %v887 = vsub.s32 0, %v886
  %v888 = vrot.slane %v781, %v887
  %v905 = vunpack.c.l.b16 %v697
  %v906 = vunpack.c.l.b16 %v698
  %v907 = vunpack.c.l.b16 %v699
  %v908 = vunpack.c.l.b16 %v700
  %v909 = vunpack.c.l.b16 %v701
  %v910 = vunpack.c.l.b16 %v702
  %v911 = vunpack.c.l.b16 %v703
  %v912 = vunpack.c.l.b16 %v704
  %v913 = vunpack.c.l.b16 %v705
  %v914 = vunpack.c.l.b16 %v706
  %v915 = vunpack.c.l.b16 %v707
  %v916 = vunpack.c.l.b16 %v708
  %v917 = vunpack.c.l.b16 %v709
  %v918 = vunpack.c.l.b16 %v710
  %v919 = vunpack.c.l.b16 %v711
  %v920 = vunpack.c.l.b16 %v712
  %v921 = vpack.c.b16 %v906, %v905
  %v922 = vpack.c.b16 %v908, %v907
  %v923 = vpack.c.b16 %v910, %v909
  %v924 = vpack.c.b16 %v912, %v911
  %v925 = vpack.c.b16 %v914, %v913
  %v926 = vpack.c.b16 %v916, %v915
  %v927 = vpack.c.b16 %v918, %v917
  %v928 = vpack.c.b16 %v920, %v919
  %937 = vmatprep.subr.bf16.mxu0 0
  %938 = vmatpush1.bf16.msra.mxu0 %v921
  %939 = vmatprep.subr.bf16.mxu0 0
  %940 = vmatpush1.bf16.msra.mxu0 %v922
  %941 = vmatprep.subr.bf16.mxu0 0
  %942 = vmatpush1.bf16.msra.mxu0 %v923
  %943 = vmatprep.subr.bf16.mxu0 0
  %944 = vmatpush1.bf16.msra.mxu0 %v924
  %945 = vmatprep.subr.bf16.mxu0 0
  %946 = vmatpush1.bf16.msra.mxu0 %v925
  %947 = vmatprep.subr.bf16.mxu0 0
  %948 = vmatpush1.bf16.msra.mxu0 %v926
  %949 = vmatprep.subr.bf16.mxu0 0
  %950 = vmatpush1.bf16.msra.mxu0 %v927
  %951 = vmatprep.subr.bf16.mxu0 0
  %952 = vmatpush1.bf16.msra.mxu0 %v928
  %953 = vmatprep.subr.bf16.mxu0 0
  %954 = vmatpush1.bf16.msra.mxu0 0
  %955 = vmatprep.subr.bf16.mxu0 0
  %956 = vmatpush1.bf16.msra.mxu0 0
  %957 = vmatprep.subr.bf16.mxu0 0
  %958 = vmatpush1.bf16.msra.mxu0 0
  %959 = vmatprep.subr.bf16.mxu0 0
  %960 = vmatpush1.bf16.msra.mxu0 0
  %961 = vmatprep.subr.bf16.mxu0 0
  %962 = vmatpush1.bf16.msra.mxu0 0
  %963 = vmatprep.subr.bf16.mxu0 0
  %964 = vmatpush1.bf16.msra.mxu0 0
  %965 = vmatprep.subr.bf16.mxu0 0
  %966 = vmatpush1.bf16.msra.mxu0 0
  %967 = vmatprep.subr.bf16.mxu0 0
  %968 = vmatpush1.bf16.msra.mxu0 0
  %969 = vmatprep.mubr.bf16.mxu0 0
  %970 = vmatmul.mubr.bf16.gmra.mrb[0].mxu0 %v791
  %v971 = vpop.f32.mrb[0].mxu0
  %v972 = vadd.f32 %v888, %v971
  %v973 = vpop.f32.mrb[0].mxu0
  %v974 = vpop.f32.mrb[0].mxu0
  %v975 = vadd.f32 %v888, %v974
  %v976 = vpop.f32.mrb[0].mxu0
  %977 = vdwg.mxu0
  %v978 = vpack.c.bf16 %v882, %v879
  %vm979 = vcmask 130048
  %v981 = vsel %vm979, %v263, 0
  %v984 = vsel %vm979, %v264, 0
  %v987 = vsel %vm979, %v265, 0
  %v990 = vsel %vm979, %v266, 0
  %v993 = vsel %vm979, %v267, 0
  %v996 = vsel %vm979, %v268, 0
  %v999 = vsel %vm979, %v269, 0
  %v1002 = vsel %vm979, %v270, 0
  %v1005 = vsel %vm979, %v271, 0
  %1007 = vmatprep.subr.bf16.mxu0 0
  %1008 = vmatpush1.bf16.msra.mxu0 %v978
  %1009 = vmatprep.subr.bf16.mxu0 0
  %1010 = vmatpush1.bf16.msra.mxu0 0
  %1011 = vmatprep.subr.bf16.mxu0 0
  %1012 = vmatpush1.bf16.msra.mxu0 0
  %1013 = vmatprep.subr.bf16.mxu0 0
  %1014 = vmatpush1.bf16.msra.mxu0 0
  %1015 = vmatprep.subr.bf16.mxu0 0
  %1016 = vmatpush1.bf16.msra.mxu0 0
  %1017 = vmatprep.subr.bf16.mxu0 0
  %1018 = vmatpush1.bf16.msra.mxu0 0
  %1019 = vmatprep.subr.bf16.mxu0 0
  %1020 = vmatpush1.bf16.msra.mxu0 0
  %1021 = vmatprep.subr.bf16.mxu0 0
  %1022 = vmatpush1.bf16.msra.mxu0 0
  %1023 = vmatprep.subr.bf16.mxu0 0
  %1024 = vmatpush1.bf16.msra.mxu0 0
  %1025 = vmatprep.subr.bf16.mxu0 0
  %1026 = vmatpush1.bf16.msra.mxu0 0
  %1027 = vmatprep.subr.bf16.mxu0 0
  %1028 = vmatpush1.bf16.msra.mxu0 0
  %1029 = vmatprep.subr.bf16.mxu0 0
  %1030 = vmatpush1.bf16.msra.mxu0 0
  %1031 = vmatprep.subr.bf16.mxu0 0
  %1032 = vmatpush1.bf16.msra.mxu0 0
  %1033 = vmatprep.subr.bf16.mxu0 0
  %1034 = vmatpush1.bf16.msra.mxu0 0
  %1035 = vmatprep.subr.bf16.mxu0 0
  %1036 = vmatpush1.bf16.msra.mxu0 0
  %1037 = vmatprep.subr.bf16.mxu0 0
  %1038 = vmatpush1.bf16.msra.mxu0 0
  %1039 = vmatprep.mubr.bf16.mxu0 0
  %1040 = vmatmul.mubr.bf16.gmra.mrb[0].mxu0 %v981
  %v1041 = vpop.f32.mrb[0].mxu0
  %v1042 = vadd.f32 0.0, %v1041
  %v1043 = vpop.f32.mrb[0].mxu0
  %v1044 = vpop.f32.mrb[0].mxu0
  %v1045 = vadd.f32 0.0, %v1044
  %v1046 = vpop.f32.mrb[0].mxu0
  %1047 = vmatprep.mubr.bf16.mxu0 0
  %1048 = vmatmul.mubr.bf16.gmra.mrb[0].mxu0 %v984
  %v1049 = vpop.f32.mrb[0].mxu0
  %v1050 = vadd.f32 0.0, %v1049
  %v1051 = vpop.f32.mrb[0].mxu0
  %v1052 = vpop.f32.mrb[0].mxu0
  %v1053 = vadd.f32 0.0, %v1052
  %v1054 = vpop.f32.mrb[0].mxu0
  %1055 = vmatprep.mubr.bf16.mxu0 0
  %1056 = vmatmul.mubr.bf16.gmra.mrb[0].mxu0 %v987
  %v1057 = vpop.f32.mrb[0].mxu0
  %v1058 = vadd.f32 0.0, %v1057
  %v1059 = vpop.f32.mrb[0].mxu0
  %v1060 = vpop.f32.mrb[0].mxu0
  %v1061 = vadd.f32 0.0, %v1060
  %v1062 = vpop.f32.mrb[0].mxu0
  %1063 = vmatprep.mubr.bf16.mxu0 0
  %1064 = vmatmul.mubr.bf16.gmra.mrb[0].mxu0 %v990
  %v1065 = vpop.f32.mrb[0].mxu0
  %v1066 = vadd.f32 0.0, %v1065
  %v1067 = vpop.f32.mrb[0].mxu0
  %v1068 = vpop.f32.mrb[0].mxu0
  %v1069 = vadd.f32 0.0, %v1068
  %v1070 = vpop.f32.mrb[0].mxu0
  %1071 = vmatprep.mubr.bf16.mxu0 0
  %1072 = vmatmul.mubr.bf16.gmra.mrb[0].mxu0 %v993
  %v1073 = vpop.f32.mrb[0].mxu0
  %v1074 = vadd.f32 0.0, %v1073
  %v1075 = vpop.f32.mrb[0].mxu0
  %v1076 = vpop.f32.mrb[0].mxu0
  %v1077 = vadd.f32 0.0, %v1076
  %v1078 = vpop.f32.mrb[0].mxu0
  %1079 = vmatprep.mubr.bf16.mxu0 0
  %1080 = vmatmul.mubr.bf16.gmra.mrb[0].mxu0 %v996
  %v1081 = vpop.f32.mrb[0].mxu0
  %v1082 = vadd.f32 0.0, %v1081
  %v1083 = vpop.f32.mrb[0].mxu0
  %v1084 = vpop.f32.mrb[0].mxu0
  %v1085 = vadd.f32 0.0, %v1084
  %v1086 = vpop.f32.mrb[0].mxu0
  %1087 = vmatprep.mubr.bf16.mxu0 0
  %1088 = vmatmul.mubr.bf16.gmra.mrb[0].mxu0 %v999
  %v1089 = vpop.f32.mrb[0].mxu0
  %v1090 = vadd.f32 0.0, %v1089
  %v1091 = vpop.f32.mrb[0].mxu0
  %v1092 = vpop.f32.mrb[0].mxu0
  %v1093 = vadd.f32 0.0, %v1092
  %v1094 = vpop.f32.mrb[0].mxu0
  %1095 = vmatprep.mubr.bf16.mxu0 0
  %1096 = vmatmul.mubr.bf16.gmra.mrb[0].mxu0 %v1002
  %v1097 = vpop.f32.mrb[0].mxu0
  %v1098 = vadd.f32 0.0, %v1097
  %v1099 = vpop.f32.mrb[0].mxu0
  %v1100 = vpop.f32.mrb[0].mxu0
  %v1101 = vadd.f32 0.0, %v1100
  %v1102 = vpop.f32.mrb[0].mxu0
  %1103 = vmatprep.mubr.bf16.mxu0 0
  %1104 = vmatmul.mubr.bf16.gmra.mrb[0].mxu0 %v1005
  %v1105 = vpop.f32.mrb[0].mxu0
  %v1106 = vadd.f32 0.0, %v1105
  %v1107 = vpop.f32.mrb[0].mxu0
  %v1108 = vpop.f32.mrb[0].mxu0
  %v1109 = vadd.f32 0.0, %v1108
  %v1110 = vpop.f32.mrb[0].mxu0
  %1111 = vdwg.mxu0
  %v1112 = vpack.c.bf16 %v975, %v972
  %v1114 = vsel %vm979, %v272, 0
  %v1117 = vsel %vm979, %v273, 0
  %v1120 = vsel %vm979, %v274, 0
  %v1123 = vsel %vm979, %v275, 0
  %v1126 = vsel %vm979, %v276, 0
  %v1129 = vsel %vm979, %v277, 0
  %v1132 = vsel %vm979, %v278, 0
  %v1135 = vsel %vm979, %v279, 0
  %v1138 = vsel %vm979, %v280, 0
  %1140 = vmatprep.subr.bf16.mxu0 0
  %1141 = vmatpush1.bf16.msra.mxu0 %v1112
  %1142 = vmatprep.subr.bf16.mxu0 0
  %1143 = vmatpush1.bf16.msra.mxu0 0
  %1144 = vmatprep.subr.bf16.mxu0 0
  %1145 = vmatpush1.bf16.msra.mxu0 0
  %1146 = vmatprep.subr.bf16.mxu0 0
  %1147 = vmatpush1.bf16.msra.mxu0 0
  %1148 = vmatprep.subr.bf16.mxu0 0
  %1149 = vmatpush1.bf16.msra.mxu0 0
  %1150 = vmatprep.subr.bf16.mxu0 0
  %1151 = vmatpush1.bf16.msra.mxu0 0
  %1152 = vmatprep.subr.bf16.mxu0 0
  %1153 = vmatpush1.bf16.msra.mxu0 0
  %1154 = vmatprep.subr.bf16.mxu0 0
  %1155 = vmatpush1.bf16.msra.mxu0 0
  %1156 = vmatprep.subr.bf16.mxu0 0
  %1157 = vmatpush1.bf16.msra.mxu0 0
  %1158 = vmatprep.subr.bf16.mxu0 0
  %1159 = vmatpush1.bf16.msra.mxu0 0
  %1160 = vmatprep.subr.bf16.mxu0 0
  %1161 = vmatpush1.bf16.msra.mxu0 0
  %1162 = vmatprep.subr.bf16.mxu0 0
  %1163 = vmatpush1.bf16.msra.mxu0 0
  %1164 = vmatprep.subr.bf16.mxu0 0
  %1165 = vmatpush1.bf16.msra.mxu0 0
  %1166 = vmatprep.subr.bf16.mxu0 0
  %1167 = vmatpush1.bf16.msra.mxu0 0
  %1168 = vmatprep.subr.bf16.mxu0 0
  %1169 = vmatpush1.bf16.msra.mxu0 0
  %1170 = vmatprep.subr.bf16.mxu0 0
  %1171 = vmatpush1.bf16.msra.mxu0 0
  %1172 = vmatprep.mubr.bf16.mxu0 0
  %1173 = vmatmul.mubr.bf16.gmra.mrb[0].mxu0 %v1114
  %v1174 = vpop.f32.mrb[0].mxu0
  %v1175 = vadd.f32 0.0, %v1174
  %v1176 = vpop.f32.mrb[0].mxu0
  %v1177 = vpop.f32.mrb[0].mxu0
  %v1178 = vadd.f32 0.0, %v1177
  %v1179 = vpop.f32.mrb[0].mxu0
  %1180 = vmatprep.mubr.bf16.mxu0 0
  %1181 = vmatmul.mubr.bf16.gmra.mrb[0].mxu0 %v1117
  %v1182 = vpop.f32.mrb[0].mxu0
  %v1183 = vadd.f32 0.0, %v1182
  %v1184 = vpop.f32.mrb[0].mxu0
  %v1185 = vpop.f32.mrb[0].mxu0
  %v1186 = vadd.f32 0.0, %v1185
  %v1187 = vpop.f32.mrb[0].mxu0
  %1188 = vmatprep.mubr.bf16.mxu0 0
  %1189 = vmatmul.mubr.bf16.gmra.mrb[0].mxu0 %v1120
  %v1190 = vpop.f32.mrb[0].mxu0
  %v1191 = vadd.f32 0.0, %v1190
  %v1192 = vpop.f32.mrb[0].mxu0
  %v1193 = vpop.f32.mrb[0].mxu0
  %v1194 = vadd.f32 0.0, %v1193
  %v1195 = vpop.f32.mrb[0].mxu0
  %1196 = vmatprep.mubr.bf16.mxu0 0
  %1197 = vmatmul.mubr.bf16.gmra.mrb[0].mxu0 %v1123
  %v1198 = vpop.f32.mrb[0].mxu0
  %v1199 = vadd.f32 0.0, %v1198
  %v1200 = vpop.f32.mrb[0].mxu0
  %v1201 = vpop.f32.mrb[0].mxu0
  %v1202 = vadd.f32 0.0, %v1201
  %v1203 = vpop.f32.mrb[0].mxu0
  %1204 = vmatprep.mubr.bf16.mxu0 0
  %1205 = vmatmul.mubr.bf16.gmra.mrb[0].mxu0 %v1126
  %v1206 = vpop.f32.mrb[0].mxu0
  %v1207 = vadd.f32 0.0, %v1206
  %v1208 = vpop.f32.mrb[0].mxu0
  %v1209 = vpop.f32.mrb[0].mxu0
  %v1210 = vadd.f32 0.0, %v1209
  %v1211 = vpop.f32.mrb[0].mxu0
  %1212 = vmatprep.mubr.bf16.mxu0 0
  %1213 = vmatmul.mubr.bf16.gmra.mrb[0].mxu0 %v1129
  %v1214 = vpop.f32.mrb[0].mxu0
  %v1215 = vadd.f32 0.0, %v1214
  %v1216 = vpop.f32.mrb[0].mxu0
  %v1217 = vpop.f32.mrb[0].mxu0
  %v1218 = vadd.f32 0.0, %v1217
  %v1219 = vpop.f32.mrb[0].mxu0
  %1220 = vmatprep.mubr.bf16.mxu0 0
  %1221 = vmatmul.mubr.bf16.gmra.mrb[0].mxu0 %v1132
  %v1222 = vpop.f32.mrb[0].mxu0
  %v1223 = vadd.f32 0.0, %v1222
  %v1224 = vpop.f32.mrb[0].mxu0
  %v1225 = vpop.f32.mrb[0].mxu0
  %v1226 = vadd.f32 0.0, %v1225
  %v1227 = vpop.f32.mrb[0].mxu0
  %1228 = vmatprep.mubr.bf16.mxu0 0
  %1229 = vmatmul.mubr.bf16.gmra.mrb[0].mxu0 %v1135
  %v1230 = vpop.f32.mrb[0].mxu0
  %v1231 = vadd.f32 0.0, %v1230
  %v1232 = vpop.f32.mrb[0].mxu0
  %v1233 = vpop.f32.mrb[0].mxu0
  %v1234 = vadd.f32 0.0, %v1233
  %v1235 = vpop.f32.mrb[0].mxu0
  %1236 = vmatprep.mubr.bf16.mxu0 0
  %1237 = vmatmul.mubr.bf16.gmra.mrb[0].mxu0 %v1138
  %v1238 = vpop.f32.mrb[0].mxu0
  %v1239 = vadd.f32 0.0, %v1238
  %v1240 = vpop.f32.mrb[0].mxu0
  %v1241 = vpop.f32.mrb[0].mxu0
  %v1242 = vadd.f32 0.0, %v1241
  %v1243 = vpop.f32.mrb[0].mxu0
  %1244 = vdwg.mxu0
  %v1246 = vsel %vm644, %v663, 0
  %v1249 = vsel %vm644, %v664, 0
  %v1252 = vsel %vm644, %v665, 0
  %v1255 = vsel %vm644, %v666, 0
  %v1258 = vsel %vm644, %v667, 0
  %v1261 = vsel %vm644, %v668, 0
  %v1264 = vsel %vm644, %v669, 0
  %v1267 = vsel %vm644, %v670, 0
  %v1270 = vsel %vm644, %v671, 0
  %v1273 = vsel %vm644, %v672, 0
  %v1276 = vsel %vm644, %v673, 0
  %v1279 = vsel %vm644, %v674, 0
  %v1282 = vsel %vm644, %v675, 0
  %v1285 = vsel %vm644, %v676, 0
  %v1288 = vsel %vm644, %v677, 0
  %v1291 = vsel %vm644, %v678, 0
  %v1294 = vsel %vm644, %v679, 0
  %v1297 = vsel %vm644, %v680, 0
  %vm1299 = vcmask 1043456
  %v1301 = vsel %vm1299, %v777, 0
  %1303 = vmatprep.subr.mxu0 0.0
  %1304 = vmatpush1.msra.mxu0 %v1301
  %1305 = vmatprep.subr.mxu0 0.0
  %1306 = vmatpush1.msra.mxu0 0.0
  %1307 = vmatprep.subr.mxu0 0.0
  %1308 = vmatpush1.msra.mxu0 0.0
  %1309 = vmatprep.subr.mxu0 0.0
  %1310 = vmatpush1.msra.mxu0 0.0
  %1311 = vmatprep.subr.mxu0 0.0
  %1312 = vmatpush1.msra.mxu0 0.0
  %1313 = vmatprep.subr.mxu0 0.0
  %1314 = vmatpush1.msra.mxu0 0.0
  %1315 = vmatprep.subr.mxu0 0.0
  %1316 = vmatpush1.msra.mxu0 0.0
  %1317 = vmatprep.subr.mxu0 0.0
  %1318 = vmatpush1.msra.mxu0 0.0
  %1319 = vmatprep.subr.mxu0 0.0
  %1320 = vmatpush1.msra.mxu0 0.0
  %1321 = vmatprep.subr.mxu0 0.0
  %1322 = vmatpush1.msra.mxu0 0.0
  %1323 = vmatprep.subr.mxu0 0.0
  %1324 = vmatpush1.msra.mxu0 0.0
  %1325 = vmatprep.subr.mxu0 0.0
  %1326 = vmatpush1.msra.mxu0 0.0
  %1327 = vmatprep.subr.mxu0 0.0
  %1328 = vmatpush1.msra.mxu0 0.0
  %1329 = vmatprep.subr.mxu0 0.0
  %1330 = vmatpush1.msra.mxu0 0.0
  %1331 = vmatprep.subr.mxu0 0.0
  %1332 = vmatpush1.msra.mxu0 0.0
  %1333 = vmatprep.subr.mxu0 0.0
  %1334 = vmatpush1.msra.mxu0 0.0
  %1335 = vmatprep.subr.mxu0 0.0
  %1336 = vmatpush1.msra.mxu0 0.0
  %1337 = vmatprep.subr.mxu0 0.0
  %1338 = vmatpush1.msra.mxu0 0.0
  %1339 = vmatprep.subr.mxu0 0.0
  %1340 = vmatpush1.msra.mxu0 0.0
  %1341 = vmatprep.subr.mxu0 0.0
  %1342 = vmatpush1.msra.mxu0 0.0
  %1343 = vmatprep.subr.mxu0 0.0
  %1344 = vmatpush1.msra.mxu0 0.0
  %1345 = vmatprep.subr.mxu0 0.0
  %1346 = vmatpush1.msra.mxu0 0.0
  %1347 = vmatprep.subr.mxu0 0.0
  %1348 = vmatpush1.msra.mxu0 0.0
  %1349 = vmatprep.subr.mxu0 0.0
  %1350 = vmatpush1.msra.mxu0 0.0
  %1351 = vmatprep.subr.mxu0 0.0
  %1352 = vmatpush1.msra.mxu0 0.0
  %1353 = vmatprep.subr.mxu0 0.0
  %1354 = vmatpush1.msra.mxu0 0.0
  %1355 = vmatprep.subr.mxu0 0.0
  %1356 = vmatpush1.msra.mxu0 0.0
  %1357 = vmatprep.subr.mxu0 0.0
  %1358 = vmatpush1.msra.mxu0 0.0
  %1359 = vmatprep.subr.mxu0 0.0
  %1360 = vmatpush1.msra.mxu0 0.0
  %1361 = vmatprep.subr.mxu0 0.0
  %1362 = vmatpush1.msra.mxu0 0.0
  %1363 = vmatprep.subr.mxu0 0.0
  %1364 = vmatpush1.msra.mxu0 0.0
  %1365 = vmatprep.subr.mxu0 0.0
  %1366 = vmatpush1.msra.mxu0 0.0
  %1367 = vmatprep.mubr.f32.mxu0 0.0
  %1368 = vmatmul.mubr.f32.gmra.mrb[0].mxu0 %v1246
  %v1369 = vpop.f32.mrb[0].mxu0
  %v1370 = vadd.f32 0.0, %v1369
  %v1371 = vpop.f32.mrb[0].mxu0
  %1372 = vmatprep.mubr.f32.mxu0 0.0
  %1373 = vmatmul.mubr.f32.gmra.mrb[0].mxu0 %v1249
  %v1374 = vpop.f32.mrb[0].mxu0
  %v1375 = vadd.f32 0.0, %v1374
  %v1376 = vpop.f32.mrb[0].mxu0
  %1377 = vmatprep.mubr.f32.mxu0 0.0
  %1378 = vmatmul.mubr.f32.gmra.mrb[0].mxu0 %v1252
  %v1379 = vpop.f32.mrb[0].mxu0
  %v1380 = vadd.f32 0.0, %v1379
  %v1381 = vpop.f32.mrb[0].mxu0
  %1382 = vmatprep.mubr.f32.mxu0 0.0
  %1383 = vmatmul.mubr.f32.gmra.mrb[0].mxu0 %v1255
  %v1384 = vpop.f32.mrb[0].mxu0
  %v1385 = vadd.f32 0.0, %v1384
  %v1386 = vpop.f32.mrb[0].mxu0
  %1387 = vmatprep.mubr.f32.mxu0 0.0
  %1388 = vmatmul.mubr.f32.gmra.mrb[0].mxu0 %v1258
  %v1389 = vpop.f32.mrb[0].mxu0
  %v1390 = vadd.f32 0.0, %v1389
  %v1391 = vpop.f32.mrb[0].mxu0
  %1392 = vmatprep.mubr.f32.mxu0 0.0
  %1393 = vmatmul.mubr.f32.gmra.mrb[0].mxu0 %v1261
  %v1394 = vpop.f32.mrb[0].mxu0
  %v1395 = vadd.f32 0.0, %v1394
  %v1396 = vpop.f32.mrb[0].mxu0
  %1397 = vmatprep.mubr.f32.mxu0 0.0
  %1398 = vmatmul.mubr.f32.gmra.mrb[0].mxu0 %v1264
  %v1399 = vpop.f32.mrb[0].mxu0
  %v1400 = vadd.f32 0.0, %v1399
  %v1401 = vpop.f32.mrb[0].mxu0
  %1402 = vmatprep.mubr.f32.mxu0 0.0
  %1403 = vmatmul.mubr.f32.gmra.mrb[0].mxu0 %v1267
  %v1404 = vpop.f32.mrb[0].mxu0
  %v1405 = vadd.f32 0.0, %v1404
  %v1406 = vpop.f32.mrb[0].mxu0
  %1407 = vmatprep.mubr.f32.mxu0 0.0
  %1408 = vmatmul.mubr.f32.gmra.mrb[0].mxu0 %v1270
  %v1409 = vpop.f32.mrb[0].mxu0
  %v1410 = vadd.f32 0.0, %v1409
  %v1411 = vpop.f32.mrb[0].mxu0
  %1412 = vmatprep.mubr.f32.mxu0 0.0
  %1413 = vmatmul.mubr.f32.gmra.mrb[0].mxu0 %v1273
  %v1414 = vpop.f32.mrb[0].mxu0
  %v1415 = vadd.f32 0.0, %v1414
  %v1416 = vpop.f32.mrb[0].mxu0
  %1417 = vmatprep.mubr.f32.mxu0 0.0
  %1418 = vmatmul.mubr.f32.gmra.mrb[0].mxu0 %v1276
  %v1419 = vpop.f32.mrb[0].mxu0
  %v1420 = vadd.f32 0.0, %v1419
  %v1421 = vpop.f32.mrb[0].mxu0
  %1422 = vmatprep.mubr.f32.mxu0 0.0
  %1423 = vmatmul.mubr.f32.gmra.mrb[0].mxu0 %v1279
  %v1424 = vpop.f32.mrb[0].mxu0
  %v1425 = vadd.f32 0.0, %v1424
  %v1426 = vpop.f32.mrb[0].mxu0
  %1427 = vmatprep.mubr.f32.mxu0 0.0
  %1428 = vmatmul.mubr.f32.gmra.mrb[0].mxu0 %v1282
  %v1429 = vpop.f32.mrb[0].mxu0
  %v1430 = vadd.f32 0.0, %v1429
  %v1431 = vpop.f32.mrb[0].mxu0
  %1432 = vmatprep.mubr.f32.mxu0 0.0
  %1433 = vmatmul.mubr.f32.gmra.mrb[0].mxu0 %v1285
  %v1434 = vpop.f32.mrb[0].mxu0
  %v1435 = vadd.f32 0.0, %v1434
  %v1436 = vpop.f32.mrb[0].mxu0
  %1437 = vmatprep.mubr.f32.mxu0 0.0
  %1438 = vmatmul.mubr.f32.gmra.mrb[0].mxu0 %v1288
  %v1439 = vpop.f32.mrb[0].mxu0
  %v1440 = vadd.f32 0.0, %v1439
  %v1441 = vpop.f32.mrb[0].mxu0
  %1442 = vmatprep.mubr.f32.mxu0 0.0
  %1443 = vmatmul.mubr.f32.gmra.mrb[0].mxu0 %v1291
  %v1444 = vpop.f32.mrb[0].mxu0
  %v1445 = vadd.f32 0.0, %v1444
  %v1446 = vpop.f32.mrb[0].mxu0
  %1447 = vmatprep.mubr.f32.mxu0 0.0
  %1448 = vmatmul.mubr.f32.gmra.mrb[0].mxu0 %v1294
  %v1449 = vpop.f32.mrb[0].mxu0
  %v1450 = vadd.f32 0.0, %v1449
  %v1451 = vpop.f32.mrb[0].mxu0
  %1452 = vmatprep.mubr.f32.mxu0 0.0
  %1453 = vmatmul.mubr.f32.gmra.mrb[0].mxu0 %v1297
  %v1454 = vpop.f32.mrb[0].mxu0
  %v1455 = vadd.f32 0.0, %v1454
  %v1456 = vpop.f32.mrb[0].mxu0
  %1457 = vdwg.mxu0
  %v1458 = vadd.f32 %v1042, %v1175
  %v1459 = vadd.f32 %v1045, %v1178
  %v1460 = vadd.f32 %v1050, %v1183
  %v1461 = vadd.f32 %v1053, %v1186
  %v1462 = vadd.f32 %v1058, %v1191
  %v1463 = vadd.f32 %v1061, %v1194
  %v1464 = vadd.f32 %v1066, %v1199
  %v1465 = vadd.f32 %v1069, %v1202
  %v1466 = vadd.f32 %v1074, %v1207
  %v1467 = vadd.f32 %v1077, %v1210
  %v1468 = vadd.f32 %v1082, %v1215
  %v1469 = vadd.f32 %v1085, %v1218
  %v1470 = vadd.f32 %v1090, %v1223
  %v1471 = vadd.f32 %v1093, %v1226
  %v1472 = vadd.f32 %v1098, %v1231
  %v1473 = vadd.f32 %v1101, %v1234
  %v1474 = vadd.f32 %v1106, %v1239
  %v1475 = vadd.f32 %v1109, %v1242
  %v1476 = vadd.f32 %v1458, %v1370
  %v1477 = vadd.f32 %v1459, %v1375
  %v1478 = vadd.f32 %v1460, %v1380
  %v1479 = vadd.f32 %v1461, %v1385
  %v1480 = vadd.f32 %v1462, %v1390
  %v1481 = vadd.f32 %v1463, %v1395
  %v1482 = vadd.f32 %v1464, %v1400
  %v1483 = vadd.f32 %v1465, %v1405
  %v1484 = vadd.f32 %v1466, %v1410
  %v1485 = vadd.f32 %v1467, %v1415
  %v1486 = vadd.f32 %v1468, %v1420
  %v1487 = vadd.f32 %v1469, %v1425
  %v1488 = vadd.f32 %v1470, %v1430
  %v1489 = vadd.f32 %v1471, %v1435
  %v1490 = vadd.f32 %v1472, %v1440
  %v1491 = vadd.f32 %v1473, %v1445
  %v1492 = vadd.f32 %v1474, %v1450
  %v1493 = vadd.f32 %v1475, %v1455
  %vm1494 = vcmp.gt.f32.partialorder %v1476, 0.0
  %vm1495 = vcmp.gt.f32.partialorder %v1477, 0.0
  %vm1496 = vcmp.gt.f32.partialorder %v1478, 0.0
  %vm1497 = vcmp.gt.f32.partialorder %v1479, 0.0
  %vm1498 = vcmp.gt.f32.partialorder %v1480, 0.0
  %vm1499 = vcmp.gt.f32.partialorder %v1481, 0.0
  %vm1500 = vcmp.gt.f32.partialorder %v1482, 0.0
  %vm1501 = vcmp.gt.f32.partialorder %v1483, 0.0
  %vm1502 = vcmp.gt.f32.partialorder %v1484, 0.0
  %vm1503 = vcmp.gt.f32.partialorder %v1485, 0.0
  %vm1504 = vcmp.gt.f32.partialorder %v1486, 0.0
  %vm1505 = vcmp.gt.f32.partialorder %v1487, 0.0
  %vm1506 = vcmp.gt.f32.partialorder %v1488, 0.0
  %vm1507 = vcmp.gt.f32.partialorder %v1489, 0.0
  %vm1508 = vcmp.gt.f32.partialorder %v1490, 0.0
  %vm1509 = vcmp.gt.f32.partialorder %v1491, 0.0
  %vm1510 = vcmp.gt.f32.partialorder %v1492, 0.0
  %vm1511 = vcmp.gt.f32.partialorder %v1493, 0.0
  %v1512 = vmul.f32 %v1476, 0.2
  %v1513 = vmul.f32 %v1477, 0.2
  %v1514 = vmul.f32 %v1478, 0.2
  %v1515 = vmul.f32 %v1479, 0.2
  %v1516 = vmul.f32 %v1480, 0.2
  %v1517 = vmul.f32 %v1481, 0.2
  %v1518 = vmul.f32 %v1482, 0.2
  %v1519 = vmul.f32 %v1483, 0.2
  %v1520 = vmul.f32 %v1484, 0.2
  %v1521 = vmul.f32 %v1485, 0.2
  %v1522 = vmul.f32 %v1486, 0.2
  %v1523 = vmul.f32 %v1487, 0.2
  %v1524 = vmul.f32 %v1488, 0.2
  %v1525 = vmul.f32 %v1489, 0.2
  %v1526 = vmul.f32 %v1490, 0.2
  %v1527 = vmul.f32 %v1491, 0.2
  %v1528 = vmul.f32 %v1492, 0.2
  %v1529 = vmul.f32 %v1493, 0.2
  %v1530 = vsel %vm1494, %v1476, %v1512
  %v1531 = vsel %vm1495, %v1477, %v1513
  %v1532 = vsel %vm1496, %v1478, %v1514
  %v1533 = vsel %vm1497, %v1479, %v1515
  %v1534 = vsel %vm1498, %v1480, %v1516
  %v1535 = vsel %vm1499, %v1481, %v1517
  %v1536 = vsel %vm1500, %v1482, %v1518
  %v1537 = vsel %vm1501, %v1483, %v1519
  %v1538 = vsel %vm1502, %v1484, %v1520
  %v1539 = vsel %vm1503, %v1485, %v1521
  %v1540 = vsel %vm1504, %v1486, %v1522
  %v1541 = vsel %vm1505, %v1487, %v1523
  %v1542 = vsel %vm1506, %v1488, %v1524
  %v1543 = vsel %vm1507, %v1489, %v1525
  %v1544 = vsel %vm1508, %v1490, %v1526
  %v1545 = vsel %vm1509, %v1491, %v1527
  %v1546 = vsel %vm1510, %v1492, %v1528
  %v1547 = vsel %vm1511, %v1493, %v1529
  %v1548 = vlaneseq
  %v1549 = vshrl.u32 %v1548, 7
  %v1550 = vsub.s32 0, %v1549
  %v1551 = vrot.slane %v782, %v1550
  %v1552 = vmul.f32 %v1530, %v1551
  %v1553 = vmul.f32 %v1531, %v1551
  %v1554 = vmul.f32 %v1532, %v1551
  %v1555 = vmul.f32 %v1533, %v1551
  %v1556 = vmul.f32 %v1534, %v1551
  %v1557 = vmul.f32 %v1535, %v1551
  %v1558 = vmul.f32 %v1536, %v1551
  %v1559 = vmul.f32 %v1537, %v1551
  %v1560 = vmul.f32 %v1538, %v1551
  %v1561 = vmul.f32 %v1539, %v1551
  %v1562 = vmul.f32 %v1540, %v1551
  %v1563 = vmul.f32 %v1541, %v1551
  %v1564 = vmul.f32 %v1542, %v1551
  %v1565 = vmul.f32 %v1543, %v1551
  %v1566 = vmul.f32 %v1544, %v1551
  %v1567 = vmul.f32 %v1545, %v1551
  %v1568 = vmul.f32 %v1546, %v1551
  %v1569 = vmul.f32 %v1547, %v1551
  %1570 = vadd.xlane.f32.xlu0 %v1552
  %v1571 = vpop.xlane.xlu0 %1570
  %1572 = vadd.xlane.f32.xlu0 %v1553
  %v1573 = vpop.xlane.xlu0 %1572
  %1574 = vadd.xlane.f32.xlu0 %v1554
  %v1575 = vpop.xlane.xlu0 %1574
  %1576 = vadd.xlane.f32.xlu0 %v1555
  %v1577 = vpop.xlane.xlu0 %1576
  %1578 = vadd.xlane.f32.xlu0 %v1556
  %v1579 = vpop.xlane.xlu0 %1578
  %1580 = vadd.xlane.f32.xlu0 %v1557
  %v1581 = vpop.xlane.xlu0 %1580
  %1582 = vadd.xlane.f32.xlu0 %v1558
  %v1583 = vpop.xlane.xlu0 %1582
  %1584 = vadd.xlane.f32.xlu0 %v1559
  %v1585 = vpop.xlane.xlu0 %1584
  %1586 = vadd.xlane.f32.xlu0 %v1560
  %v1587 = vpop.xlane.xlu0 %1586
  %1588 = vadd.xlane.f32.xlu0 %v1561
  %v1589 = vpop.xlane.xlu0 %1588
  %1590 = vadd.xlane.f32.xlu0 %v1562
  %v1591 = vpop.xlane.xlu0 %1590
  %1592 = vadd.xlane.f32.xlu0 %v1563
  %v1593 = vpop.xlane.xlu0 %1592
  %1594 = vadd.xlane.f32.xlu0 %v1564
  %v1595 = vpop.xlane.xlu0 %1594
  %1596 = vadd.xlane.f32.xlu0 %v1565
  %v1597 = vpop.xlane.xlu0 %1596
  %1598 = vadd.xlane.f32.xlu0 %v1566
  %v1599 = vpop.xlane.xlu0 %1598
  %1600 = vadd.xlane.f32.xlu0 %v1567
  %v1601 = vpop.xlane.xlu0 %1600
  %1602 = vadd.xlane.f32.xlu0 %v1568
  %v1603 = vpop.xlane.xlu0 %1602
  %1604 = vadd.xlane.f32.xlu0 %v1569
  %v1605 = vpop.xlane.xlu0 %1604
  %vm1606 = vcmp.gt.f32.partialorder %v209, 0.5
  %vm1607 = vcmp.gt.f32.partialorder %v210, 0.5
  %vm1608 = vcmp.gt.f32.partialorder %v211, 0.5
  %vm1609 = vcmp.gt.f32.partialorder %v212, 0.5
  %vm1610 = vcmp.gt.f32.partialorder %v213, 0.5
  %vm1611 = vcmp.gt.f32.partialorder %v214, 0.5
  %vm1612 = vcmp.gt.f32.partialorder %v215, 0.5
  %vm1613 = vcmp.gt.f32.partialorder %v216, 0.5
  %vm1614 = vcmp.gt.f32.partialorder %v217, 0.5
  %vm1615 = vcmp.gt.f32.partialorder %v218, 0.5
  %vm1616 = vcmp.gt.f32.partialorder %v219, 0.5
  %vm1617 = vcmp.gt.f32.partialorder %v220, 0.5
  %vm1618 = vcmp.gt.f32.partialorder %v221, 0.5
  %vm1619 = vcmp.gt.f32.partialorder %v222, 0.5
  %vm1620 = vcmp.gt.f32.partialorder %v223, 0.5
  %vm1621 = vcmp.gt.f32.partialorder %v224, 0.5
  %vm1622 = vcmp.gt.f32.partialorder %v225, 0.5
  %vm1623 = vcmp.gt.f32.partialorder %v226, 0.5
  %v1624 = vsel %vm1606, %v1571, -1e+30
  %v1625 = vsel %vm1607, %v1573, -1e+30
  %v1626 = vsel %vm1608, %v1575, -1e+30
  %v1627 = vsel %vm1609, %v1577, -1e+30
  %v1628 = vsel %vm1610, %v1579, -1e+30
  %v1629 = vsel %vm1611, %v1581, -1e+30
  %v1630 = vsel %vm1612, %v1583, -1e+30
  %v1631 = vsel %vm1613, %v1585, -1e+30
  %v1632 = vsel %vm1614, %v1587, -1e+30
  %v1633 = vsel %vm1615, %v1589, -1e+30
  %v1634 = vsel %vm1616, %v1591, -1e+30
  %v1635 = vsel %vm1617, %v1593, -1e+30
  %v1636 = vsel %vm1618, %v1595, -1e+30
  %v1637 = vsel %vm1619, %v1597, -1e+30
  %v1638 = vsel %vm1620, %v1599, -1e+30
  %v1639 = vsel %vm1621, %v1601, -1e+30
  %v1640 = vsel %vm1622, %v1603, -1e+30
  %v1641 = vsel %vm1623, %v1605, -1e+30
  %v1642 = vsel %vm979, %v1624, -inf
  %v1643 = vsel %vm979, %v1625, -inf
  %v1644 = vsel %vm979, %v1626, -inf
  %v1645 = vsel %vm979, %v1627, -inf
  %v1646 = vsel %vm979, %v1628, -inf
  %v1647 = vmax.f32 %v1642, %v1646
  %v1648 = vsel %vm979, %v1629, -inf
  %v1649 = vmax.f32 %v1643, %v1648
  %v1650 = vsel %vm979, %v1630, -inf
  %v1651 = vmax.f32 %v1644, %v1650
  %v1652 = vsel %vm979, %v1631, -inf
  %v1653 = vmax.f32 %v1645, %v1652
  %v1654 = vsel %vm979, %v1632, -inf
  %v1655 = vmax.f32 %v1647, %v1654
  %v1656 = vsel %vm979, %v1633, -inf
  %v1657 = vmax.f32 %v1649, %v1656
  %v1658 = vsel %vm979, %v1634, -inf
  %v1659 = vmax.f32 %v1651, %v1658
  %v1660 = vsel %vm979, %v1635, -inf
  %v1661 = vmax.f32 %v1653, %v1660
  %v1662 = vsel %vm979, %v1636, -inf
  %v1663 = vmax.f32 %v1655, %v1662
  %v1664 = vsel %vm979, %v1637, -inf
  %v1665 = vmax.f32 %v1657, %v1664
  %v1666 = vsel %vm979, %v1638, -inf
  %v1667 = vmax.f32 %v1659, %v1666
  %v1668 = vsel %vm979, %v1639, -inf
  %v1669 = vmax.f32 %v1661, %v1668
  %v1670 = vsel %vm979, %v1640, -inf
  %v1671 = vmax.f32 %v1663, %v1670
  %v1672 = vsel %vm979, %v1641, -inf
  %v1673 = vmax.f32 %v1665, %v1672
  %v1674 = vmax.f32 %v1671, %v1673
  %v1675 = vmax.f32 %v1667, %v1669
  %v1676 = vmax.f32 %v1674, %v1675
  %v1677 = vrot.slane %v1676, 4
  %v1678 = vmax.f32 %v1676, %v1677
  %v1679 = vrot.slane %v1678, 2
  %v1680 = vmax.f32 %v1678, %v1679
  %v1681 = vrot.slane %v1680, 1
  %v1682 = vmax.f32 %v1680, %v1681
  %v1683 = vmul.f32 %v209, %v1682
  %v1684 = vmul.f32 %v210, %v1682
  %v1685 = vmul.f32 %v211, %v1682
  %v1686 = vmul.f32 %v212, %v1682
  %v1687 = vmul.f32 %v213, %v1682
  %v1688 = vmul.f32 %v214, %v1682
  %v1689 = vmul.f32 %v215, %v1682
  %v1690 = vmul.f32 %v216, %v1682
  %v1691 = vmul.f32 %v217, %v1682
  %v1692 = vmul.f32 %v218, %v1682
  %v1693 = vmul.f32 %v219, %v1682
  %v1694 = vmul.f32 %v220, %v1682
  %v1695 = vmul.f32 %v221, %v1682
  %v1696 = vmul.f32 %v222, %v1682
  %v1697 = vmul.f32 %v223, %v1682
  %v1698 = vmul.f32 %v224, %v1682
  %v1699 = vmul.f32 %v225, %v1682
  %v1700 = vmul.f32 %v226, %v1682
  %v1701 = vsel %vm979, %v1683, 0.0
  %1702 = vadd.xlane.f32.xlu0 %v1701
  %v1703 = vpop.xlane.xlu0 %1702
  %v1704 = vsel %vm979, %v1684, 0.0
  %1705 = vadd.xlane.f32.xlu0 %v1704
  %v1706 = vpop.xlane.xlu0 %1705
  %v1707 = vsel %vm979, %v1685, 0.0
  %1708 = vadd.xlane.f32.xlu0 %v1707
  %v1709 = vpop.xlane.xlu0 %1708
  %v1710 = vsel %vm979, %v1686, 0.0
  %1711 = vadd.xlane.f32.xlu0 %v1710
  %v1712 = vpop.xlane.xlu0 %1711
  %v1713 = vsel %vm979, %v1687, 0.0
  %1714 = vadd.xlane.f32.xlu0 %v1713
  %v1715 = vpop.xlane.xlu0 %1714
  %v1716 = vsel %vm979, %v1688, 0.0
  %1717 = vadd.xlane.f32.xlu0 %v1716
  %v1718 = vpop.xlane.xlu0 %1717
  %v1719 = vsel %vm979, %v1689, 0.0
  %1720 = vadd.xlane.f32.xlu0 %v1719
  %v1721 = vpop.xlane.xlu0 %1720
  %v1722 = vsel %vm979, %v1690, 0.0
  %1723 = vadd.xlane.f32.xlu0 %v1722
  %v1724 = vpop.xlane.xlu0 %1723
  %v1725 = vsel %vm979, %v1691, 0.0
  %1726 = vadd.xlane.f32.xlu0 %v1725
  %v1727 = vpop.xlane.xlu0 %1726
  %v1728 = vsel %vm979, %v1692, 0.0
  %1729 = vadd.xlane.f32.xlu0 %v1728
  %v1730 = vpop.xlane.xlu0 %1729
  %v1731 = vsel %vm979, %v1693, 0.0
  %1732 = vadd.xlane.f32.xlu0 %v1731
  %v1733 = vpop.xlane.xlu0 %1732
  %v1734 = vsel %vm979, %v1694, 0.0
  %1735 = vadd.xlane.f32.xlu0 %v1734
  %v1736 = vpop.xlane.xlu0 %1735
  %v1737 = vsel %vm979, %v1695, 0.0
  %1738 = vadd.xlane.f32.xlu0 %v1737
  %v1739 = vpop.xlane.xlu0 %1738
  %v1740 = vsel %vm979, %v1696, 0.0
  %1741 = vadd.xlane.f32.xlu0 %v1740
  %v1742 = vpop.xlane.xlu0 %1741
  %v1743 = vsel %vm979, %v1697, 0.0
  %1744 = vadd.xlane.f32.xlu0 %v1743
  %v1745 = vpop.xlane.xlu0 %1744
  %v1746 = vsel %vm979, %v1698, 0.0
  %1747 = vadd.xlane.f32.xlu0 %v1746
  %v1748 = vpop.xlane.xlu0 %1747
  %v1749 = vsel %vm979, %v1699, 0.0
  %1750 = vadd.xlane.f32.xlu0 %v1749
  %v1751 = vpop.xlane.xlu0 %1750
  %v1752 = vsel %vm979, %v1700, 0.0
  %1753 = vadd.xlane.f32.xlu0 %v1752
  %v1754 = vpop.xlane.xlu0 %1753
  %v1755 = vsub.f32 %v1571, %v1703
  %v1756 = vsub.f32 %v1573, %v1706
  %v1757 = vsub.f32 %v1575, %v1709
  %v1758 = vsub.f32 %v1577, %v1712
  %v1759 = vsub.f32 %v1579, %v1715
  %v1760 = vsub.f32 %v1581, %v1718
  %v1761 = vsub.f32 %v1583, %v1721
  %v1762 = vsub.f32 %v1585, %v1724
  %v1763 = vsub.f32 %v1587, %v1727
  %v1764 = vsub.f32 %v1589, %v1730
  %v1765 = vsub.f32 %v1591, %v1733
  %v1766 = vsub.f32 %v1593, %v1736
  %v1767 = vsub.f32 %v1595, %v1739
  %v1768 = vsub.f32 %v1597, %v1742
  %v1769 = vsub.f32 %v1599, %v1745
  %v1770 = vsub.f32 %v1601, %v1748
  %v1771 = vsub.f32 %v1603, %v1751
  %v1772 = vsub.f32 %v1605, %v1754
  %v1773 = vmul.f32 %v1755, 1.442695
  %v1774 = vpow.pop %v1773
  %v1775 = vmul.f32 %v1756, 1.442695
  %v1776 = vpow.pop %v1775
  %v1777 = vmul.f32 %v1757, 1.442695
  %v1778 = vpow.pop %v1777
  %v1779 = vmul.f32 %v1758, 1.442695
  %v1780 = vpow.pop %v1779
  %v1781 = vmul.f32 %v1759, 1.442695
  %v1782 = vpow.pop %v1781
  %v1783 = vmul.f32 %v1760, 1.442695
  %v1784 = vpow.pop %v1783
  %v1785 = vmul.f32 %v1761, 1.442695
  %v1786 = vpow.pop %v1785
  %v1787 = vmul.f32 %v1762, 1.442695
  %v1788 = vpow.pop %v1787
  %v1789 = vmul.f32 %v1763, 1.442695
  %v1790 = vpow.pop %v1789
  %v1791 = vmul.f32 %v1764, 1.442695
  %v1792 = vpow.pop %v1791
  %v1793 = vmul.f32 %v1765, 1.442695
  %v1794 = vpow.pop %v1793
  %v1795 = vmul.f32 %v1766, 1.442695
  %v1796 = vpow.pop %v1795
  %v1797 = vmul.f32 %v1767, 1.442695
  %v1798 = vpow.pop %v1797
  %v1799 = vmul.f32 %v1768, 1.442695
  %v1800 = vpow.pop %v1799
  %v1801 = vmul.f32 %v1769, 1.442695
  %v1802 = vpow.pop %v1801
  %v1803 = vmul.f32 %v1770, 1.442695
  %v1804 = vpow.pop %v1803
  %v1805 = vmul.f32 %v1771, 1.442695
  %v1806 = vpow.pop %v1805
  %v1807 = vmul.f32 %v1772, 1.442695
  %v1808 = vpow.pop %v1807
  %1809 = vxpose.xlu0.b32.start [1/16] %v225, 128
  %1810 = vxpose.xlu0.b32.cont [2/16] %v226, 128
  %1811 = vxpose.xlu0.b32.cont [3/16] 0.0, 128
  %1812 = vxpose.xlu0.b32.cont [4/16] 0.0, 128
  %1813 = vxpose.xlu0.b32.cont [5/16] 0.0, 128
  %1814 = vxpose.xlu0.b32.cont [6/16] 0.0, 128
  %1815 = vxpose.xlu0.b32.cont [7/16] 0.0, 128
  %1816 = vxpose.xlu0.b32.cont [8/16] 0.0, 128
  %1817 = vxpose.xlu0.b32.cont [9/16] 0.0, 128
  %1818 = vxpose.xlu0.b32.cont [10/16] 0.0, 128
  %1819 = vxpose.xlu0.b32.cont [11/16] 0.0, 128
  %1820 = vxpose.xlu0.b32.cont [12/16] 0.0, 128
  %1821 = vxpose.xlu0.b32.cont [13/16] 0.0, 128
  %1822 = vxpose.xlu0.b32.cont [14/16] 0.0, 128
  %1823 = vxpose.xlu0.b32.cont [15/16] 0.0, 128
  %1824 = vxpose.xlu0.b32.end [16/16] 0.0, 128
  %v1825 = vpop.trf.xlu0
  %v1826 = vpop.trf.xlu0
  %v1827 = vpop.trf.xlu0
  %v1828 = vpop.trf.xlu0
  %v1829 = vpop.trf.xlu0
  %v1830 = vpop.trf.xlu0
  %v1831 = vpop.trf.xlu0
  %v1832 = vpop.trf.xlu0
  %v1833 = vpop.trf.xlu0
  %v1834 = vpop.trf.xlu0
  %v1835 = vpop.trf.xlu0
  %v1836 = vpop.trf.xlu0
  %v1837 = vpop.trf.xlu0
  %v1838 = vpop.trf.xlu0
  %v1839 = vpop.trf.xlu0
  %v1840 = vpop.trf.xlu0
  %v1842 = vsel %vm979, %v1825, 0
  %v1845 = vsel %vm979, %v1826, 0
  %1847 = vmatprep.subr.mxu0 0.0
  %1848 = vmatpush1.msra.mxu0 %v1774
  %1849 = vmatprep.subr.mxu0 0.0
  %1850 = vmatpush1.msra.mxu0 %v1776
  %1851 = vmatprep.subr.mxu0 0.0
  %1852 = vmatpush1.msra.mxu0 %v1778
  %1853 = vmatprep.subr.mxu0 0.0
  %1854 = vmatpush1.msra.mxu0 %v1780
  %1855 = vmatprep.subr.mxu0 0.0
  %1856 = vmatpush1.msra.mxu0 %v1782
  %1857 = vmatprep.subr.mxu0 0.0
  %1858 = vmatpush1.msra.mxu0 %v1784
  %1859 = vmatprep.subr.mxu0 0.0
  %1860 = vmatpush1.msra.mxu0 %v1786
  %1861 = vmatprep.subr.mxu0 0.0
  %1862 = vmatpush1.msra.mxu0 %v1788
  %1863 = vmatprep.subr.mxu0 0.0
  %1864 = vmatpush1.msra.mxu0 %v1790
  %1865 = vmatprep.subr.mxu0 0.0
  %1866 = vmatpush1.msra.mxu0 %v1792
  %1867 = vmatprep.subr.mxu0 0.0
  %1868 = vmatpush1.msra.mxu0 %v1794
  %1869 = vmatprep.subr.mxu0 0.0
  %1870 = vmatpush1.msra.mxu0 %v1796
  %1871 = vmatprep.subr.mxu0 0.0
  %1872 = vmatpush1.msra.mxu0 %v1798
  %1873 = vmatprep.subr.mxu0 0.0
  %1874 = vmatpush1.msra.mxu0 %v1800
  %1875 = vmatprep.subr.mxu0 0.0
  %1876 = vmatpush1.msra.mxu0 %v1802
  %1877 = vmatprep.subr.mxu0 0.0
  %1878 = vmatpush1.msra.mxu0 %v1804
  %1879 = vmatprep.subr.mxu0 0.0
  %1880 = vmatpush1.msra.mxu0 %v1806
  %1881 = vmatprep.subr.mxu0 0.0
  %1882 = vmatpush1.msra.mxu0 %v1808
  %1883 = vmatprep.subr.mxu0 0.0
  %1884 = vmatpush1.msra.mxu0 0.0
  %1885 = vmatprep.subr.mxu0 0.0
  %1886 = vmatpush1.msra.mxu0 0.0
  %1887 = vmatprep.subr.mxu0 0.0
  %1888 = vmatpush1.msra.mxu0 0.0
  %1889 = vmatprep.subr.mxu0 0.0
  %1890 = vmatpush1.msra.mxu0 0.0
  %1891 = vmatprep.subr.mxu0 0.0
  %1892 = vmatpush1.msra.mxu0 0.0
  %1893 = vmatprep.subr.mxu0 0.0
  %1894 = vmatpush1.msra.mxu0 0.0
  %1895 = vmatprep.subr.mxu0 0.0
  %1896 = vmatpush1.msra.mxu0 0.0
  %1897 = vmatprep.subr.mxu0 0.0
  %1898 = vmatpush1.msra.mxu0 0.0
  %1899 = vmatprep.subr.mxu0 0.0
  %1900 = vmatpush1.msra.mxu0 0.0
  %1901 = vmatprep.subr.mxu0 0.0
  %1902 = vmatpush1.msra.mxu0 0.0
  %1903 = vmatprep.subr.mxu0 0.0
  %1904 = vmatpush1.msra.mxu0 0.0
  %1905 = vmatprep.subr.mxu0 0.0
  %1906 = vmatpush1.msra.mxu0 0.0
  %1907 = vmatprep.subr.mxu0 0.0
  %1908 = vmatpush1.msra.mxu0 0.0
  %1909 = vmatprep.subr.mxu0 0.0
  %1910 = vmatpush1.msra.mxu0 0.0
  %1911 = vmatprep.mubr.f32.mxu0 %v1842
  %1912 = vmatmul.mubr.f32.gmra.mrb[0].mxu0 %v462
  %v1913 = vpop.f32.mrb[0].mxu0
  %v1914 = vadd.f32 0.0, %v1913
  %v1915 = vpop.f32.mrb[0].mxu0
  %1916 = vmatprep.mubr.f32.mxu0 %v1845
  %1917 = vmatmul.mubr.f32.gmra.mrb[0].mxu0 %v463
  %v1918 = vpop.f32.mrb[0].mxu0
  %v1919 = vadd.f32 0.0, %v1918
  %v1920 = vpop.f32.mrb[0].mxu0
  %1921 = vdwg.mxu0
  %v1923 = vsel %vm979, %v209, 0
  %v1926 = vsel %vm979, %v210, 0
  %v1929 = vsel %vm979, %v211, 0
  %v1932 = vsel %vm979, %v212, 0
  %v1935 = vsel %vm979, %v213, 0
  %v1938 = vsel %vm979, %v214, 0
  %v1941 = vsel %vm979, %v215, 0
  %v1944 = vsel %vm979, %v216, 0
  %v1947 = vsel %vm979, %v217, 0
  %v1950 = vsel %vm979, %v218, 0
  %v1953 = vsel %vm979, %v219, 0
  %v1956 = vsel %vm979, %v220, 0
  %v1959 = vsel %vm979, %v221, 0
  %v1962 = vsel %vm979, %v222, 0
  %v1965 = vsel %vm979, %v223, 0
  %v1968 = vsel %vm979, %v224, 0
  %v1971 = vsel %vm979, %v225, 0
  %v1974 = vsel %vm979, %v226, 0
  %1976 = vmatprep.subr.mxu0 0.0
  %1977 = vmatpush1.msra.mxu0 %v1914
  %1978 = vmatprep.subr.mxu0 0.0
  %1979 = vmatpush1.msra.mxu0 %v1919
  %1980 = vmatprep.subr.mxu0 0.0
  %1981 = vmatpush1.msra.mxu0 0.0
  %1982 = vmatprep.subr.mxu0 0.0
  %1983 = vmatpush1.msra.mxu0 0.0
  %1984 = vmatprep.subr.mxu0 0.0
  %1985 = vmatpush1.msra.mxu0 0.0
  %1986 = vmatprep.subr.mxu0 0.0
  %1987 = vmatpush1.msra.mxu0 0.0
  %1988 = vmatprep.subr.mxu0 0.0
  %1989 = vmatpush1.msra.mxu0 0.0
  %1990 = vmatprep.subr.mxu0 0.0
  %1991 = vmatpush1.msra.mxu0 0.0
  %1992 = vmatprep.subr.mxu0 0.0
  %1993 = vmatpush1.msra.mxu0 0.0
  %1994 = vmatprep.subr.mxu0 0.0
  %1995 = vmatpush1.msra.mxu0 0.0
  %1996 = vmatprep.subr.mxu0 0.0
  %1997 = vmatpush1.msra.mxu0 0.0
  %1998 = vmatprep.subr.mxu0 0.0
  %1999 = vmatpush1.msra.mxu0 0.0
  %2000 = vmatprep.subr.mxu0 0.0
  %2001 = vmatpush1.msra.mxu0 0.0
  %2002 = vmatprep.subr.mxu0 0.0
  %2003 = vmatpush1.msra.mxu0 0.0
  %2004 = vmatprep.subr.mxu0 0.0
  %2005 = vmatpush1.msra.mxu0 0.0
  %2006 = vmatprep.subr.mxu0 0.0
  %2007 = vmatpush1.msra.mxu0 0.0
  %2008 = vmatprep.subr.mxu0 0.0
  %2009 = vmatpush1.msra.mxu0 0.0
  %2010 = vmatprep.subr.mxu0 0.0
  %2011 = vmatpush1.msra.mxu0 0.0
  %2012 = vmatprep.subr.mxu0 0.0
  %2013 = vmatpush1.msra.mxu0 0.0
  %2014 = vmatprep.subr.mxu0 0.0
  %2015 = vmatpush1.msra.mxu0 0.0
  %2016 = vmatprep.subr.mxu0 0.0
  %2017 = vmatpush1.msra.mxu0 0.0
  %2018 = vmatprep.subr.mxu0 0.0
  %2019 = vmatpush1.msra.mxu0 0.0
  %2020 = vmatprep.subr.mxu0 0.0
  %2021 = vmatpush1.msra.mxu0 0.0
  %2022 = vmatprep.subr.mxu0 0.0
  %2023 = vmatpush1.msra.mxu0 0.0
  %2024 = vmatprep.subr.mxu0 0.0
  %2025 = vmatpush1.msra.mxu0 0.0
  %2026 = vmatprep.subr.mxu0 0.0
  %2027 = vmatpush1.msra.mxu0 0.0
  %2028 = vmatprep.subr.mxu0 0.0
  %2029 = vmatpush1.msra.mxu0 0.0
  %2030 = vmatprep.subr.mxu0 0.0
  %2031 = vmatpush1.msra.mxu0 0.0
  %2032 = vmatprep.subr.mxu0 0.0
  %2033 = vmatpush1.msra.mxu0 0.0
  %2034 = vmatprep.subr.mxu0 0.0
  %2035 = vmatpush1.msra.mxu0 0.0
  %2036 = vmatprep.subr.mxu0 0.0
  %2037 = vmatpush1.msra.mxu0 0.0
  %2038 = vmatprep.subr.mxu0 0.0
  %2039 = vmatpush1.msra.mxu0 0.0
  %2040 = vmatprep.mubr.f32.mxu0 0.0
  %2041 = vmatmul.mubr.f32.gmra.mrb[0].mxu0 %v1923
  %v2042 = vpop.f32.mrb[0].mxu0
  %v2043 = vadd.f32 0.0, %v2042
  %v2044 = vpop.f32.mrb[0].mxu0
  %2045 = vmatprep.mubr.f32.mxu0 0.0
  %2046 = vmatmul.mubr.f32.gmra.mrb[0].mxu0 %v1926
  %v2047 = vpop.f32.mrb[0].mxu0
  %v2048 = vadd.f32 0.0, %v2047
  %v2049 = vpop.f32.mrb[0].mxu0
  %2050 = vmatprep.mubr.f32.mxu0 0.0
  %2051 = vmatmul.mubr.f32.gmra.mrb[0].mxu0 %v1929
  %v2052 = vpop.f32.mrb[0].mxu0
  %v2053 = vadd.f32 0.0, %v2052
  %v2054 = vpop.f32.mrb[0].mxu0
  %2055 = vmatprep.mubr.f32.mxu0 0.0
  %2056 = vmatmul.mubr.f32.gmra.mrb[0].mxu0 %v1932
  %v2057 = vpop.f32.mrb[0].mxu0
  %v2058 = vadd.f32 0.0, %v2057
  %v2059 = vpop.f32.mrb[0].mxu0
  %2060 = vmatprep.mubr.f32.mxu0 0.0
  %2061 = vmatmul.mubr.f32.gmra.mrb[0].mxu0 %v1935
  %v2062 = vpop.f32.mrb[0].mxu0
  %v2063 = vadd.f32 0.0, %v2062
  %v2064 = vpop.f32.mrb[0].mxu0
  %2065 = vmatprep.mubr.f32.mxu0 0.0
  %2066 = vmatmul.mubr.f32.gmra.mrb[0].mxu0 %v1938
  %v2067 = vpop.f32.mrb[0].mxu0
  %v2068 = vadd.f32 0.0, %v2067
  %v2069 = vpop.f32.mrb[0].mxu0
  %2070 = vmatprep.mubr.f32.mxu0 0.0
  %2071 = vmatmul.mubr.f32.gmra.mrb[0].mxu0 %v1941
  %v2072 = vpop.f32.mrb[0].mxu0
  %v2073 = vadd.f32 0.0, %v2072
  %v2074 = vpop.f32.mrb[0].mxu0
  %2075 = vmatprep.mubr.f32.mxu0 0.0
  %2076 = vmatmul.mubr.f32.gmra.mrb[0].mxu0 %v1944
  %v2077 = vpop.f32.mrb[0].mxu0
  %v2078 = vadd.f32 0.0, %v2077
  %v2079 = vpop.f32.mrb[0].mxu0
  %2080 = vmatprep.mubr.f32.mxu0 0.0
  %2081 = vmatmul.mubr.f32.gmra.mrb[0].mxu0 %v1947
  %v2082 = vpop.f32.mrb[0].mxu0
  %v2083 = vadd.f32 0.0, %v2082
  %v2084 = vpop.f32.mrb[0].mxu0
  %2085 = vmatprep.mubr.f32.mxu0 0.0
  %2086 = vmatmul.mubr.f32.gmra.mrb[0].mxu0 %v1950
  %v2087 = vpop.f32.mrb[0].mxu0
  %v2088 = vadd.f32 0.0, %v2087
  %v2089 = vpop.f32.mrb[0].mxu0
  %2090 = vmatprep.mubr.f32.mxu0 0.0
  %2091 = vmatmul.mubr.f32.gmra.mrb[0].mxu0 %v1953
  %v2092 = vpop.f32.mrb[0].mxu0
  %v2093 = vadd.f32 0.0, %v2092
  %v2094 = vpop.f32.mrb[0].mxu0
  %2095 = vmatprep.mubr.f32.mxu0 0.0
  %2096 = vmatmul.mubr.f32.gmra.mrb[0].mxu0 %v1956
  %v2097 = vpop.f32.mrb[0].mxu0
  %v2098 = vadd.f32 0.0, %v2097
  %v2099 = vpop.f32.mrb[0].mxu0
  %2100 = vmatprep.mubr.f32.mxu0 0.0
  %2101 = vmatmul.mubr.f32.gmra.mrb[0].mxu0 %v1959
  %v2102 = vpop.f32.mrb[0].mxu0
  %v2103 = vadd.f32 0.0, %v2102
  %v2104 = vpop.f32.mrb[0].mxu0
  %2105 = vmatprep.mubr.f32.mxu0 0.0
  %2106 = vmatmul.mubr.f32.gmra.mrb[0].mxu0 %v1962
  %v2107 = vpop.f32.mrb[0].mxu0
  %v2108 = vadd.f32 0.0, %v2107
  %v2109 = vpop.f32.mrb[0].mxu0
  %2110 = vmatprep.mubr.f32.mxu0 0.0
  %2111 = vmatmul.mubr.f32.gmra.mrb[0].mxu0 %v1965
  %v2112 = vpop.f32.mrb[0].mxu0
  %v2113 = vadd.f32 0.0, %v2112
  %v2114 = vpop.f32.mrb[0].mxu0
  %2115 = vmatprep.mubr.f32.mxu0 0.0
  %2116 = vmatmul.mubr.f32.gmra.mrb[0].mxu0 %v1968
  %v2117 = vpop.f32.mrb[0].mxu0
  %v2118 = vadd.f32 0.0, %v2117
  %v2119 = vpop.f32.mrb[0].mxu0
  %2120 = vmatprep.mubr.f32.mxu0 0.0
  %2121 = vmatmul.mubr.f32.gmra.mrb[0].mxu0 %v1971
  %v2122 = vpop.f32.mrb[0].mxu0
  %v2123 = vadd.f32 0.0, %v2122
  %v2124 = vpop.f32.mrb[0].mxu0
  %2125 = vmatprep.mubr.f32.mxu0 0.0
  %2126 = vmatmul.mubr.f32.gmra.mrb[0].mxu0 %v1974
  %v2127 = vpop.f32.mrb[0].mxu0
  %v2128 = vadd.f32 0.0, %v2127
  %v2129 = vpop.f32.mrb[0].mxu0
  %2130 = vdwg.mxu0
  %v2131 = vmax.f32 %v2043, 1e-20
  %v2132 = vmax.f32 %v2048, 1e-20
  %v2133 = vmax.f32 %v2053, 1e-20
  %v2134 = vmax.f32 %v2058, 1e-20
  %v2135 = vmax.f32 %v2063, 1e-20
  %v2136 = vmax.f32 %v2068, 1e-20
  %v2137 = vmax.f32 %v2073, 1e-20
  %v2138 = vmax.f32 %v2078, 1e-20
  %v2139 = vmax.f32 %v2083, 1e-20
  %v2140 = vmax.f32 %v2088, 1e-20
  %v2141 = vmax.f32 %v2093, 1e-20
  %v2142 = vmax.f32 %v2098, 1e-20
  %v2143 = vmax.f32 %v2103, 1e-20
  %v2144 = vmax.f32 %v2108, 1e-20
  %v2145 = vmax.f32 %v2113, 1e-20
  %v2146 = vmax.f32 %v2118, 1e-20
  %v2147 = vmax.f32 %v2123, 1e-20
  %v2148 = vmax.f32 %v2128, 1e-20
  %v2149 = vrcp.pop %v2131
  %v2150 = vmul.f32 %v1774, %v2149
  %v2151 = vrcp.pop %v2132
  %v2152 = vmul.f32 %v1776, %v2151
  %v2153 = vrcp.pop %v2133
  %v2154 = vmul.f32 %v1778, %v2153
  %v2155 = vrcp.pop %v2134
  %v2156 = vmul.f32 %v1780, %v2155
  %v2157 = vrcp.pop %v2135
  %v2158 = vmul.f32 %v1782, %v2157
  %v2159 = vrcp.pop %v2136
  %v2160 = vmul.f32 %v1784, %v2159
  %v2161 = vrcp.pop %v2137
  %v2162 = vmul.f32 %v1786, %v2161
  %v2163 = vrcp.pop %v2138
  %v2164 = vmul.f32 %v1788, %v2163
  %v2165 = vrcp.pop %v2139
  %v2166 = vmul.f32 %v1790, %v2165
  %v2167 = vrcp.pop %v2140
  %v2168 = vmul.f32 %v1792, %v2167
  %v2169 = vrcp.pop %v2141
  %v2170 = vmul.f32 %v1794, %v2169
  %v2171 = vrcp.pop %v2142
  %v2172 = vmul.f32 %v1796, %v2171
  %v2173 = vrcp.pop %v2143
  %v2174 = vmul.f32 %v1798, %v2173
  %v2175 = vrcp.pop %v2144
  %v2176 = vmul.f32 %v1800, %v2175
  %v2177 = vrcp.pop %v2145
  %v2178 = vmul.f32 %v1802, %v2177
  %v2179 = vrcp.pop %v2146
  %v2180 = vmul.f32 %v1804, %v2179
  %v2181 = vrcp.pop %v2147
  %v2182 = vmul.f32 %v1806, %v2181
  %v2183 = vrcp.pop %v2148
  %v2184 = vmul.f32 %v1808, %v2183
  %2186 = vset.pattern.permute.xlu0 0
  %2187 = vperm.xlu0 %2186, %v2150
  %v2188 = vpop.permute.xlu0 %2187
  %2191 = vset.pattern.permute.xlu0 0
  %2192 = vperm.xlu0 %2191, %v2152
  %v2193 = vpop.permute.xlu0 %2192
  %2196 = vset.pattern.permute.xlu0 0
  %2197 = vperm.xlu0 %2196, %v2154
  %v2198 = vpop.permute.xlu0 %2197
  %2201 = vset.pattern.permute.xlu0 0
  %2202 = vperm.xlu0 %2201, %v2156
  %v2203 = vpop.permute.xlu0 %2202
  %2206 = vset.pattern.permute.xlu0 0
  %2207 = vperm.xlu0 %2206, %v2158
  %v2208 = vpop.permute.xlu0 %2207
  %2211 = vset.pattern.permute.xlu0 0
  %2212 = vperm.xlu0 %2211, %v2160
  %v2213 = vpop.permute.xlu0 %2212
  %2216 = vset.pattern.permute.xlu0 0
  %2217 = vperm.xlu0 %2216, %v2162
  %v2218 = vpop.permute.xlu0 %2217
  %2221 = vset.pattern.permute.xlu0 0
  %2222 = vperm.xlu0 %2221, %v2164
  %v2223 = vpop.permute.xlu0 %2222
  %2226 = vset.pattern.permute.xlu0 0
  %2227 = vperm.xlu0 %2226, %v2166
  %v2228 = vpop.permute.xlu0 %2227
  %2231 = vset.pattern.permute.xlu0 0
  %2232 = vperm.xlu0 %2231, %v2168
  %v2233 = vpop.permute.xlu0 %2232
  %2236 = vset.pattern.permute.xlu0 0
  %2237 = vperm.xlu0 %2236, %v2170
  %v2238 = vpop.permute.xlu0 %2237
  %2241 = vset.pattern.permute.xlu0 0
  %2242 = vperm.xlu0 %2241, %v2172
  %v2243 = vpop.permute.xlu0 %2242
  %2246 = vset.pattern.permute.xlu0 0
  %2247 = vperm.xlu0 %2246, %v2174
  %v2248 = vpop.permute.xlu0 %2247
  %2251 = vset.pattern.permute.xlu0 0
  %2252 = vperm.xlu0 %2251, %v2176
  %v2253 = vpop.permute.xlu0 %2252
  %2256 = vset.pattern.permute.xlu0 0
  %2257 = vperm.xlu0 %2256, %v2178
  %v2258 = vpop.permute.xlu0 %2257
  %2261 = vset.pattern.permute.xlu0 0
  %2262 = vperm.xlu0 %2261, %v2180
  %v2263 = vpop.permute.xlu0 %2262
  %2266 = vset.pattern.permute.xlu0 0
  %2267 = vperm.xlu0 %2266, %v2182
  %v2268 = vpop.permute.xlu0 %2267
  %2271 = vset.pattern.permute.xlu0 0
  %2272 = vperm.xlu0 %2271, %v2184
  %v2273 = vpop.permute.xlu0 %2272
  %v2275 = vmul.f32 %v2188, %v1042
  %v2276 = vmul.f32 %v2193, %v1045
  %v2277 = vmul.f32 %v2198, %v1050
  %v2278 = vmul.f32 %v2203, %v1053
  %v2279 = vmul.f32 %v2208, %v1058
  %v2280 = vmul.f32 %v2213, %v1061
  %v2281 = vmul.f32 %v2218, %v1066
  %v2282 = vmul.f32 %v2223, %v1069
  %v2283 = vmul.f32 %v2228, %v1074
  %v2284 = vmul.f32 %v2233, %v1077
  %v2285 = vmul.f32 %v2238, %v1082
  %v2286 = vmul.f32 %v2243, %v1085
  %v2287 = vmul.f32 %v2248, %v1090
  %v2288 = vmul.f32 %v2253, %v1093
  %v2289 = vmul.f32 %v2258, %v1098
  %v2290 = vmul.f32 %v2263, %v1101
  %v2291 = vmul.f32 %v2268, %v1106
  %v2292 = vmul.f32 %v2273, %v1109
  %v2293 = vpack.c.bf16 %v2276, %v2275
  %v2294 = vpack.c.bf16 %v2278, %v2277
  %v2295 = vpack.c.bf16 %v2280, %v2279
  %v2296 = vpack.c.bf16 %v2282, %v2281
  %v2297 = vpack.c.bf16 %v2284, %v2283
  %v2298 = vpack.c.bf16 %v2286, %v2285
  %v2299 = vpack.c.bf16 %v2288, %v2287
  %v2300 = vpack.c.bf16 %v2290, %v2289
  %v2301 = vpack.c.bf16 %v2292, %v2291
  %v2302 = vlaneseq
  %v2303 = vshrl.u32 %v2302, 7
  %v2304 = vsub.s32 0, %v2303
  %v2305 = vrot.slane %v783, %v2304
  %2306 = vxpose.xlu0.c.b16.start [1/8] %v272, 128
  %2307 = vxpose.xlu0.c.b16.cont [2/8] %v273, 128
  %2308 = vxpose.xlu0.c.b16.cont [3/8] %v274, 128
  %2309 = vxpose.xlu0.c.b16.cont [4/8] %v275, 128
  %2310 = vxpose.xlu0.c.b16.cont [5/8] %v276, 128
  %2311 = vxpose.xlu0.c.b16.cont [6/8] %v277, 128
  %2312 = vxpose.xlu0.c.b16.cont [7/8] %v278, 128
  %2313 = vxpose.xlu0.c.b16.end [8/8] %v279, 128
  %v2314 = vpop.trf.xlu0
  %v2315 = vpop.trf.xlu0
  %v2316 = vpop.trf.xlu0
  %v2317 = vpop.trf.xlu0
  %v2318 = vpop.trf.xlu0
  %v2319 = vpop.trf.xlu0
  %v2320 = vpop.trf.xlu0
  %v2321 = vpop.trf.xlu0
  %2322 = vxpose.xlu0.c.b16.start [1/8] %v280, 128
  %2323 = vxpose.xlu0.c.b16.cont [2/8] 0, 128
  %2324 = vxpose.xlu0.c.b16.cont [3/8] 0, 128
  %2325 = vxpose.xlu0.c.b16.cont [4/8] 0, 128
  %2326 = vxpose.xlu0.c.b16.cont [5/8] 0, 128
  %2327 = vxpose.xlu0.c.b16.cont [6/8] 0, 128
  %2328 = vxpose.xlu0.c.b16.cont [7/8] 0, 128
  %2329 = vxpose.xlu0.c.b16.end [8/8] 0, 128
  %v2330 = vpop.trf.xlu0
  %v2331 = vpop.trf.xlu0
  %v2332 = vpop.trf.xlu0
  %v2333 = vpop.trf.xlu0
  %v2334 = vpop.trf.xlu0
  %v2335 = vpop.trf.xlu0
  %v2336 = vpop.trf.xlu0
  %v2337 = vpop.trf.xlu0
  %v2339 = vsel %vm979, %v2330, 0
  %2341 = vmatprep.subr.bf16.mxu0 0
  %2342 = vmatpush1.bf16.msra.mxu0 %v2293
  %2343 = vmatprep.subr.bf16.mxu0 0
  %2344 = vmatpush1.bf16.msra.mxu0 %v2294
  %2345 = vmatprep.subr.bf16.mxu0 0
  %2346 = vmatpush1.bf16.msra.mxu0 %v2295
  %2347 = vmatprep.subr.bf16.mxu0 0
  %2348 = vmatpush1.bf16.msra.mxu0 %v2296
  %2349 = vmatprep.subr.bf16.mxu0 0
  %2350 = vmatpush1.bf16.msra.mxu0 %v2297
  %2351 = vmatprep.subr.bf16.mxu0 0
  %2352 = vmatpush1.bf16.msra.mxu0 %v2298
  %2353 = vmatprep.subr.bf16.mxu0 0
  %2354 = vmatpush1.bf16.msra.mxu0 %v2299
  %2355 = vmatprep.subr.bf16.mxu0 0
  %2356 = vmatpush1.bf16.msra.mxu0 %v2300
  %2357 = vmatprep.subr.bf16.mxu0 0
  %2358 = vmatpush1.bf16.msra.mxu0 %v2301
  %2359 = vmatprep.subr.bf16.mxu0 0
  %2360 = vmatpush1.bf16.msra.mxu0 0
  %2361 = vmatprep.subr.bf16.mxu0 0
  %2362 = vmatpush1.bf16.msra.mxu0 0
  %2363 = vmatprep.subr.bf16.mxu0 0
  %2364 = vmatpush1.bf16.msra.mxu0 0
  %2365 = vmatprep.subr.bf16.mxu0 0
  %2366 = vmatpush1.bf16.msra.mxu0 0
  %2367 = vmatprep.subr.bf16.mxu0 0
  %2368 = vmatpush1.bf16.msra.mxu0 0
  %2369 = vmatprep.subr.bf16.mxu0 0
  %2370 = vmatpush1.bf16.msra.mxu0 0
  %2371 = vmatprep.subr.bf16.mxu0 0
  %2372 = vmatpush1.bf16.msra.mxu0 0
  %2373 = vmatprep.mubr.bf16.mxu0 %v2339
  %2374 = vmatmul.mubr.bf16.gmra.mrb[0].mxu0 %v2314
  %v2375 = vpop.f32.mrb[0].mxu0
  %v2376 = vadd.f32 %v2305, %v2375
  %v2377 = vpop.f32.mrb[0].mxu0
  %v2378 = vpop.f32.mrb[0].mxu0
  %v2379 = vadd.f32 %v2305, %v2378
  %v2380 = vpop.f32.mrb[0].mxu0
  %2381 = vdwg.mxu0
  %v2382 = vmax.f32 %v2376, 0.0
  %v2383 = vmax.f32 %v2379, 0.0
  %v2384 = vpack.c.bf16 %v2383, %v2382
  %v2385 = vlaneseq
  %v2386 = vshrl.u32 %v2385, 7
  %v2387 = vsub.s32 0, %v2386
  %v2388 = vrot.slane %v784, %v2387
  %v2405 = vunpack.c.l.b16 %v713
  %v2406 = vunpack.c.l.b16 %v714
  %v2407 = vunpack.c.l.b16 %v715
  %v2408 = vunpack.c.l.b16 %v716
  %v2409 = vunpack.c.l.b16 %v717
  %v2410 = vunpack.c.l.b16 %v718
  %v2411 = vunpack.c.l.b16 %v719
  %v2412 = vunpack.c.l.b16 %v720
  %v2413 = vunpack.c.l.b16 %v721
  %v2414 = vunpack.c.l.b16 %v722
  %v2415 = vunpack.c.l.b16 %v723
  %v2416 = vunpack.c.l.b16 %v724
  %v2417 = vunpack.c.l.b16 %v725
  %v2418 = vunpack.c.l.b16 %v726
  %v2419 = vunpack.c.l.b16 %v727
  %v2420 = vunpack.c.l.b16 %v728
  %v2421 = vpack.c.b16 %v2406, %v2405
  %v2422 = vpack.c.b16 %v2408, %v2407
  %v2423 = vpack.c.b16 %v2410, %v2409
  %v2424 = vpack.c.b16 %v2412, %v2411
  %v2425 = vpack.c.b16 %v2414, %v2413
  %v2426 = vpack.c.b16 %v2416, %v2415
  %v2427 = vpack.c.b16 %v2418, %v2417
  %v2428 = vpack.c.b16 %v2420, %v2419
  %2437 = vmatprep.subr.bf16.mxu0 0
  %2438 = vmatpush1.bf16.msra.mxu0 %v2421
  %2439 = vmatprep.subr.bf16.mxu0 0
  %2440 = vmatpush1.bf16.msra.mxu0 %v2422
  %2441 = vmatprep.subr.bf16.mxu0 0
  %2442 = vmatpush1.bf16.msra.mxu0 %v2423
  %2443 = vmatprep.subr.bf16.mxu0 0
  %2444 = vmatpush1.bf16.msra.mxu0 %v2424
  %2445 = vmatprep.subr.bf16.mxu0 0
  %2446 = vmatpush1.bf16.msra.mxu0 %v2425
  %2447 = vmatprep.subr.bf16.mxu0 0
  %2448 = vmatpush1.bf16.msra.mxu0 %v2426
  %2449 = vmatprep.subr.bf16.mxu0 0
  %2450 = vmatpush1.bf16.msra.mxu0 %v2427
  %2451 = vmatprep.subr.bf16.mxu0 0
  %2452 = vmatpush1.bf16.msra.mxu0 %v2428
  %2453 = vmatprep.subr.bf16.mxu0 0
  %2454 = vmatpush1.bf16.msra.mxu0 0
  %2455 = vmatprep.subr.bf16.mxu0 0
  %2456 = vmatpush1.bf16.msra.mxu0 0
  %2457 = vmatprep.subr.bf16.mxu0 0
  %2458 = vmatpush1.bf16.msra.mxu0 0
  %2459 = vmatprep.subr.bf16.mxu0 0
  %2460 = vmatpush1.bf16.msra.mxu0 0
  %2461 = vmatprep.subr.bf16.mxu0 0
  %2462 = vmatpush1.bf16.msra.mxu0 0
  %2463 = vmatprep.subr.bf16.mxu0 0
  %2464 = vmatpush1.bf16.msra.mxu0 0
  %2465 = vmatprep.subr.bf16.mxu0 0
  %2466 = vmatpush1.bf16.msra.mxu0 0
  %2467 = vmatprep.subr.bf16.mxu0 0
  %2468 = vmatpush1.bf16.msra.mxu0 0
  %2469 = vmatprep.mubr.bf16.mxu0 0
  %2470 = vmatmul.mubr.bf16.gmra.mrb[0].mxu0 %v2384
  %v2471 = vpop.f32.mrb[0].mxu0
  %v2472 = vadd.f32 %v2388, %v2471
  %v2473 = vpop.f32.mrb[0].mxu0
  %v2474 = vpop.f32.mrb[0].mxu0
  %v2475 = vadd.f32 %v2388, %v2474
  %v2476 = vpop.f32.mrb[0].mxu0
  %2477 = vdwg.mxu0
  %v2478 = vlaneseq
  %v2479 = vshrl.u32 %v2478, 7
  %v2480 = vsub.s32 0, %v2479
  %v2481 = vrot.slane %v785, %v2480
  %v2498 = vunpack.c.l.b16 %v729
  %v2499 = vunpack.c.l.b16 %v730
  %v2500 = vunpack.c.l.b16 %v731
  %v2501 = vunpack.c.l.b16 %v732
  %v2502 = vunpack.c.l.b16 %v733
  %v2503 = vunpack.c.l.b16 %v734
  %v2504 = vunpack.c.l.b16 %v735
  %v2505 = vunpack.c.l.b16 %v736
  %v2506 = vunpack.c.l.b16 %v737
  %v2507 = vunpack.c.l.b16 %v738
  %v2508 = vunpack.c.l.b16 %v739
  %v2509 = vunpack.c.l.b16 %v740
  %v2510 = vunpack.c.l.b16 %v741
  %v2511 = vunpack.c.l.b16 %v742
  %v2512 = vunpack.c.l.b16 %v743
  %v2513 = vunpack.c.l.b16 %v744
  %v2514 = vpack.c.b16 %v2499, %v2498
  %v2515 = vpack.c.b16 %v2501, %v2500
  %v2516 = vpack.c.b16 %v2503, %v2502
  %v2517 = vpack.c.b16 %v2505, %v2504
  %v2518 = vpack.c.b16 %v2507, %v2506
  %v2519 = vpack.c.b16 %v2509, %v2508
  %v2520 = vpack.c.b16 %v2511, %v2510
  %v2521 = vpack.c.b16 %v2513, %v2512
  %2530 = vmatprep.subr.bf16.mxu0 0
  %2531 = vmatpush1.bf16.msra.mxu0 %v2514
  %2532 = vmatprep.subr.bf16.mxu0 0
  %2533 = vmatpush1.bf16.msra.mxu0 %v2515
  %2534 = vmatprep.subr.bf16.mxu0 0
  %2535 = vmatpush1.bf16.msra.mxu0 %v2516
  %2536 = vmatprep.subr.bf16.mxu0 0
  %2537 = vmatpush1.bf16.msra.mxu0 %v2517
  %2538 = vmatprep.subr.bf16.mxu0 0
  %2539 = vmatpush1.bf16.msra.mxu0 %v2518
  %2540 = vmatprep.subr.bf16.mxu0 0
  %2541 = vmatpush1.bf16.msra.mxu0 %v2519
  %2542 = vmatprep.subr.bf16.mxu0 0
  %2543 = vmatpush1.bf16.msra.mxu0 %v2520
  %2544 = vmatprep.subr.bf16.mxu0 0
  %2545 = vmatpush1.bf16.msra.mxu0 %v2521
  %2546 = vmatprep.subr.bf16.mxu0 0
  %2547 = vmatpush1.bf16.msra.mxu0 0
  %2548 = vmatprep.subr.bf16.mxu0 0
  %2549 = vmatpush1.bf16.msra.mxu0 0
  %2550 = vmatprep.subr.bf16.mxu0 0
  %2551 = vmatpush1.bf16.msra.mxu0 0
  %2552 = vmatprep.subr.bf16.mxu0 0
  %2553 = vmatpush1.bf16.msra.mxu0 0
  %2554 = vmatprep.subr.bf16.mxu0 0
  %2555 = vmatpush1.bf16.msra.mxu0 0
  %2556 = vmatprep.subr.bf16.mxu0 0
  %2557 = vmatpush1.bf16.msra.mxu0 0
  %2558 = vmatprep.subr.bf16.mxu0 0
  %2559 = vmatpush1.bf16.msra.mxu0 0
  %2560 = vmatprep.subr.bf16.mxu0 0
  %2561 = vmatpush1.bf16.msra.mxu0 0
  %2562 = vmatprep.mubr.bf16.mxu0 0
  %2563 = vmatmul.mubr.bf16.gmra.mrb[0].mxu0 %v2384
  %v2564 = vpop.f32.mrb[0].mxu0
  %v2565 = vadd.f32 %v2481, %v2564
  %v2566 = vpop.f32.mrb[0].mxu0
  %v2567 = vpop.f32.mrb[0].mxu0
  %v2568 = vadd.f32 %v2481, %v2567
  %v2569 = vpop.f32.mrb[0].mxu0
  %2570 = vdwg.mxu0
  %v2571 = vpack.c.bf16 %v2475, %v2472
  %2572 = vmatprep.subr.bf16.mxu0 0
  %2573 = vmatpush1.bf16.msra.mxu0 %v2571
  %2574 = vmatprep.subr.bf16.mxu0 0
  %2575 = vmatpush1.bf16.msra.mxu0 0
  %2576 = vmatprep.subr.bf16.mxu0 0
  %2577 = vmatpush1.bf16.msra.mxu0 0
  %2578 = vmatprep.subr.bf16.mxu0 0
  %2579 = vmatpush1.bf16.msra.mxu0 0
  %2580 = vmatprep.subr.bf16.mxu0 0
  %2581 = vmatpush1.bf16.msra.mxu0 0
  %2582 = vmatprep.subr.bf16.mxu0 0
  %2583 = vmatpush1.bf16.msra.mxu0 0
  %2584 = vmatprep.subr.bf16.mxu0 0
  %2585 = vmatpush1.bf16.msra.mxu0 0
  %2586 = vmatprep.subr.bf16.mxu0 0
  %2587 = vmatpush1.bf16.msra.mxu0 0
  %2588 = vmatprep.subr.bf16.mxu0 0
  %2589 = vmatpush1.bf16.msra.mxu0 0
  %2590 = vmatprep.subr.bf16.mxu0 0
  %2591 = vmatpush1.bf16.msra.mxu0 0
  %2592 = vmatprep.subr.bf16.mxu0 0
  %2593 = vmatpush1.bf16.msra.mxu0 0
  %2594 = vmatprep.subr.bf16.mxu0 0
  %2595 = vmatpush1.bf16.msra.mxu0 0
  %2596 = vmatprep.subr.bf16.mxu0 0
  %2597 = vmatpush1.bf16.msra.mxu0 0
  %2598 = vmatprep.subr.bf16.mxu0 0
  %2599 = vmatpush1.bf16.msra.mxu0 0
  %2600 = vmatprep.subr.bf16.mxu0 0
  %2601 = vmatpush1.bf16.msra.mxu0 0
  %2602 = vmatprep.subr.bf16.mxu0 0
  %2603 = vmatpush1.bf16.msra.mxu0 0
  %2604 = vmatprep.mubr.bf16.mxu0 0
  %2605 = vmatmul.mubr.bf16.gmra.mrb[0].mxu0 %v981
  %v2606 = vpop.f32.mrb[0].mxu0
  %v2607 = vadd.f32 0.0, %v2606
  %v2608 = vpop.f32.mrb[0].mxu0
  %v2609 = vpop.f32.mrb[0].mxu0
  %v2610 = vadd.f32 0.0, %v2609
  %v2611 = vpop.f32.mrb[0].mxu0
  %2612 = vmatprep.mubr.bf16.mxu0 0
  %2613 = vmatmul.mubr.bf16.gmra.mrb[0].mxu0 %v984
  %v2614 = vpop.f32.mrb[0].mxu0
  %v2615 = vadd.f32 0.0, %v2614
  %v2616 = vpop.f32.mrb[0].mxu0
  %v2617 = vpop.f32.mrb[0].mxu0
  %v2618 = vadd.f32 0.0, %v2617
  %v2619 = vpop.f32.mrb[0].mxu0
  %2620 = vmatprep.mubr.bf16.mxu0 0
  %2621 = vmatmul.mubr.bf16.gmra.mrb[0].mxu0 %v987
  %v2622 = vpop.f32.mrb[0].mxu0
  %v2623 = vadd.f32 0.0, %v2622
  %v2624 = vpop.f32.mrb[0].mxu0
  %v2625 = vpop.f32.mrb[0].mxu0
  %v2626 = vadd.f32 0.0, %v2625
  %v2627 = vpop.f32.mrb[0].mxu0
  %2628 = vmatprep.mubr.bf16.mxu0 0
  %2629 = vmatmul.mubr.bf16.gmra.mrb[0].mxu0 %v990
  %v2630 = vpop.f32.mrb[0].mxu0
  %v2631 = vadd.f32 0.0, %v2630
  %v2632 = vpop.f32.mrb[0].mxu0
  %v2633 = vpop.f32.mrb[0].mxu0
  %v2634 = vadd.f32 0.0, %v2633
  %v2635 = vpop.f32.mrb[0].mxu0
  %2636 = vmatprep.mubr.bf16.mxu0 0
  %2637 = vmatmul.mubr.bf16.gmra.mrb[0].mxu0 %v993
  %v2638 = vpop.f32.mrb[0].mxu0
  %v2639 = vadd.f32 0.0, %v2638
  %v2640 = vpop.f32.mrb[0].mxu0
  %v2641 = vpop.f32.mrb[0].mxu0
  %v2642 = vadd.f32 0.0, %v2641
  %v2643 = vpop.f32.mrb[0].mxu0
  %2644 = vmatprep.mubr.bf16.mxu0 0
  %2645 = vmatmul.mubr.bf16.gmra.mrb[0].mxu0 %v996
  %v2646 = vpop.f32.mrb[0].mxu0
  %v2647 = vadd.f32 0.0, %v2646
  %v2648 = vpop.f32.mrb[0].mxu0
  %v2649 = vpop.f32.mrb[0].mxu0
  %v2650 = vadd.f32 0.0, %v2649
  %v2651 = vpop.f32.mrb[0].mxu0
  %2652 = vmatprep.mubr.bf16.mxu0 0
  %2653 = vmatmul.mubr.bf16.gmra.mrb[0].mxu0 %v999
  %v2654 = vpop.f32.mrb[0].mxu0
  %v2655 = vadd.f32 0.0, %v2654
  %v2656 = vpop.f32.mrb[0].mxu0
  %v2657 = vpop.f32.mrb[0].mxu0
  %v2658 = vadd.f32 0.0, %v2657
  %v2659 = vpop.f32.mrb[0].mxu0
  %2660 = vmatprep.mubr.bf16.mxu0 0
  %2661 = vmatmul.mubr.bf16.gmra.mrb[0].mxu0 %v1002
  %v2662 = vpop.f32.mrb[0].mxu0
  %v2663 = vadd.f32 0.0, %v2662
  %v2664 = vpop.f32.mrb[0].mxu0
  %v2665 = vpop.f32.mrb[0].mxu0
  %v2666 = vadd.f32 0.0, %v2665
  %v2667 = vpop.f32.mrb[0].mxu0
  %2668 = vmatprep.mubr.bf16.mxu0 0
  %2669 = vmatmul.mubr.bf16.gmra.mrb[0].mxu0 %v1005
  %v2670 = vpop.f32.mrb[0].mxu0
  %v2671 = vadd.f32 0.0, %v2670
  %v2672 = vpop.f32.mrb[0].mxu0
  %v2673 = vpop.f32.mrb[0].mxu0
  %v2674 = vadd.f32 0.0, %v2673
  %v2675 = vpop.f32.mrb[0].mxu0
  %2676 = vdwg.mxu0
  %v2677 = vpack.c.bf16 %v2568, %v2565
  %2678 = vmatprep.subr.bf16.mxu0 0
  %2679 = vmatpush1.bf16.msra.mxu0 %v2677
  %2680 = vmatprep.subr.bf16.mxu0 0
  %2681 = vmatpush1.bf16.msra.mxu0 0
  %2682 = vmatprep.subr.bf16.mxu0 0
  %2683 = vmatpush1.bf16.msra.mxu0 0
  %2684 = vmatprep.subr.bf16.mxu0 0
  %2685 = vmatpush1.bf16.msra.mxu0 0
  %2686 = vmatprep.subr.bf16.mxu0 0
  %2687 = vmatpush1.bf16.msra.mxu0 0
  %2688 = vmatprep.subr.bf16.mxu0 0
  %2689 = vmatpush1.bf16.msra.mxu0 0
  %2690 = vmatprep.subr.bf16.mxu0 0
  %2691 = vmatpush1.bf16.msra.mxu0 0
  %2692 = vmatprep.subr.bf16.mxu0 0
  %2693 = vmatpush1.bf16.msra.mxu0 0
  %2694 = vmatprep.subr.bf16.mxu0 0
  %2695 = vmatpush1.bf16.msra.mxu0 0
  %2696 = vmatprep.subr.bf16.mxu0 0
  %2697 = vmatpush1.bf16.msra.mxu0 0
  %2698 = vmatprep.subr.bf16.mxu0 0
  %2699 = vmatpush1.bf16.msra.mxu0 0
  %2700 = vmatprep.subr.bf16.mxu0 0
  %2701 = vmatpush1.bf16.msra.mxu0 0
  %2702 = vmatprep.subr.bf16.mxu0 0
  %2703 = vmatpush1.bf16.msra.mxu0 0
  %2704 = vmatprep.subr.bf16.mxu0 0
  %2705 = vmatpush1.bf16.msra.mxu0 0
  %2706 = vmatprep.subr.bf16.mxu0 0
  %2707 = vmatpush1.bf16.msra.mxu0 0
  %2708 = vmatprep.subr.bf16.mxu0 0
  %2709 = vmatpush1.bf16.msra.mxu0 0
  %2710 = vmatprep.mubr.bf16.mxu0 0
  %2711 = vmatmul.mubr.bf16.gmra.mrb[0].mxu0 %v1114
  %v2712 = vpop.f32.mrb[0].mxu0
  %v2713 = vadd.f32 0.0, %v2712
  %v2714 = vpop.f32.mrb[0].mxu0
  %v2715 = vpop.f32.mrb[0].mxu0
  %v2716 = vadd.f32 0.0, %v2715
  %v2717 = vpop.f32.mrb[0].mxu0
  %2718 = vmatprep.mubr.bf16.mxu0 0
  %2719 = vmatmul.mubr.bf16.gmra.mrb[0].mxu0 %v1117
  %v2720 = vpop.f32.mrb[0].mxu0
  %v2721 = vadd.f32 0.0, %v2720
  %v2722 = vpop.f32.mrb[0].mxu0
  %v2723 = vpop.f32.mrb[0].mxu0
  %v2724 = vadd.f32 0.0, %v2723
  %v2725 = vpop.f32.mrb[0].mxu0
  %2726 = vmatprep.mubr.bf16.mxu0 0
  %2727 = vmatmul.mubr.bf16.gmra.mrb[0].mxu0 %v1120
  %v2728 = vpop.f32.mrb[0].mxu0
  %v2729 = vadd.f32 0.0, %v2728
  %v2730 = vpop.f32.mrb[0].mxu0
  %v2731 = vpop.f32.mrb[0].mxu0
  %v2732 = vadd.f32 0.0, %v2731
  %v2733 = vpop.f32.mrb[0].mxu0
  %2734 = vmatprep.mubr.bf16.mxu0 0
  %2735 = vmatmul.mubr.bf16.gmra.mrb[0].mxu0 %v1123
  %v2736 = vpop.f32.mrb[0].mxu0
  %v2737 = vadd.f32 0.0, %v2736
  %v2738 = vpop.f32.mrb[0].mxu0
  %v2739 = vpop.f32.mrb[0].mxu0
  %v2740 = vadd.f32 0.0, %v2739
  %v2741 = vpop.f32.mrb[0].mxu0
  %2742 = vmatprep.mubr.bf16.mxu0 0
  %2743 = vmatmul.mubr.bf16.gmra.mrb[0].mxu0 %v1126
  %v2744 = vpop.f32.mrb[0].mxu0
  %v2745 = vadd.f32 0.0, %v2744
  %v2746 = vpop.f32.mrb[0].mxu0
  %v2747 = vpop.f32.mrb[0].mxu0
  %v2748 = vadd.f32 0.0, %v2747
  %v2749 = vpop.f32.mrb[0].mxu0
  %2750 = vmatprep.mubr.bf16.mxu0 0
  %2751 = vmatmul.mubr.bf16.gmra.mrb[0].mxu0 %v1129
  %v2752 = vpop.f32.mrb[0].mxu0
  %v2753 = vadd.f32 0.0, %v2752
  %v2754 = vpop.f32.mrb[0].mxu0
  %v2755 = vpop.f32.mrb[0].mxu0
  %v2756 = vadd.f32 0.0, %v2755
  %v2757 = vpop.f32.mrb[0].mxu0
  %2758 = vmatprep.mubr.bf16.mxu0 0
  %2759 = vmatmul.mubr.bf16.gmra.mrb[0].mxu0 %v1132
  %v2760 = vpop.f32.mrb[0].mxu0
  %v2761 = vadd.f32 0.0, %v2760
  %v2762 = vpop.f32.mrb[0].mxu0
  %v2763 = vpop.f32.mrb[0].mxu0
  %v2764 = vadd.f32 0.0, %v2763
  %v2765 = vpop.f32.mrb[0].mxu0
  %2766 = vmatprep.mubr.bf16.mxu0 0
  %2767 = vmatmul.mubr.bf16.gmra.mrb[0].mxu0 %v1135
  %v2768 = vpop.f32.mrb[0].mxu0
  %v2769 = vadd.f32 0.0, %v2768
  %v2770 = vpop.f32.mrb[0].mxu0
  %v2771 = vpop.f32.mrb[0].mxu0
  %v2772 = vadd.f32 0.0, %v2771
  %v2773 = vpop.f32.mrb[0].mxu0
  %2774 = vmatprep.mubr.bf16.mxu0 0
  %2775 = vmatmul.mubr.bf16.gmra.mrb[0].mxu0 %v1138
  %v2776 = vpop.f32.mrb[0].mxu0
  %v2777 = vadd.f32 0.0, %v2776
  %v2778 = vpop.f32.mrb[0].mxu0
  %v2779 = vpop.f32.mrb[0].mxu0
  %v2780 = vadd.f32 0.0, %v2779
  %v2781 = vpop.f32.mrb[0].mxu0
  %2782 = vdwg.mxu0
  %v2784 = vsel %vm1299, %v778, 0
  %2786 = vmatprep.subr.mxu0 0.0
  %2787 = vmatpush1.msra.mxu0 %v2784
  %2788 = vmatprep.subr.mxu0 0.0
  %2789 = vmatpush1.msra.mxu0 0.0
  %2790 = vmatprep.subr.mxu0 0.0
  %2791 = vmatpush1.msra.mxu0 0.0
  %2792 = vmatprep.subr.mxu0 0.0
  %2793 = vmatpush1.msra.mxu0 0.0
  %2794 = vmatprep.subr.mxu0 0.0
  %2795 = vmatpush1.msra.mxu0 0.0
  %2796 = vmatprep.subr.mxu0 0.0
  %2797 = vmatpush1.msra.mxu0 0.0
  %2798 = vmatprep.subr.mxu0 0.0
  %2799 = vmatpush1.msra.mxu0 0.0
  %2800 = vmatprep.subr.mxu0 0.0
  %2801 = vmatpush1.msra.mxu0 0.0
  %2802 = vmatprep.subr.mxu0 0.0
  %2803 = vmatpush1.msra.mxu0 0.0
  %2804 = vmatprep.subr.mxu0 0.0
  %2805 = vmatpush1.msra.mxu0 0.0
  %2806 = vmatprep.subr.mxu0 0.0
  %2807 = vmatpush1.msra.mxu0 0.0
  %2808 = vmatprep.subr.mxu0 0.0
  %2809 = vmatpush1.msra.mxu0 0.0
  %2810 = vmatprep.subr.mxu0 0.0
  %2811 = vmatpush1.msra.mxu0 0.0
  %2812 = vmatprep.subr.mxu0 0.0
  %2813 = vmatpush1.msra.mxu0 0.0
  %2814 = vmatprep.subr.mxu0 0.0
  %2815 = vmatpush1.msra.mxu0 0.0
  %2816 = vmatprep.subr.mxu0 0.0
  %2817 = vmatpush1.msra.mxu0 0.0
  %2818 = vmatprep.subr.mxu0 0.0
  %2819 = vmatpush1.msra.mxu0 0.0
  %2820 = vmatprep.subr.mxu0 0.0
  %2821 = vmatpush1.msra.mxu0 0.0
  %2822 = vmatprep.subr.mxu0 0.0
  %2823 = vmatpush1.msra.mxu0 0.0
  %2824 = vmatprep.subr.mxu0 0.0
  %2825 = vmatpush1.msra.mxu0 0.0
  %2826 = vmatprep.subr.mxu0 0.0
  %2827 = vmatpush1.msra.mxu0 0.0
  %2828 = vmatprep.subr.mxu0 0.0
  %2829 = vmatpush1.msra.mxu0 0.0
  %2830 = vmatprep.subr.mxu0 0.0
  %2831 = vmatpush1.msra.mxu0 0.0
  %2832 = vmatprep.subr.mxu0 0.0
  %2833 = vmatpush1.msra.mxu0 0.0
  %2834 = vmatprep.subr.mxu0 0.0
  %2835 = vmatpush1.msra.mxu0 0.0
  %2836 = vmatprep.subr.mxu0 0.0
  %2837 = vmatpush1.msra.mxu0 0.0
  %2838 = vmatprep.subr.mxu0 0.0
  %2839 = vmatpush1.msra.mxu0 0.0
  %2840 = vmatprep.subr.mxu0 0.0
  %2841 = vmatpush1.msra.mxu0 0.0
  %2842 = vmatprep.subr.mxu0 0.0
  %2843 = vmatpush1.msra.mxu0 0.0
  %2844 = vmatprep.subr.mxu0 0.0
  %2845 = vmatpush1.msra.mxu0 0.0
  %2846 = vmatprep.subr.mxu0 0.0
  %2847 = vmatpush1.msra.mxu0 0.0
  %2848 = vmatprep.subr.mxu0 0.0
  %2849 = vmatpush1.msra.mxu0 0.0
  %2850 = vmatprep.mubr.f32.mxu0 0.0
  %2851 = vmatmul.mubr.f32.gmra.mrb[0].mxu0 %v1246
  %v2852 = vpop.f32.mrb[0].mxu0
  %v2853 = vadd.f32 0.0, %v2852
  %v2854 = vpop.f32.mrb[0].mxu0
  %2855 = vmatprep.mubr.f32.mxu0 0.0
  %2856 = vmatmul.mubr.f32.gmra.mrb[0].mxu0 %v1249
  %v2857 = vpop.f32.mrb[0].mxu0
  %v2858 = vadd.f32 0.0, %v2857
  %v2859 = vpop.f32.mrb[0].mxu0
  %2860 = vmatprep.mubr.f32.mxu0 0.0
  %2861 = vmatmul.mubr.f32.gmra.mrb[0].mxu0 %v1252
  %v2862 = vpop.f32.mrb[0].mxu0
  %v2863 = vadd.f32 0.0, %v2862
  %v2864 = vpop.f32.mrb[0].mxu0
  %2865 = vmatprep.mubr.f32.mxu0 0.0
  %2866 = vmatmul.mubr.f32.gmra.mrb[0].mxu0 %v1255
  %v2867 = vpop.f32.mrb[0].mxu0
  %v2868 = vadd.f32 0.0, %v2867
  %v2869 = vpop.f32.mrb[0].mxu0
  %2870 = vmatprep.mubr.f32.mxu0 0.0
  %2871 = vmatmul.mubr.f32.gmra.mrb[0].mxu0 %v1258
  %v2872 = vpop.f32.mrb[0].mxu0
  %v2873 = vadd.f32 0.0, %v2872
  %v2874 = vpop.f32.mrb[0].mxu0
  %2875 = vmatprep.mubr.f32.mxu0 0.0
  %2876 = vmatmul.mubr.f32.gmra.mrb[0].mxu0 %v1261
  %v2877 = vpop.f32.mrb[0].mxu0
  %v2878 = vadd.f32 0.0, %v2877
  %v2879 = vpop.f32.mrb[0].mxu0
  %2880 = vmatprep.mubr.f32.mxu0 0.0
  %2881 = vmatmul.mubr.f32.gmra.mrb[0].mxu0 %v1264
  %v2882 = vpop.f32.mrb[0].mxu0
  %v2883 = vadd.f32 0.0, %v2882
  %v2884 = vpop.f32.mrb[0].mxu0
  %2885 = vmatprep.mubr.f32.mxu0 0.0
  %2886 = vmatmul.mubr.f32.gmra.mrb[0].mxu0 %v1267
  %v2887 = vpop.f32.mrb[0].mxu0
  %v2888 = vadd.f32 0.0, %v2887
  %v2889 = vpop.f32.mrb[0].mxu0
  %2890 = vmatprep.mubr.f32.mxu0 0.0
  %2891 = vmatmul.mubr.f32.gmra.mrb[0].mxu0 %v1270
  %v2892 = vpop.f32.mrb[0].mxu0
  %v2893 = vadd.f32 0.0, %v2892
  %v2894 = vpop.f32.mrb[0].mxu0
  %2895 = vmatprep.mubr.f32.mxu0 0.0
  %2896 = vmatmul.mubr.f32.gmra.mrb[0].mxu0 %v1273
  %v2897 = vpop.f32.mrb[0].mxu0
  %v2898 = vadd.f32 0.0, %v2897
  %v2899 = vpop.f32.mrb[0].mxu0
  %2900 = vmatprep.mubr.f32.mxu0 0.0
  %2901 = vmatmul.mubr.f32.gmra.mrb[0].mxu0 %v1276
  %v2902 = vpop.f32.mrb[0].mxu0
  %v2903 = vadd.f32 0.0, %v2902
  %v2904 = vpop.f32.mrb[0].mxu0
  %2905 = vmatprep.mubr.f32.mxu0 0.0
  %2906 = vmatmul.mubr.f32.gmra.mrb[0].mxu0 %v1279
  %v2907 = vpop.f32.mrb[0].mxu0
  %v2908 = vadd.f32 0.0, %v2907
  %v2909 = vpop.f32.mrb[0].mxu0
  %2910 = vmatprep.mubr.f32.mxu0 0.0
  %2911 = vmatmul.mubr.f32.gmra.mrb[0].mxu0 %v1282
  %v2912 = vpop.f32.mrb[0].mxu0
  %v2913 = vadd.f32 0.0, %v2912
  %v2914 = vpop.f32.mrb[0].mxu0
  %2915 = vmatprep.mubr.f32.mxu0 0.0
  %2916 = vmatmul.mubr.f32.gmra.mrb[0].mxu0 %v1285
  %v2917 = vpop.f32.mrb[0].mxu0
  %v2918 = vadd.f32 0.0, %v2917
  %v2919 = vpop.f32.mrb[0].mxu0
  %2920 = vmatprep.mubr.f32.mxu0 0.0
  %2921 = vmatmul.mubr.f32.gmra.mrb[0].mxu0 %v1288
  %v2922 = vpop.f32.mrb[0].mxu0
  %v2923 = vadd.f32 0.0, %v2922
  %v2924 = vpop.f32.mrb[0].mxu0
  %2925 = vmatprep.mubr.f32.mxu0 0.0
  %2926 = vmatmul.mubr.f32.gmra.mrb[0].mxu0 %v1291
  %v2927 = vpop.f32.mrb[0].mxu0
  %v2928 = vadd.f32 0.0, %v2927
  %v2929 = vpop.f32.mrb[0].mxu0
  %2930 = vmatprep.mubr.f32.mxu0 0.0
  %2931 = vmatmul.mubr.f32.gmra.mrb[0].mxu0 %v1294
  %v2932 = vpop.f32.mrb[0].mxu0
  %v2933 = vadd.f32 0.0, %v2932
  %v2934 = vpop.f32.mrb[0].mxu0
  %2935 = vmatprep.mubr.f32.mxu0 0.0
  %2936 = vmatmul.mubr.f32.gmra.mrb[0].mxu0 %v1297
  %v2937 = vpop.f32.mrb[0].mxu0
  %v2938 = vadd.f32 0.0, %v2937
  %v2939 = vpop.f32.mrb[0].mxu0
  %2940 = vdwg.mxu0
  %v2941 = vadd.f32 %v2607, %v2713
  %v2942 = vadd.f32 %v2610, %v2716
  %v2943 = vadd.f32 %v2615, %v2721
  %v2944 = vadd.f32 %v2618, %v2724
  %v2945 = vadd.f32 %v2623, %v2729
  %v2946 = vadd.f32 %v2626, %v2732
  %v2947 = vadd.f32 %v2631, %v2737
  %v2948 = vadd.f32 %v2634, %v2740
  %v2949 = vadd.f32 %v2639, %v2745
  %v2950 = vadd.f32 %v2642, %v2748
  %v2951 = vadd.f32 %v2647, %v2753
  %v2952 = vadd.f32 %v2650, %v2756
  %v2953 = vadd.f32 %v2655, %v2761
  %v2954 = vadd.f32 %v2658, %v2764
  %v2955 = vadd.f32 %v2663, %v2769
  %v2956 = vadd.f32 %v2666, %v2772
  %v2957 = vadd.f32 %v2671, %v2777
  %v2958 = vadd.f32 %v2674, %v2780
  %v2959 = vadd.f32 %v2941, %v2853
  %v2960 = vadd.f32 %v2942, %v2858
  %v2961 = vadd.f32 %v2943, %v2863
  %v2962 = vadd.f32 %v2944, %v2868
  %v2963 = vadd.f32 %v2945, %v2873
  %v2964 = vadd.f32 %v2946, %v2878
  %v2965 = vadd.f32 %v2947, %v2883
  %v2966 = vadd.f32 %v2948, %v2888
  %v2967 = vadd.f32 %v2949, %v2893
  %v2968 = vadd.f32 %v2950, %v2898
  %v2969 = vadd.f32 %v2951, %v2903
  %v2970 = vadd.f32 %v2952, %v2908
  %v2971 = vadd.f32 %v2953, %v2913
  %v2972 = vadd.f32 %v2954, %v2918
  %v2973 = vadd.f32 %v2955, %v2923
  %v2974 = vadd.f32 %v2956, %v2928
  %v2975 = vadd.f32 %v2957, %v2933
  %v2976 = vadd.f32 %v2958, %v2938
  %vm2977 = vcmp.gt.f32.partialorder %v2959, 0.0
  %vm2978 = vcmp.gt.f32.partialorder %v2960, 0.0
  %vm2979 = vcmp.gt.f32.partialorder %v2961, 0.0
  %vm2980 = vcmp.gt.f32.partialorder %v2962, 0.0
  %vm2981 = vcmp.gt.f32.partialorder %v2963, 0.0
  %vm2982 = vcmp.gt.f32.partialorder %v2964, 0.0
  %vm2983 = vcmp.gt.f32.partialorder %v2965, 0.0
  %vm2984 = vcmp.gt.f32.partialorder %v2966, 0.0
  %vm2985 = vcmp.gt.f32.partialorder %v2967, 0.0
  %vm2986 = vcmp.gt.f32.partialorder %v2968, 0.0
  %vm2987 = vcmp.gt.f32.partialorder %v2969, 0.0
  %vm2988 = vcmp.gt.f32.partialorder %v2970, 0.0
  %vm2989 = vcmp.gt.f32.partialorder %v2971, 0.0
  %vm2990 = vcmp.gt.f32.partialorder %v2972, 0.0
  %vm2991 = vcmp.gt.f32.partialorder %v2973, 0.0
  %vm2992 = vcmp.gt.f32.partialorder %v2974, 0.0
  %vm2993 = vcmp.gt.f32.partialorder %v2975, 0.0
  %vm2994 = vcmp.gt.f32.partialorder %v2976, 0.0
  %v2995 = vmul.f32 %v2959, 0.2
  %v2996 = vmul.f32 %v2960, 0.2
  %v2997 = vmul.f32 %v2961, 0.2
  %v2998 = vmul.f32 %v2962, 0.2
  %v2999 = vmul.f32 %v2963, 0.2
  %v3000 = vmul.f32 %v2964, 0.2
  %v3001 = vmul.f32 %v2965, 0.2
  %v3002 = vmul.f32 %v2966, 0.2
  %v3003 = vmul.f32 %v2967, 0.2
  %v3004 = vmul.f32 %v2968, 0.2
  %v3005 = vmul.f32 %v2969, 0.2
  %v3006 = vmul.f32 %v2970, 0.2
  %v3007 = vmul.f32 %v2971, 0.2
  %v3008 = vmul.f32 %v2972, 0.2
  %v3009 = vmul.f32 %v2973, 0.2
  %v3010 = vmul.f32 %v2974, 0.2
  %v3011 = vmul.f32 %v2975, 0.2
  %v3012 = vmul.f32 %v2976, 0.2
  %v3013 = vsel %vm2977, %v2959, %v2995
  %v3014 = vsel %vm2978, %v2960, %v2996
  %v3015 = vsel %vm2979, %v2961, %v2997
  %v3016 = vsel %vm2980, %v2962, %v2998
  %v3017 = vsel %vm2981, %v2963, %v2999
  %v3018 = vsel %vm2982, %v2964, %v3000
  %v3019 = vsel %vm2983, %v2965, %v3001
  %v3020 = vsel %vm2984, %v2966, %v3002
  %v3021 = vsel %vm2985, %v2967, %v3003
  %v3022 = vsel %vm2986, %v2968, %v3004
  %v3023 = vsel %vm2987, %v2969, %v3005
  %v3024 = vsel %vm2988, %v2970, %v3006
  %v3025 = vsel %vm2989, %v2971, %v3007
  %v3026 = vsel %vm2990, %v2972, %v3008
  %v3027 = vsel %vm2991, %v2973, %v3009
  %v3028 = vsel %vm2992, %v2974, %v3010
  %v3029 = vsel %vm2993, %v2975, %v3011
  %v3030 = vsel %vm2994, %v2976, %v3012
  %v3031 = vlaneseq
  %v3032 = vshrl.u32 %v3031, 7
  %v3033 = vsub.s32 0, %v3032
  %v3034 = vrot.slane %v786, %v3033
  %v3035 = vmul.f32 %v3013, %v3034
  %v3036 = vmul.f32 %v3014, %v3034
  %v3037 = vmul.f32 %v3015, %v3034
  %v3038 = vmul.f32 %v3016, %v3034
  %v3039 = vmul.f32 %v3017, %v3034
  %v3040 = vmul.f32 %v3018, %v3034
  %v3041 = vmul.f32 %v3019, %v3034
  %v3042 = vmul.f32 %v3020, %v3034
  %v3043 = vmul.f32 %v3021, %v3034
  %v3044 = vmul.f32 %v3022, %v3034
  %v3045 = vmul.f32 %v3023, %v3034
  %v3046 = vmul.f32 %v3024, %v3034
  %v3047 = vmul.f32 %v3025, %v3034
  %v3048 = vmul.f32 %v3026, %v3034
  %v3049 = vmul.f32 %v3027, %v3034
  %v3050 = vmul.f32 %v3028, %v3034
  %v3051 = vmul.f32 %v3029, %v3034
  %v3052 = vmul.f32 %v3030, %v3034
  %3053 = vadd.xlane.f32.xlu0 %v3035
  %v3054 = vpop.xlane.xlu0 %3053
  %3055 = vadd.xlane.f32.xlu0 %v3036
  %v3056 = vpop.xlane.xlu0 %3055
  %3057 = vadd.xlane.f32.xlu0 %v3037
  %v3058 = vpop.xlane.xlu0 %3057
  %3059 = vadd.xlane.f32.xlu0 %v3038
  %v3060 = vpop.xlane.xlu0 %3059
  %3061 = vadd.xlane.f32.xlu0 %v3039
  %v3062 = vpop.xlane.xlu0 %3061
  %3063 = vadd.xlane.f32.xlu0 %v3040
  %v3064 = vpop.xlane.xlu0 %3063
  %3065 = vadd.xlane.f32.xlu0 %v3041
  %v3066 = vpop.xlane.xlu0 %3065
  %3067 = vadd.xlane.f32.xlu0 %v3042
  %v3068 = vpop.xlane.xlu0 %3067
  %3069 = vadd.xlane.f32.xlu0 %v3043
  %v3070 = vpop.xlane.xlu0 %3069
  %3071 = vadd.xlane.f32.xlu0 %v3044
  %v3072 = vpop.xlane.xlu0 %3071
  %3073 = vadd.xlane.f32.xlu0 %v3045
  %v3074 = vpop.xlane.xlu0 %3073
  %3075 = vadd.xlane.f32.xlu0 %v3046
  %v3076 = vpop.xlane.xlu0 %3075
  %3077 = vadd.xlane.f32.xlu0 %v3047
  %v3078 = vpop.xlane.xlu0 %3077
  %3079 = vadd.xlane.f32.xlu0 %v3048
  %v3080 = vpop.xlane.xlu0 %3079
  %3081 = vadd.xlane.f32.xlu0 %v3049
  %v3082 = vpop.xlane.xlu0 %3081
  %3083 = vadd.xlane.f32.xlu0 %v3050
  %v3084 = vpop.xlane.xlu0 %3083
  %3085 = vadd.xlane.f32.xlu0 %v3051
  %v3086 = vpop.xlane.xlu0 %3085
  %3087 = vadd.xlane.f32.xlu0 %v3052
  %v3088 = vpop.xlane.xlu0 %3087
  %v3089 = vsel %vm1606, %v3054, -1e+30
  %v3090 = vsel %vm1607, %v3056, -1e+30
  %v3091 = vsel %vm1608, %v3058, -1e+30
  %v3092 = vsel %vm1609, %v3060, -1e+30
  %v3093 = vsel %vm1610, %v3062, -1e+30
  %v3094 = vsel %vm1611, %v3064, -1e+30
  %v3095 = vsel %vm1612, %v3066, -1e+30
  %v3096 = vsel %vm1613, %v3068, -1e+30
  %v3097 = vsel %vm1614, %v3070, -1e+30
  %v3098 = vsel %vm1615, %v3072, -1e+30
  %v3099 = vsel %vm1616, %v3074, -1e+30
  %v3100 = vsel %vm1617, %v3076, -1e+30
  %v3101 = vsel %vm1618, %v3078, -1e+30
  %v3102 = vsel %vm1619, %v3080, -1e+30
  %v3103 = vsel %vm1620, %v3082, -1e+30
  %v3104 = vsel %vm1621, %v3084, -1e+30
  %v3105 = vsel %vm1622, %v3086, -1e+30
  %v3106 = vsel %vm1623, %v3088, -1e+30
  %v3107 = vsel %vm979, %v3089, -inf
  %v3108 = vsel %vm979, %v3090, -inf
  %v3109 = vsel %vm979, %v3091, -inf
  %v3110 = vsel %vm979, %v3092, -inf
  %v3111 = vsel %vm979, %v3093, -inf
  %v3112 = vmax.f32 %v3107, %v3111
  %v3113 = vsel %vm979, %v3094, -inf
  %v3114 = vmax.f32 %v3108, %v3113
  %v3115 = vsel %vm979, %v3095, -inf
  %v3116 = vmax.f32 %v3109, %v3115
  %v3117 = vsel %vm979, %v3096, -inf
  %v3118 = vmax.f32 %v3110, %v3117
  %v3119 = vsel %vm979, %v3097, -inf
  %v3120 = vmax.f32 %v3112, %v3119
  %v3121 = vsel %vm979, %v3098, -inf
  %v3122 = vmax.f32 %v3114, %v3121
  %v3123 = vsel %vm979, %v3099, -inf
  %v3124 = vmax.f32 %v3116, %v3123
  %v3125 = vsel %vm979, %v3100, -inf
  %v3126 = vmax.f32 %v3118, %v3125
  %v3127 = vsel %vm979, %v3101, -inf
  %v3128 = vmax.f32 %v3120, %v3127
  %v3129 = vsel %vm979, %v3102, -inf
  %v3130 = vmax.f32 %v3122, %v3129
  %v3131 = vsel %vm979, %v3103, -inf
  %v3132 = vmax.f32 %v3124, %v3131
  %v3133 = vsel %vm979, %v3104, -inf
  %v3134 = vmax.f32 %v3126, %v3133
  %v3135 = vsel %vm979, %v3105, -inf
  %v3136 = vmax.f32 %v3128, %v3135
  %v3137 = vsel %vm979, %v3106, -inf
  %v3138 = vmax.f32 %v3130, %v3137
  %v3139 = vmax.f32 %v3136, %v3138
  %v3140 = vmax.f32 %v3132, %v3134
  %v3141 = vmax.f32 %v3139, %v3140
  %v3142 = vrot.slane %v3141, 4
  %v3143 = vmax.f32 %v3141, %v3142
  %v3144 = vrot.slane %v3143, 2
  %v3145 = vmax.f32 %v3143, %v3144
  %v3146 = vrot.slane %v3145, 1
  %v3147 = vmax.f32 %v3145, %v3146
  %v3148 = vmul.f32 %v209, %v3147
  %v3149 = vmul.f32 %v210, %v3147
  %v3150 = vmul.f32 %v211, %v3147
  %v3151 = vmul.f32 %v212, %v3147
  %v3152 = vmul.f32 %v213, %v3147
  %v3153 = vmul.f32 %v214, %v3147
  %v3154 = vmul.f32 %v215, %v3147
  %v3155 = vmul.f32 %v216, %v3147
  %v3156 = vmul.f32 %v217, %v3147
  %v3157 = vmul.f32 %v218, %v3147
  %v3158 = vmul.f32 %v219, %v3147
  %v3159 = vmul.f32 %v220, %v3147
  %v3160 = vmul.f32 %v221, %v3147
  %v3161 = vmul.f32 %v222, %v3147
  %v3162 = vmul.f32 %v223, %v3147
  %v3163 = vmul.f32 %v224, %v3147
  %v3164 = vmul.f32 %v225, %v3147
  %v3165 = vmul.f32 %v226, %v3147
  %v3166 = vsel %vm979, %v3148, 0.0
  %3167 = vadd.xlane.f32.xlu0 %v3166
  %v3168 = vpop.xlane.xlu0 %3167
  %v3169 = vsel %vm979, %v3149, 0.0
  %3170 = vadd.xlane.f32.xlu0 %v3169
  %v3171 = vpop.xlane.xlu0 %3170
  %v3172 = vsel %vm979, %v3150, 0.0
  %3173 = vadd.xlane.f32.xlu0 %v3172
  %v3174 = vpop.xlane.xlu0 %3173
  %v3175 = vsel %vm979, %v3151, 0.0
  %3176 = vadd.xlane.f32.xlu0 %v3175
  %v3177 = vpop.xlane.xlu0 %3176
  %v3178 = vsel %vm979, %v3152, 0.0
  %3179 = vadd.xlane.f32.xlu0 %v3178
  %v3180 = vpop.xlane.xlu0 %3179
  %v3181 = vsel %vm979, %v3153, 0.0
  %3182 = vadd.xlane.f32.xlu0 %v3181
  %v3183 = vpop.xlane.xlu0 %3182
  %v3184 = vsel %vm979, %v3154, 0.0
  %3185 = vadd.xlane.f32.xlu0 %v3184
  %v3186 = vpop.xlane.xlu0 %3185
  %v3187 = vsel %vm979, %v3155, 0.0
  %3188 = vadd.xlane.f32.xlu0 %v3187
  %v3189 = vpop.xlane.xlu0 %3188
  %v3190 = vsel %vm979, %v3156, 0.0
  %3191 = vadd.xlane.f32.xlu0 %v3190
  %v3192 = vpop.xlane.xlu0 %3191
  %v3193 = vsel %vm979, %v3157, 0.0
  %3194 = vadd.xlane.f32.xlu0 %v3193
  %v3195 = vpop.xlane.xlu0 %3194
  %v3196 = vsel %vm979, %v3158, 0.0
  %3197 = vadd.xlane.f32.xlu0 %v3196
  %v3198 = vpop.xlane.xlu0 %3197
  %v3199 = vsel %vm979, %v3159, 0.0
  %3200 = vadd.xlane.f32.xlu0 %v3199
  %v3201 = vpop.xlane.xlu0 %3200
  %v3202 = vsel %vm979, %v3160, 0.0
  %3203 = vadd.xlane.f32.xlu0 %v3202
  %v3204 = vpop.xlane.xlu0 %3203
  %v3205 = vsel %vm979, %v3161, 0.0
  %3206 = vadd.xlane.f32.xlu0 %v3205
  %v3207 = vpop.xlane.xlu0 %3206
  %v3208 = vsel %vm979, %v3162, 0.0
  %3209 = vadd.xlane.f32.xlu0 %v3208
  %v3210 = vpop.xlane.xlu0 %3209
  %v3211 = vsel %vm979, %v3163, 0.0
  %3212 = vadd.xlane.f32.xlu0 %v3211
  %v3213 = vpop.xlane.xlu0 %3212
  %v3214 = vsel %vm979, %v3164, 0.0
  %3215 = vadd.xlane.f32.xlu0 %v3214
  %v3216 = vpop.xlane.xlu0 %3215
  %v3217 = vsel %vm979, %v3165, 0.0
  %3218 = vadd.xlane.f32.xlu0 %v3217
  %v3219 = vpop.xlane.xlu0 %3218
  %v3220 = vsub.f32 %v3054, %v3168
  %v3221 = vsub.f32 %v3056, %v3171
  %v3222 = vsub.f32 %v3058, %v3174
  %v3223 = vsub.f32 %v3060, %v3177
  %v3224 = vsub.f32 %v3062, %v3180
  %v3225 = vsub.f32 %v3064, %v3183
  %v3226 = vsub.f32 %v3066, %v3186
  %v3227 = vsub.f32 %v3068, %v3189
  %v3228 = vsub.f32 %v3070, %v3192
  %v3229 = vsub.f32 %v3072, %v3195
  %v3230 = vsub.f32 %v3074, %v3198
  %v3231 = vsub.f32 %v3076, %v3201
  %v3232 = vsub.f32 %v3078, %v3204
  %v3233 = vsub.f32 %v3080, %v3207
  %v3234 = vsub.f32 %v3082, %v3210
  %v3235 = vsub.f32 %v3084, %v3213
  %v3236 = vsub.f32 %v3086, %v3216
  %v3237 = vsub.f32 %v3088, %v3219
  %v3238 = vmul.f32 %v3220, 1.442695
  %v3239 = vpow.pop %v3238
  %v3240 = vmul.f32 %v3221, 1.442695
  %v3241 = vpow.pop %v3240
  %v3242 = vmul.f32 %v3222, 1.442695
  %v3243 = vpow.pop %v3242
  %v3244 = vmul.f32 %v3223, 1.442695
  %v3245 = vpow.pop %v3244
  %v3246 = vmul.f32 %v3224, 1.442695
  %v3247 = vpow.pop %v3246
  %v3248 = vmul.f32 %v3225, 1.442695
  %v3249 = vpow.pop %v3248
  %v3250 = vmul.f32 %v3226, 1.442695
  %v3251 = vpow.pop %v3250
  %v3252 = vmul.f32 %v3227, 1.442695
  %v3253 = vpow.pop %v3252
  %v3254 = vmul.f32 %v3228, 1.442695
  %v3255 = vpow.pop %v3254
  %v3256 = vmul.f32 %v3229, 1.442695
  %v3257 = vpow.pop %v3256
  %v3258 = vmul.f32 %v3230, 1.442695
  %v3259 = vpow.pop %v3258
  %v3260 = vmul.f32 %v3231, 1.442695
  %v3261 = vpow.pop %v3260
  %v3262 = vmul.f32 %v3232, 1.442695
  %v3263 = vpow.pop %v3262
  %v3264 = vmul.f32 %v3233, 1.442695
  %v3265 = vpow.pop %v3264
  %v3266 = vmul.f32 %v3234, 1.442695
  %v3267 = vpow.pop %v3266
  %v3268 = vmul.f32 %v3235, 1.442695
  %v3269 = vpow.pop %v3268
  %v3270 = vmul.f32 %v3236, 1.442695
  %v3271 = vpow.pop %v3270
  %v3272 = vmul.f32 %v3237, 1.442695
  %v3273 = vpow.pop %v3272
  %3274 = vmatprep.subr.mxu0 0.0
  %3275 = vmatpush1.msra.mxu0 %v3239
  %3276 = vmatprep.subr.mxu0 0.0
  %3277 = vmatpush1.msra.mxu0 %v3241
  %3278 = vmatprep.subr.mxu0 0.0
  %3279 = vmatpush1.msra.mxu0 %v3243
  %3280 = vmatprep.subr.mxu0 0.0
  %3281 = vmatpush1.msra.mxu0 %v3245
  %3282 = vmatprep.subr.mxu0 0.0
  %3283 = vmatpush1.msra.mxu0 %v3247
  %3284 = vmatprep.subr.mxu0 0.0
  %3285 = vmatpush1.msra.mxu0 %v3249
  %3286 = vmatprep.subr.mxu0 0.0
  %3287 = vmatpush1.msra.mxu0 %v3251
  %3288 = vmatprep.subr.mxu0 0.0
  %3289 = vmatpush1.msra.mxu0 %v3253
  %3290 = vmatprep.subr.mxu0 0.0
  %3291 = vmatpush1.msra.mxu0 %v3255
  %3292 = vmatprep.subr.mxu0 0.0
  %3293 = vmatpush1.msra.mxu0 %v3257
  %3294 = vmatprep.subr.mxu0 0.0
  %3295 = vmatpush1.msra.mxu0 %v3259
  %3296 = vmatprep.subr.mxu0 0.0
  %3297 = vmatpush1.msra.mxu0 %v3261
  %3298 = vmatprep.subr.mxu0 0.0
  %3299 = vmatpush1.msra.mxu0 %v3263
  %3300 = vmatprep.subr.mxu0 0.0
  %3301 = vmatpush1.msra.mxu0 %v3265
  %3302 = vmatprep.subr.mxu0 0.0
  %3303 = vmatpush1.msra.mxu0 %v3267
  %3304 = vmatprep.subr.mxu0 0.0
  %3305 = vmatpush1.msra.mxu0 %v3269
  %3306 = vmatprep.subr.mxu0 0.0
  %3307 = vmatpush1.msra.mxu0 %v3271
  %3308 = vmatprep.subr.mxu0 0.0
  %3309 = vmatpush1.msra.mxu0 %v3273
  %3310 = vmatprep.subr.mxu0 0.0
  %3311 = vmatpush1.msra.mxu0 0.0
  %3312 = vmatprep.subr.mxu0 0.0
  %3313 = vmatpush1.msra.mxu0 0.0
  %3314 = vmatprep.subr.mxu0 0.0
  %3315 = vmatpush1.msra.mxu0 0.0
  %3316 = vmatprep.subr.mxu0 0.0
  %3317 = vmatpush1.msra.mxu0 0.0
  %3318 = vmatprep.subr.mxu0 0.0
  %3319 = vmatpush1.msra.mxu0 0.0
  %3320 = vmatprep.subr.mxu0 0.0
  %3321 = vmatpush1.msra.mxu0 0.0
  %3322 = vmatprep.subr.mxu0 0.0
  %3323 = vmatpush1.msra.mxu0 0.0
  %3324 = vmatprep.subr.mxu0 0.0
  %3325 = vmatpush1.msra.mxu0 0.0
  %3326 = vmatprep.subr.mxu0 0.0
  %3327 = vmatpush1.msra.mxu0 0.0
  %3328 = vmatprep.subr.mxu0 0.0
  %3329 = vmatpush1.msra.mxu0 0.0
  %3330 = vmatprep.subr.mxu0 0.0
  %3331 = vmatpush1.msra.mxu0 0.0
  %3332 = vmatprep.subr.mxu0 0.0
  %3333 = vmatpush1.msra.mxu0 0.0
  %3334 = vmatprep.subr.mxu0 0.0
  %3335 = vmatpush1.msra.mxu0 0.0
  %3336 = vmatprep.subr.mxu0 0.0
  %3337 = vmatpush1.msra.mxu0 0.0
  %3338 = vmatprep.mubr.f32.mxu0 %v1842
  %3339 = vmatmul.mubr.f32.gmra.mrb[0].mxu0 %v462
  %v3340 = vpop.f32.mrb[0].mxu0
  %v3341 = vadd.f32 0.0, %v3340
  %v3342 = vpop.f32.mrb[0].mxu0
  %3343 = vmatprep.mubr.f32.mxu0 %v1845
  %3344 = vmatmul.mubr.f32.gmra.mrb[0].mxu0 %v463
  %v3345 = vpop.f32.mrb[0].mxu0
  %v3346 = vadd.f32 0.0, %v3345
  %v3347 = vpop.f32.mrb[0].mxu0
  %3348 = vdwg.mxu0
  %3349 = vmatprep.subr.mxu0 0.0
  %3350 = vmatpush1.msra.mxu0 %v3341
  %3351 = vmatprep.subr.mxu0 0.0
  %3352 = vmatpush1.msra.mxu0 %v3346
  %3353 = vmatprep.subr.mxu0 0.0
  %3354 = vmatpush1.msra.mxu0 0.0
  %3355 = vmatprep.subr.mxu0 0.0
  %3356 = vmatpush1.msra.mxu0 0.0
  %3357 = vmatprep.subr.mxu0 0.0
  %3358 = vmatpush1.msra.mxu0 0.0
  %3359 = vmatprep.subr.mxu0 0.0
  %3360 = vmatpush1.msra.mxu0 0.0
  %3361 = vmatprep.subr.mxu0 0.0
  %3362 = vmatpush1.msra.mxu0 0.0
  %3363 = vmatprep.subr.mxu0 0.0
  %3364 = vmatpush1.msra.mxu0 0.0
  %3365 = vmatprep.subr.mxu0 0.0
  %3366 = vmatpush1.msra.mxu0 0.0
  %3367 = vmatprep.subr.mxu0 0.0
  %3368 = vmatpush1.msra.mxu0 0.0
  %3369 = vmatprep.subr.mxu0 0.0
  %3370 = vmatpush1.msra.mxu0 0.0
  %3371 = vmatprep.subr.mxu0 0.0
  %3372 = vmatpush1.msra.mxu0 0.0
  %3373 = vmatprep.subr.mxu0 0.0
  %3374 = vmatpush1.msra.mxu0 0.0
  %3375 = vmatprep.subr.mxu0 0.0
  %3376 = vmatpush1.msra.mxu0 0.0
  %3377 = vmatprep.subr.mxu0 0.0
  %3378 = vmatpush1.msra.mxu0 0.0
  %3379 = vmatprep.subr.mxu0 0.0
  %3380 = vmatpush1.msra.mxu0 0.0
  %3381 = vmatprep.subr.mxu0 0.0
  %3382 = vmatpush1.msra.mxu0 0.0
  %3383 = vmatprep.subr.mxu0 0.0
  %3384 = vmatpush1.msra.mxu0 0.0
  %3385 = vmatprep.subr.mxu0 0.0
  %3386 = vmatpush1.msra.mxu0 0.0
  %3387 = vmatprep.subr.mxu0 0.0
  %3388 = vmatpush1.msra.mxu0 0.0
  %3389 = vmatprep.subr.mxu0 0.0
  %3390 = vmatpush1.msra.mxu0 0.0
  %3391 = vmatprep.subr.mxu0 0.0
  %3392 = vmatpush1.msra.mxu0 0.0
  %3393 = vmatprep.subr.mxu0 0.0
  %3394 = vmatpush1.msra.mxu0 0.0
  %3395 = vmatprep.subr.mxu0 0.0
  %3396 = vmatpush1.msra.mxu0 0.0
  %3397 = vmatprep.subr.mxu0 0.0
  %3398 = vmatpush1.msra.mxu0 0.0
  %3399 = vmatprep.subr.mxu0 0.0
  %3400 = vmatpush1.msra.mxu0 0.0
  %3401 = vmatprep.subr.mxu0 0.0
  %3402 = vmatpush1.msra.mxu0 0.0
  %3403 = vmatprep.subr.mxu0 0.0
  %3404 = vmatpush1.msra.mxu0 0.0
  %3405 = vmatprep.subr.mxu0 0.0
  %3406 = vmatpush1.msra.mxu0 0.0
  %3407 = vmatprep.subr.mxu0 0.0
  %3408 = vmatpush1.msra.mxu0 0.0
  %3409 = vmatprep.subr.mxu0 0.0
  %3410 = vmatpush1.msra.mxu0 0.0
  %3411 = vmatprep.subr.mxu0 0.0
  %3412 = vmatpush1.msra.mxu0 0.0
  %3413 = vmatprep.mubr.f32.mxu0 0.0
  %3414 = vmatmul.mubr.f32.gmra.mrb[0].mxu0 %v1923
  %v3415 = vpop.f32.mrb[0].mxu0
  %v3416 = vadd.f32 0.0, %v3415
  %v3417 = vpop.f32.mrb[0].mxu0
  %3418 = vmatprep.mubr.f32.mxu0 0.0
  %3419 = vmatmul.mubr.f32.gmra.mrb[0].mxu0 %v1926
  %v3420 = vpop.f32.mrb[0].mxu0
  %v3421 = vadd.f32 0.0, %v3420
  %v3422 = vpop.f32.mrb[0].mxu0
  %3423 = vmatprep.mubr.f32.mxu0 0.0
  %3424 = vmatmul.mubr.f32.gmra.mrb[0].mxu0 %v1929
  %v3425 = vpop.f32.mrb[0].mxu0
  %v3426 = vadd.f32 0.0, %v3425
  %v3427 = vpop.f32.mrb[0].mxu0
  %3428 = vmatprep.mubr.f32.mxu0 0.0
  %3429 = vmatmul.mubr.f32.gmra.mrb[0].mxu0 %v1932
  %v3430 = vpop.f32.mrb[0].mxu0
  %v3431 = vadd.f32 0.0, %v3430
  %v3432 = vpop.f32.mrb[0].mxu0
  %3433 = vmatprep.mubr.f32.mxu0 0.0
  %3434 = vmatmul.mubr.f32.gmra.mrb[0].mxu0 %v1935
  %v3435 = vpop.f32.mrb[0].mxu0
  %v3436 = vadd.f32 0.0, %v3435
  %v3437 = vpop.f32.mrb[0].mxu0
  %3438 = vmatprep.mubr.f32.mxu0 0.0
  %3439 = vmatmul.mubr.f32.gmra.mrb[0].mxu0 %v1938
  %v3440 = vpop.f32.mrb[0].mxu0
  %v3441 = vadd.f32 0.0, %v3440
  %v3442 = vpop.f32.mrb[0].mxu0
  %3443 = vmatprep.mubr.f32.mxu0 0.0
  %3444 = vmatmul.mubr.f32.gmra.mrb[0].mxu0 %v1941
  %v3445 = vpop.f32.mrb[0].mxu0
  %v3446 = vadd.f32 0.0, %v3445
  %v3447 = vpop.f32.mrb[0].mxu0
  %3448 = vmatprep.mubr.f32.mxu0 0.0
  %3449 = vmatmul.mubr.f32.gmra.mrb[0].mxu0 %v1944
  %v3450 = vpop.f32.mrb[0].mxu0
  %v3451 = vadd.f32 0.0, %v3450
  %v3452 = vpop.f32.mrb[0].mxu0
  %3453 = vmatprep.mubr.f32.mxu0 0.0
  %3454 = vmatmul.mubr.f32.gmra.mrb[0].mxu0 %v1947
  %v3455 = vpop.f32.mrb[0].mxu0
  %v3456 = vadd.f32 0.0, %v3455
  %v3457 = vpop.f32.mrb[0].mxu0
  %3458 = vmatprep.mubr.f32.mxu0 0.0
  %3459 = vmatmul.mubr.f32.gmra.mrb[0].mxu0 %v1950
  %v3460 = vpop.f32.mrb[0].mxu0
  %v3461 = vadd.f32 0.0, %v3460
  %v3462 = vpop.f32.mrb[0].mxu0
  %3463 = vmatprep.mubr.f32.mxu0 0.0
  %3464 = vmatmul.mubr.f32.gmra.mrb[0].mxu0 %v1953
  %v3465 = vpop.f32.mrb[0].mxu0
  %v3466 = vadd.f32 0.0, %v3465
  %v3467 = vpop.f32.mrb[0].mxu0
  %3468 = vmatprep.mubr.f32.mxu0 0.0
  %3469 = vmatmul.mubr.f32.gmra.mrb[0].mxu0 %v1956
  %v3470 = vpop.f32.mrb[0].mxu0
  %v3471 = vadd.f32 0.0, %v3470
  %v3472 = vpop.f32.mrb[0].mxu0
  %3473 = vmatprep.mubr.f32.mxu0 0.0
  %3474 = vmatmul.mubr.f32.gmra.mrb[0].mxu0 %v1959
  %v3475 = vpop.f32.mrb[0].mxu0
  %v3476 = vadd.f32 0.0, %v3475
  %v3477 = vpop.f32.mrb[0].mxu0
  %3478 = vmatprep.mubr.f32.mxu0 0.0
  %3479 = vmatmul.mubr.f32.gmra.mrb[0].mxu0 %v1962
  %v3480 = vpop.f32.mrb[0].mxu0
  %v3481 = vadd.f32 0.0, %v3480
  %v3482 = vpop.f32.mrb[0].mxu0
  %3483 = vmatprep.mubr.f32.mxu0 0.0
  %3484 = vmatmul.mubr.f32.gmra.mrb[0].mxu0 %v1965
  %v3485 = vpop.f32.mrb[0].mxu0
  %v3486 = vadd.f32 0.0, %v3485
  %v3487 = vpop.f32.mrb[0].mxu0
  %3488 = vmatprep.mubr.f32.mxu0 0.0
  %3489 = vmatmul.mubr.f32.gmra.mrb[0].mxu0 %v1968
  %v3490 = vpop.f32.mrb[0].mxu0
  %v3491 = vadd.f32 0.0, %v3490
  %v3492 = vpop.f32.mrb[0].mxu0
  %3493 = vmatprep.mubr.f32.mxu0 0.0
  %3494 = vmatmul.mubr.f32.gmra.mrb[0].mxu0 %v1971
  %v3495 = vpop.f32.mrb[0].mxu0
  %v3496 = vadd.f32 0.0, %v3495
  %v3497 = vpop.f32.mrb[0].mxu0
  %3498 = vmatprep.mubr.f32.mxu0 0.0
  %3499 = vmatmul.mubr.f32.gmra.mrb[0].mxu0 %v1974
  %v3500 = vpop.f32.mrb[0].mxu0
  %v3501 = vadd.f32 0.0, %v3500
  %v3502 = vpop.f32.mrb[0].mxu0
  %3503 = vdwg.mxu0
  %v3504 = vmax.f32 %v3416, 1e-20
  %v3505 = vmax.f32 %v3421, 1e-20
  %v3506 = vmax.f32 %v3426, 1e-20
  %v3507 = vmax.f32 %v3431, 1e-20
  %v3508 = vmax.f32 %v3436, 1e-20
  %v3509 = vmax.f32 %v3441, 1e-20
  %v3510 = vmax.f32 %v3446, 1e-20
  %v3511 = vmax.f32 %v3451, 1e-20
  %v3512 = vmax.f32 %v3456, 1e-20
  %v3513 = vmax.f32 %v3461, 1e-20
  %v3514 = vmax.f32 %v3466, 1e-20
  %v3515 = vmax.f32 %v3471, 1e-20
  %v3516 = vmax.f32 %v3476, 1e-20
  %v3517 = vmax.f32 %v3481, 1e-20
  %v3518 = vmax.f32 %v3486, 1e-20
  %v3519 = vmax.f32 %v3491, 1e-20
  %v3520 = vmax.f32 %v3496, 1e-20
  %v3521 = vmax.f32 %v3501, 1e-20
  %v3522 = vrcp.pop %v3504
  %v3523 = vmul.f32 %v3239, %v3522
  %v3524 = vrcp.pop %v3505
  %v3525 = vmul.f32 %v3241, %v3524
  %v3526 = vrcp.pop %v3506
  %v3527 = vmul.f32 %v3243, %v3526
  %v3528 = vrcp.pop %v3507
  %v3529 = vmul.f32 %v3245, %v3528
  %v3530 = vrcp.pop %v3508
  %v3531 = vmul.f32 %v3247, %v3530
  %v3532 = vrcp.pop %v3509
  %v3533 = vmul.f32 %v3249, %v3532
  %v3534 = vrcp.pop %v3510
  %v3535 = vmul.f32 %v3251, %v3534
  %v3536 = vrcp.pop %v3511
  %v3537 = vmul.f32 %v3253, %v3536
  %v3538 = vrcp.pop %v3512
  %v3539 = vmul.f32 %v3255, %v3538
  %v3540 = vrcp.pop %v3513
  %v3541 = vmul.f32 %v3257, %v3540
  %v3542 = vrcp.pop %v3514
  %v3543 = vmul.f32 %v3259, %v3542
  %v3544 = vrcp.pop %v3515
  %v3545 = vmul.f32 %v3261, %v3544
  %v3546 = vrcp.pop %v3516
  %v3547 = vmul.f32 %v3263, %v3546
  %v3548 = vrcp.pop %v3517
  %v3549 = vmul.f32 %v3265, %v3548
  %v3550 = vrcp.pop %v3518
  %v3551 = vmul.f32 %v3267, %v3550
  %v3552 = vrcp.pop %v3519
  %v3553 = vmul.f32 %v3269, %v3552
  %v3554 = vrcp.pop %v3520
  %v3555 = vmul.f32 %v3271, %v3554
  %v3556 = vrcp.pop %v3521
  %v3557 = vmul.f32 %v3273, %v3556
  %3559 = vset.pattern.permute.xlu0 0
  %3560 = vperm.xlu0 %3559, %v3523
  %v3561 = vpop.permute.xlu0 %3560
  %3564 = vset.pattern.permute.xlu0 0
  %3565 = vperm.xlu0 %3564, %v3525
  %v3566 = vpop.permute.xlu0 %3565
  %3569 = vset.pattern.permute.xlu0 0
  %3570 = vperm.xlu0 %3569, %v3527
  %v3571 = vpop.permute.xlu0 %3570
  %3574 = vset.pattern.permute.xlu0 0
  %3575 = vperm.xlu0 %3574, %v3529
  %v3576 = vpop.permute.xlu0 %3575
  %3579 = vset.pattern.permute.xlu0 0
  %3580 = vperm.xlu0 %3579, %v3531
  %v3581 = vpop.permute.xlu0 %3580
  %3584 = vset.pattern.permute.xlu0 0
  %3585 = vperm.xlu0 %3584, %v3533
  %v3586 = vpop.permute.xlu0 %3585
  %3589 = vset.pattern.permute.xlu0 0
  %3590 = vperm.xlu0 %3589, %v3535
  %v3591 = vpop.permute.xlu0 %3590
  %3594 = vset.pattern.permute.xlu0 0
  %3595 = vperm.xlu0 %3594, %v3537
  %v3596 = vpop.permute.xlu0 %3595
  %3599 = vset.pattern.permute.xlu0 0
  %3600 = vperm.xlu0 %3599, %v3539
  %v3601 = vpop.permute.xlu0 %3600
  %3604 = vset.pattern.permute.xlu0 0
  %3605 = vperm.xlu0 %3604, %v3541
  %v3606 = vpop.permute.xlu0 %3605
  %3609 = vset.pattern.permute.xlu0 0
  %3610 = vperm.xlu0 %3609, %v3543
  %v3611 = vpop.permute.xlu0 %3610
  %3614 = vset.pattern.permute.xlu0 0
  %3615 = vperm.xlu0 %3614, %v3545
  %v3616 = vpop.permute.xlu0 %3615
  %3619 = vset.pattern.permute.xlu0 0
  %3620 = vperm.xlu0 %3619, %v3547
  %v3621 = vpop.permute.xlu0 %3620
  %3624 = vset.pattern.permute.xlu0 0
  %3625 = vperm.xlu0 %3624, %v3549
  %v3626 = vpop.permute.xlu0 %3625
  %3629 = vset.pattern.permute.xlu0 0
  %3630 = vperm.xlu0 %3629, %v3551
  %v3631 = vpop.permute.xlu0 %3630
  %3634 = vset.pattern.permute.xlu0 0
  %3635 = vperm.xlu0 %3634, %v3553
  %v3636 = vpop.permute.xlu0 %3635
  %3639 = vset.pattern.permute.xlu0 0
  %3640 = vperm.xlu0 %3639, %v3555
  %v3641 = vpop.permute.xlu0 %3640
  %3644 = vset.pattern.permute.xlu0 0
  %3645 = vperm.xlu0 %3644, %v3557
  %v3646 = vpop.permute.xlu0 %3645
  %v3648 = vmul.f32 %v3561, %v2607
  %v3649 = vmul.f32 %v3566, %v2610
  %v3650 = vmul.f32 %v3571, %v2615
  %v3651 = vmul.f32 %v3576, %v2618
  %v3652 = vmul.f32 %v3581, %v2623
  %v3653 = vmul.f32 %v3586, %v2626
  %v3654 = vmul.f32 %v3591, %v2631
  %v3655 = vmul.f32 %v3596, %v2634
  %v3656 = vmul.f32 %v3601, %v2639
  %v3657 = vmul.f32 %v3606, %v2642
  %v3658 = vmul.f32 %v3611, %v2647
  %v3659 = vmul.f32 %v3616, %v2650
  %v3660 = vmul.f32 %v3621, %v2655
  %v3661 = vmul.f32 %v3626, %v2658
  %v3662 = vmul.f32 %v3631, %v2663
  %v3663 = vmul.f32 %v3636, %v2666
  %v3664 = vmul.f32 %v3641, %v2671
  %v3665 = vmul.f32 %v3646, %v2674
  %v3666 = vpack.c.bf16 %v3649, %v3648
  %v3667 = vpack.c.bf16 %v3651, %v3650
  %v3668 = vpack.c.bf16 %v3653, %v3652
  %v3669 = vpack.c.bf16 %v3655, %v3654
  %v3670 = vpack.c.bf16 %v3657, %v3656
  %v3671 = vpack.c.bf16 %v3659, %v3658
  %v3672 = vpack.c.bf16 %v3661, %v3660
  %v3673 = vpack.c.bf16 %v3663, %v3662
  %v3674 = vpack.c.bf16 %v3665, %v3664
  %v3675 = vlaneseq
  %v3676 = vshrl.u32 %v3675, 7
  %v3677 = vsub.s32 0, %v3676
  %v3678 = vrot.slane %v787, %v3677
  %3679 = vmatprep.subr.bf16.mxu0 0
  %3680 = vmatpush1.bf16.msra.mxu0 %v3666
  %3681 = vmatprep.subr.bf16.mxu0 0
  %3682 = vmatpush1.bf16.msra.mxu0 %v3667
  %3683 = vmatprep.subr.bf16.mxu0 0
  %3684 = vmatpush1.bf16.msra.mxu0 %v3668
  %3685 = vmatprep.subr.bf16.mxu0 0
  %3686 = vmatpush1.bf16.msra.mxu0 %v3669
  %3687 = vmatprep.subr.bf16.mxu0 0
  %3688 = vmatpush1.bf16.msra.mxu0 %v3670
  %3689 = vmatprep.subr.bf16.mxu0 0
  %3690 = vmatpush1.bf16.msra.mxu0 %v3671
  %3691 = vmatprep.subr.bf16.mxu0 0
  %3692 = vmatpush1.bf16.msra.mxu0 %v3672
  %3693 = vmatprep.subr.bf16.mxu0 0
  %3694 = vmatpush1.bf16.msra.mxu0 %v3673
  %3695 = vmatprep.subr.bf16.mxu0 0
  %3696 = vmatpush1.bf16.msra.mxu0 %v3674
  %3697 = vmatprep.subr.bf16.mxu0 0
  %3698 = vmatpush1.bf16.msra.mxu0 0
  %3699 = vmatprep.subr.bf16.mxu0 0
  %3700 = vmatpush1.bf16.msra.mxu0 0
  %3701 = vmatprep.subr.bf16.mxu0 0
  %3702 = vmatpush1.bf16.msra.mxu0 0
  %3703 = vmatprep.subr.bf16.mxu0 0
  %3704 = vmatpush1.bf16.msra.mxu0 0
  %3705 = vmatprep.subr.bf16.mxu0 0
  %3706 = vmatpush1.bf16.msra.mxu0 0
  %3707 = vmatprep.subr.bf16.mxu0 0
  %3708 = vmatpush1.bf16.msra.mxu0 0
  %3709 = vmatprep.subr.bf16.mxu0 0
  %3710 = vmatpush1.bf16.msra.mxu0 0
  %3711 = vmatprep.mubr.bf16.mxu0 %v2339
  %3712 = vmatmul.mubr.bf16.gmra.mrb[0].mxu0 %v2314
  %v3713 = vpop.f32.mrb[0].mxu0
  %v3714 = vadd.f32 %v3678, %v3713
  %v3715 = vpop.f32.mrb[0].mxu0
  %v3716 = vpop.f32.mrb[0].mxu0
  %v3717 = vadd.f32 %v3678, %v3716
  %v3718 = vpop.f32.mrb[0].mxu0
  %3719 = vdwg.mxu0
  %v3720 = vmax.f32 %v3714, 0.0
  %v3721 = vmax.f32 %v3717, 0.0
  %v3722 = vpack.c.bf16 %v3721, %v3720
  %3723 = vmatprep.subr.bf16.mxu0 0
  %3724 = vmatpush1.bf16.msra.mxu0 %v3722
  %3725 = vmatprep.subr.bf16.mxu0 0
  %3726 = vmatpush1.bf16.msra.mxu0 0
  %3727 = vmatprep.subr.bf16.mxu0 0
  %3728 = vmatpush1.bf16.msra.mxu0 0
  %3729 = vmatprep.subr.bf16.mxu0 0
  %3730 = vmatpush1.bf16.msra.mxu0 0
  %3731 = vmatprep.subr.bf16.mxu0 0
  %3732 = vmatpush1.bf16.msra.mxu0 0
  %3733 = vmatprep.subr.bf16.mxu0 0
  %3734 = vmatpush1.bf16.msra.mxu0 0
  %3735 = vmatprep.subr.bf16.mxu0 0
  %3736 = vmatpush1.bf16.msra.mxu0 0
  %3737 = vmatprep.subr.bf16.mxu0 0
  %3738 = vmatpush1.bf16.msra.mxu0 0
  %3739 = vmatprep.subr.bf16.mxu0 0
  %3740 = vmatpush1.bf16.msra.mxu0 0
  %3741 = vmatprep.subr.bf16.mxu0 0
  %3742 = vmatpush1.bf16.msra.mxu0 0
  %3743 = vmatprep.subr.bf16.mxu0 0
  %3744 = vmatpush1.bf16.msra.mxu0 0
  %3745 = vmatprep.subr.bf16.mxu0 0
  %3746 = vmatpush1.bf16.msra.mxu0 0
  %3747 = vmatprep.subr.bf16.mxu0 0
  %3748 = vmatpush1.bf16.msra.mxu0 0
  %3749 = vmatprep.subr.bf16.mxu0 0
  %3750 = vmatpush1.bf16.msra.mxu0 0
  %3751 = vmatprep.subr.bf16.mxu0 0
  %3752 = vmatpush1.bf16.msra.mxu0 0
  %3753 = vmatprep.subr.bf16.mxu0 0
  %3754 = vmatpush1.bf16.msra.mxu0 0
  %3755 = vmatprep.mubr.bf16.mxu0 0
  %3756 = vmatmul.mubr.bf16.gmra.mrb[0].mxu0 %v981
  %v3757 = vpop.f32.mrb[0].mxu0
  %v3758 = vadd.f32 0.0, %v3757
  %v3759 = vpop.f32.mrb[0].mxu0
  %v3760 = vpop.f32.mrb[0].mxu0
  %v3761 = vadd.f32 0.0, %v3760
  %v3762 = vpop.f32.mrb[0].mxu0
  %3763 = vmatprep.mubr.bf16.mxu0 0
  %3764 = vmatmul.mubr.bf16.gmra.mrb[0].mxu0 %v984
  %v3765 = vpop.f32.mrb[0].mxu0
  %v3766 = vadd.f32 0.0, %v3765
  %v3767 = vpop.f32.mrb[0].mxu0
  %v3768 = vpop.f32.mrb[0].mxu0
  %v3769 = vadd.f32 0.0, %v3768
  %v3770 = vpop.f32.mrb[0].mxu0
  %3771 = vmatprep.mubr.bf16.mxu0 0
  %3772 = vmatmul.mubr.bf16.gmra.mrb[0].mxu0 %v987
  %v3773 = vpop.f32.mrb[0].mxu0
  %v3774 = vadd.f32 0.0, %v3773
  %v3775 = vpop.f32.mrb[0].mxu0
  %v3776 = vpop.f32.mrb[0].mxu0
  %v3777 = vadd.f32 0.0, %v3776
  %v3778 = vpop.f32.mrb[0].mxu0
  %3779 = vmatprep.mubr.bf16.mxu0 0
  %3780 = vmatmul.mubr.bf16.gmra.mrb[0].mxu0 %v990
  %v3781 = vpop.f32.mrb[0].mxu0
  %v3782 = vadd.f32 0.0, %v3781
  %v3783 = vpop.f32.mrb[0].mxu0
  %v3784 = vpop.f32.mrb[0].mxu0
  %v3785 = vadd.f32 0.0, %v3784
  %v3786 = vpop.f32.mrb[0].mxu0
  %3787 = vmatprep.mubr.bf16.mxu0 0
  %3788 = vmatmul.mubr.bf16.gmra.mrb[0].mxu0 %v993
  %v3789 = vpop.f32.mrb[0].mxu0
  %v3790 = vadd.f32 0.0, %v3789
  %v3791 = vpop.f32.mrb[0].mxu0
  %v3792 = vpop.f32.mrb[0].mxu0
  %v3793 = vadd.f32 0.0, %v3792
  %v3794 = vpop.f32.mrb[0].mxu0
  %3795 = vmatprep.mubr.bf16.mxu0 0
  %3796 = vmatmul.mubr.bf16.gmra.mrb[0].mxu0 %v996
  %v3797 = vpop.f32.mrb[0].mxu0
  %v3798 = vadd.f32 0.0, %v3797
  %v3799 = vpop.f32.mrb[0].mxu0
  %v3800 = vpop.f32.mrb[0].mxu0
  %v3801 = vadd.f32 0.0, %v3800
  %v3802 = vpop.f32.mrb[0].mxu0
  %3803 = vmatprep.mubr.bf16.mxu0 0
  %3804 = vmatmul.mubr.bf16.gmra.mrb[0].mxu0 %v999
  %v3805 = vpop.f32.mrb[0].mxu0
  %v3806 = vadd.f32 0.0, %v3805
  %v3807 = vpop.f32.mrb[0].mxu0
  %v3808 = vpop.f32.mrb[0].mxu0
  %v3809 = vadd.f32 0.0, %v3808
  %v3810 = vpop.f32.mrb[0].mxu0
  %3811 = vmatprep.mubr.bf16.mxu0 0
  %3812 = vmatmul.mubr.bf16.gmra.mrb[0].mxu0 %v1002
  %v3813 = vpop.f32.mrb[0].mxu0
  %v3814 = vadd.f32 0.0, %v3813
  %v3815 = vpop.f32.mrb[0].mxu0
  %v3816 = vpop.f32.mrb[0].mxu0
  %v3817 = vadd.f32 0.0, %v3816
  %v3818 = vpop.f32.mrb[0].mxu0
  %3819 = vdwg.mxu0
  %3820 = vmatprep.subr.bf16.mxu0 0
  %3821 = vmatpush1.bf16.msra.mxu0 %v3722
  %3822 = vmatprep.subr.bf16.mxu0 0
  %3823 = vmatpush1.bf16.msra.mxu0 0
  %3824 = vmatprep.subr.bf16.mxu0 0
  %3825 = vmatpush1.bf16.msra.mxu0 0
  %3826 = vmatprep.subr.bf16.mxu0 0
  %3827 = vmatpush1.bf16.msra.mxu0 0
  %3828 = vmatprep.subr.bf16.mxu0 0
  %3829 = vmatpush1.bf16.msra.mxu0 0
  %3830 = vmatprep.subr.bf16.mxu0 0
  %3831 = vmatpush1.bf16.msra.mxu0 0
  %3832 = vmatprep.subr.bf16.mxu0 0
  %3833 = vmatpush1.bf16.msra.mxu0 0
  %3834 = vmatprep.subr.bf16.mxu0 0
  %3835 = vmatpush1.bf16.msra.mxu0 0
  %3836 = vmatprep.subr.bf16.mxu0 0
  %3837 = vmatpush1.bf16.msra.mxu0 0
  %3838 = vmatprep.subr.bf16.mxu0 0
  %3839 = vmatpush1.bf16.msra.mxu0 0
  %3840 = vmatprep.subr.bf16.mxu0 0
  %3841 = vmatpush1.bf16.msra.mxu0 0
  %3842 = vmatprep.subr.bf16.mxu0 0
  %3843 = vmatpush1.bf16.msra.mxu0 0
  %3844 = vmatprep.subr.bf16.mxu0 0
  %3845 = vmatpush1.bf16.msra.mxu0 0
  %3846 = vmatprep.subr.bf16.mxu0 0
  %3847 = vmatpush1.bf16.msra.mxu0 0
  %3848 = vmatprep.subr.bf16.mxu0 0
  %3849 = vmatpush1.bf16.msra.mxu0 0
  %3850 = vmatprep.subr.bf16.mxu0 0
  %3851 = vmatpush1.bf16.msra.mxu0 0
  %3852 = vmatprep.mubr.bf16.mxu0 0
  %3853 = vmatmul.mubr.bf16.gmra.mrb[0].mxu0 %v1114
  %v3854 = vpop.f32.mrb[0].mxu0
  %v3855 = vadd.f32 0.0, %v3854
  %v3856 = vpop.f32.mrb[0].mxu0
  %v3857 = vpop.f32.mrb[0].mxu0
  %v3858 = vadd.f32 0.0, %v3857
  %v3859 = vpop.f32.mrb[0].mxu0
  %3860 = vmatprep.mubr.bf16.mxu0 0
  %3861 = vmatmul.mubr.bf16.gmra.mrb[0].mxu0 %v1117
  %v3862 = vpop.f32.mrb[0].mxu0
  %v3863 = vadd.f32 0.0, %v3862
  %v3864 = vpop.f32.mrb[0].mxu0
  %v3865 = vpop.f32.mrb[0].mxu0
  %v3866 = vadd.f32 0.0, %v3865
  %v3867 = vpop.f32.mrb[0].mxu0
  %3868 = vmatprep.mubr.bf16.mxu0 0
  %3869 = vmatmul.mubr.bf16.gmra.mrb[0].mxu0 %v1120
  %v3870 = vpop.f32.mrb[0].mxu0
  %v3871 = vadd.f32 0.0, %v3870
  %v3872 = vpop.f32.mrb[0].mxu0
  %v3873 = vpop.f32.mrb[0].mxu0
  %v3874 = vadd.f32 0.0, %v3873
  %v3875 = vpop.f32.mrb[0].mxu0
  %3876 = vmatprep.mubr.bf16.mxu0 0
  %3877 = vmatmul.mubr.bf16.gmra.mrb[0].mxu0 %v1123
  %v3878 = vpop.f32.mrb[0].mxu0
  %v3879 = vadd.f32 0.0, %v3878
  %v3880 = vpop.f32.mrb[0].mxu0
  %v3881 = vpop.f32.mrb[0].mxu0
  %v3882 = vadd.f32 0.0, %v3881
  %v3883 = vpop.f32.mrb[0].mxu0
  %3884 = vmatprep.mubr.bf16.mxu0 0
  %3885 = vmatmul.mubr.bf16.gmra.mrb[0].mxu0 %v1126
  %v3886 = vpop.f32.mrb[0].mxu0
  %v3887 = vadd.f32 0.0, %v3886
  %v3888 = vpop.f32.mrb[0].mxu0
  %v3889 = vpop.f32.mrb[0].mxu0
  %v3890 = vadd.f32 0.0, %v3889
  %v3891 = vpop.f32.mrb[0].mxu0
  %3892 = vmatprep.mubr.bf16.mxu0 0
  %3893 = vmatmul.mubr.bf16.gmra.mrb[0].mxu0 %v1129
  %v3894 = vpop.f32.mrb[0].mxu0
  %v3895 = vadd.f32 0.0, %v3894
  %v3896 = vpop.f32.mrb[0].mxu0
  %v3897 = vpop.f32.mrb[0].mxu0
  %v3898 = vadd.f32 0.0, %v3897
  %v3899 = vpop.f32.mrb[0].mxu0
  %3900 = vmatprep.mubr.bf16.mxu0 0
  %3901 = vmatmul.mubr.bf16.gmra.mrb[0].mxu0 %v1132
  %v3902 = vpop.f32.mrb[0].mxu0
  %v3903 = vadd.f32 0.0, %v3902
  %v3904 = vpop.f32.mrb[0].mxu0
  %v3905 = vpop.f32.mrb[0].mxu0
  %v3906 = vadd.f32 0.0, %v3905
  %v3907 = vpop.f32.mrb[0].mxu0
  %3908 = vmatprep.mubr.bf16.mxu0 0
  %3909 = vmatmul.mubr.bf16.gmra.mrb[0].mxu0 %v1135
  %v3910 = vpop.f32.mrb[0].mxu0
  %v3911 = vadd.f32 0.0, %v3910
  %v3912 = vpop.f32.mrb[0].mxu0
  %v3913 = vpop.f32.mrb[0].mxu0
  %v3914 = vadd.f32 0.0, %v3913
  %v3915 = vpop.f32.mrb[0].mxu0
  %3916 = vdwg.mxu0
  %v3917 = vpack.c.bf16 %v3761, %v3758
  %v3918 = vpack.c.bf16 %v3769, %v3766
  %v3919 = vpack.c.bf16 %v3777, %v3774
  %v3920 = vpack.c.bf16 %v3785, %v3782
  %v3921 = vpack.c.bf16 %v3793, %v3790
  %v3922 = vpack.c.bf16 %v3801, %v3798
  %v3923 = vpack.c.bf16 %v3809, %v3806
  %v3924 = vpack.c.bf16 %v3817, %v3814
  %v3925 = vpack.c.bf16 %v3858, %v3855
  %v3926 = vpack.c.bf16 %v3866, %v3863
  %v3927 = vpack.c.bf16 %v3874, %v3871
  %v3928 = vpack.c.bf16 %v3882, %v3879
  %v3929 = vpack.c.bf16 %v3890, %v3887
  %v3930 = vpack.c.bf16 %v3898, %v3895
  %v3931 = vpack.c.bf16 %v3906, %v3903
  %v3932 = vpack.c.bf16 %v3914, %v3911
  %v3949 = vunpack.c.l.b16 %v761
  %v3950 = vunpack.c.l.b16 %v762
  %v3951 = vunpack.c.l.b16 %v763
  %v3952 = vunpack.c.l.b16 %v764
  %v3953 = vunpack.c.l.b16 %v765
  %v3954 = vunpack.c.l.b16 %v766
  %v3955 = vunpack.c.l.b16 %v767
  %v3956 = vunpack.c.l.b16 %v768
  %v3957 = vunpack.c.l.b16 %v769
  %v3958 = vunpack.c.l.b16 %v770
  %v3959 = vunpack.c.l.b16 %v771
  %v3960 = vunpack.c.l.b16 %v772
  %v3961 = vunpack.c.l.b16 %v773
  %v3962 = vunpack.c.l.b16 %v774
  %v3963 = vunpack.c.l.b16 %v775
  %v3964 = vunpack.c.l.b16 %v776
  %v3965 = vpack.c.b16 %v3950, %v3949
  %v3966 = vpack.c.b16 %v3952, %v3951
  %v3967 = vpack.c.b16 %v3954, %v3953
  %v3968 = vpack.c.b16 %v3956, %v3955
  %v3969 = vpack.c.b16 %v3958, %v3957
  %v3970 = vpack.c.b16 %v3960, %v3959
  %v3971 = vpack.c.b16 %v3962, %v3961
  %v3972 = vpack.c.b16 %v3964, %v3963
  %3981 = vmatprep.subr.bf16.mxu0 0
  %3982 = vmatpush1.bf16.msra.mxu0 %v3965
  %3983 = vmatprep.subr.bf16.mxu0 0
  %3984 = vmatpush1.bf16.msra.mxu0 %v3966
  %3985 = vmatprep.subr.bf16.mxu0 0
  %3986 = vmatpush1.bf16.msra.mxu0 %v3967
  %3987 = vmatprep.subr.bf16.mxu0 0
  %3988 = vmatpush1.bf16.msra.mxu0 %v3968
  %3989 = vmatprep.subr.bf16.mxu0 0
  %3990 = vmatpush1.bf16.msra.mxu0 %v3969
  %3991 = vmatprep.subr.bf16.mxu0 0
  %3992 = vmatpush1.bf16.msra.mxu0 %v3970
  %3993 = vmatprep.subr.bf16.mxu0 0
  %3994 = vmatpush1.bf16.msra.mxu0 %v3971
  %3995 = vmatprep.subr.bf16.mxu0 0
  %3996 = vmatpush1.bf16.msra.mxu0 %v3972
  %3997 = vmatprep.subr.bf16.mxu0 0
  %3998 = vmatpush1.bf16.msra.mxu0 0
  %3999 = vmatprep.subr.bf16.mxu0 0
  %4000 = vmatpush1.bf16.msra.mxu0 0
  %4001 = vmatprep.subr.bf16.mxu0 0
  %4002 = vmatpush1.bf16.msra.mxu0 0
  %4003 = vmatprep.subr.bf16.mxu0 0
  %4004 = vmatpush1.bf16.msra.mxu0 0
  %4005 = vmatprep.subr.bf16.mxu0 0
  %4006 = vmatpush1.bf16.msra.mxu0 0
  %4007 = vmatprep.subr.bf16.mxu0 0
  %4008 = vmatpush1.bf16.msra.mxu0 0
  %4009 = vmatprep.subr.bf16.mxu0 0
  %4010 = vmatpush1.bf16.msra.mxu0 0
  %4011 = vmatprep.subr.bf16.mxu0 0
  %4012 = vmatpush1.bf16.msra.mxu0 0
  %4013 = vmatprep.mubr.bf16.mxu0 0
  %4014 = vmatmul.mubr.bf16.gmra.mrb[0].mxu0 %v3925
  %v4015 = vpop.f32.mrb[0].mxu0
  %v4016 = vadd.f32 0.0, %v4015
  %v4017 = vpop.f32.mrb[0].mxu0
  %v4018 = vpop.f32.mrb[0].mxu0
  %v4019 = vadd.f32 0.0, %v4018
  %v4020 = vpop.f32.mrb[0].mxu0
  %4021 = vmatprep.mubr.bf16.mxu0 0
  %4022 = vmatmul.mubr.bf16.gmra.mrb[0].mxu0 %v3926
  %v4023 = vpop.f32.mrb[0].mxu0
  %v4024 = vadd.f32 0.0, %v4023
  %v4025 = vpop.f32.mrb[0].mxu0
  %v4026 = vpop.f32.mrb[0].mxu0
  %v4027 = vadd.f32 0.0, %v4026
  %v4028 = vpop.f32.mrb[0].mxu0
  %4029 = vmatprep.mubr.bf16.mxu0 0
  %4030 = vmatmul.mubr.bf16.gmra.mrb[0].mxu0 %v3927
  %v4031 = vpop.f32.mrb[0].mxu0
  %v4032 = vadd.f32 0.0, %v4031
  %v4033 = vpop.f32.mrb[0].mxu0
  %v4034 = vpop.f32.mrb[0].mxu0
  %v4035 = vadd.f32 0.0, %v4034
  %v4036 = vpop.f32.mrb[0].mxu0
  %4037 = vmatprep.mubr.bf16.mxu0 0
  %4038 = vmatmul.mubr.bf16.gmra.mrb[0].mxu0 %v3928
  %v4039 = vpop.f32.mrb[0].mxu0
  %v4040 = vadd.f32 0.0, %v4039
  %v4041 = vpop.f32.mrb[0].mxu0
  %v4042 = vpop.f32.mrb[0].mxu0
  %v4043 = vadd.f32 0.0, %v4042
  %v4044 = vpop.f32.mrb[0].mxu0
  %4045 = vmatprep.mubr.bf16.mxu0 0
  %4046 = vmatmul.mubr.bf16.gmra.mrb[0].mxu0 %v3929
  %v4047 = vpop.f32.mrb[0].mxu0
  %v4048 = vadd.f32 0.0, %v4047
  %v4049 = vpop.f32.mrb[0].mxu0
  %v4050 = vpop.f32.mrb[0].mxu0
  %v4051 = vadd.f32 0.0, %v4050
  %v4052 = vpop.f32.mrb[0].mxu0
  %4053 = vmatprep.mubr.bf16.mxu0 0
  %4054 = vmatmul.mubr.bf16.gmra.mrb[0].mxu0 %v3930
  %v4055 = vpop.f32.mrb[0].mxu0
  %v4056 = vadd.f32 0.0, %v4055
  %v4057 = vpop.f32.mrb[0].mxu0
  %v4058 = vpop.f32.mrb[0].mxu0
  %v4059 = vadd.f32 0.0, %v4058
  %v4060 = vpop.f32.mrb[0].mxu0
  %4061 = vmatprep.mubr.bf16.mxu0 0
  %4062 = vmatmul.mubr.bf16.gmra.mrb[0].mxu0 %v3931
  %v4063 = vpop.f32.mrb[0].mxu0
  %v4064 = vadd.f32 0.0, %v4063
  %v4065 = vpop.f32.mrb[0].mxu0
  %v4066 = vpop.f32.mrb[0].mxu0
  %v4067 = vadd.f32 0.0, %v4066
  %v4068 = vpop.f32.mrb[0].mxu0
  %4069 = vmatprep.mubr.bf16.mxu0 0
  %4070 = vmatmul.mubr.bf16.gmra.mrb[0].mxu0 %v3932
  %v4071 = vpop.f32.mrb[0].mxu0
  %v4072 = vadd.f32 0.0, %v4071
  %v4073 = vpop.f32.mrb[0].mxu0
  %v4074 = vpop.f32.mrb[0].mxu0
  %v4075 = vadd.f32 0.0, %v4074
  %v4076 = vpop.f32.mrb[0].mxu0
  %4077 = vdwg.mxu0
  %v4094 = vunpack.c.l.b16 %v745
  %v4095 = vunpack.c.l.b16 %v746
  %v4096 = vunpack.c.l.b16 %v747
  %v4097 = vunpack.c.l.b16 %v748
  %v4098 = vunpack.c.l.b16 %v749
  %v4099 = vunpack.c.l.b16 %v750
  %v4100 = vunpack.c.l.b16 %v751
  %v4101 = vunpack.c.l.b16 %v752
  %v4102 = vunpack.c.l.b16 %v753
  %v4103 = vunpack.c.l.b16 %v754
  %v4104 = vunpack.c.l.b16 %v755
  %v4105 = vunpack.c.l.b16 %v756
  %v4106 = vunpack.c.l.b16 %v757
  %v4107 = vunpack.c.l.b16 %v758
  %v4108 = vunpack.c.l.b16 %v759
  %v4109 = vunpack.c.l.b16 %v760
  %v4110 = vpack.c.b16 %v4095, %v4094
  %v4111 = vpack.c.b16 %v4097, %v4096
  %v4112 = vpack.c.b16 %v4099, %v4098
  %v4113 = vpack.c.b16 %v4101, %v4100
  %v4114 = vpack.c.b16 %v4103, %v4102
  %v4115 = vpack.c.b16 %v4105, %v4104
  %v4116 = vpack.c.b16 %v4107, %v4106
  %v4117 = vpack.c.b16 %v4109, %v4108
  %4126 = vmatprep.subr.bf16.mxu0 0
  %4127 = vmatpush1.bf16.msra.mxu0 %v4110
  %4128 = vmatprep.subr.bf16.mxu0 0
  %4129 = vmatpush1.bf16.msra.mxu0 %v4111
  %4130 = vmatprep.subr.bf16.mxu0 0
  %4131 = vmatpush1.bf16.msra.mxu0 %v4112
  %4132 = vmatprep.subr.bf16.mxu0 0
  %4133 = vmatpush1.bf16.msra.mxu0 %v4113
  %4134 = vmatprep.subr.bf16.mxu0 0
  %4135 = vmatpush1.bf16.msra.mxu0 %v4114
  %4136 = vmatprep.subr.bf16.mxu0 0
  %4137 = vmatpush1.bf16.msra.mxu0 %v4115
  %4138 = vmatprep.subr.bf16.mxu0 0
  %4139 = vmatpush1.bf16.msra.mxu0 %v4116
  %4140 = vmatprep.subr.bf16.mxu0 0
  %4141 = vmatpush1.bf16.msra.mxu0 %v4117
  %4142 = vmatprep.subr.bf16.mxu0 0
  %4143 = vmatpush1.bf16.msra.mxu0 0
  %4144 = vmatprep.subr.bf16.mxu0 0
  %4145 = vmatpush1.bf16.msra.mxu0 0
  %4146 = vmatprep.subr.bf16.mxu0 0
  %4147 = vmatpush1.bf16.msra.mxu0 0
  %4148 = vmatprep.subr.bf16.mxu0 0
  %4149 = vmatpush1.bf16.msra.mxu0 0
  %4150 = vmatprep.subr.bf16.mxu0 0
  %4151 = vmatpush1.bf16.msra.mxu0 0
  %4152 = vmatprep.subr.bf16.mxu0 0
  %4153 = vmatpush1.bf16.msra.mxu0 0
  %4154 = vmatprep.subr.bf16.mxu0 0
  %4155 = vmatpush1.bf16.msra.mxu0 0
  %4156 = vmatprep.subr.bf16.mxu0 0
  %4157 = vmatpush1.bf16.msra.mxu0 0
  %4158 = vmatprep.mubr.bf16.mxu0 0
  %4159 = vmatmul.mubr.bf16.gmra.mrb[0].mxu0 %v3917
  %v4160 = vpop.f32.mrb[0].mxu0
  %v4161 = vadd.f32 %v4016, %v4160
  %v4162 = vpop.f32.mrb[0].mxu0
  %v4163 = vpop.f32.mrb[0].mxu0
  %v4164 = vadd.f32 %v4019, %v4163
  %v4165 = vpop.f32.mrb[0].mxu0
  %4166 = vmatprep.mubr.bf16.mxu0 0
  %4167 = vmatmul.mubr.bf16.gmra.mrb[0].mxu0 %v3918
  %v4168 = vpop.f32.mrb[0].mxu0
  %v4169 = vadd.f32 %v4024, %v4168
  %v4170 = vpop.f32.mrb[0].mxu0
  %v4171 = vpop.f32.mrb[0].mxu0
  %v4172 = vadd.f32 %v4027, %v4171
  %v4173 = vpop.f32.mrb[0].mxu0
  %4174 = vmatprep.mubr.bf16.mxu0 0
  %4175 = vmatmul.mubr.bf16.gmra.mrb[0].mxu0 %v3919
  %v4176 = vpop.f32.mrb[0].mxu0
  %v4177 = vadd.f32 %v4032, %v4176
  %v4178 = vpop.f32.mrb[0].mxu0
  %v4179 = vpop.f32.mrb[0].mxu0
  %v4180 = vadd.f32 %v4035, %v4179
  %v4181 = vpop.f32.mrb[0].mxu0
  %4182 = vmatprep.mubr.bf16.mxu0 0
  %4183 = vmatmul.mubr.bf16.gmra.mrb[0].mxu0 %v3920
  %v4184 = vpop.f32.mrb[0].mxu0
  %v4185 = vadd.f32 %v4040, %v4184
  %v4186 = vpop.f32.mrb[0].mxu0
  %v4187 = vpop.f32.mrb[0].mxu0
  %v4188 = vadd.f32 %v4043, %v4187
  %v4189 = vpop.f32.mrb[0].mxu0
  %4190 = vmatprep.mubr.bf16.mxu0 0
  %4191 = vmatmul.mubr.bf16.gmra.mrb[0].mxu0 %v3921
  %v4192 = vpop.f32.mrb[0].mxu0
  %v4193 = vadd.f32 %v4048, %v4192
  %v4194 = vpop.f32.mrb[0].mxu0
  %v4195 = vpop.f32.mrb[0].mxu0
  %v4196 = vadd.f32 %v4051, %v4195
  %v4197 = vpop.f32.mrb[0].mxu0
  %4198 = vmatprep.mubr.bf16.mxu0 0
  %4199 = vmatmul.mubr.bf16.gmra.mrb[0].mxu0 %v3922
  %v4200 = vpop.f32.mrb[0].mxu0
  %v4201 = vadd.f32 %v4056, %v4200
  %v4202 = vpop.f32.mrb[0].mxu0
  %v4203 = vpop.f32.mrb[0].mxu0
  %v4204 = vadd.f32 %v4059, %v4203
  %v4205 = vpop.f32.mrb[0].mxu0
  %4206 = vmatprep.mubr.bf16.mxu0 0
  %4207 = vmatmul.mubr.bf16.gmra.mrb[0].mxu0 %v3923
  %v4208 = vpop.f32.mrb[0].mxu0
  %v4209 = vadd.f32 %v4064, %v4208
  %v4210 = vpop.f32.mrb[0].mxu0
  %v4211 = vpop.f32.mrb[0].mxu0
  %v4212 = vadd.f32 %v4067, %v4211
  %v4213 = vpop.f32.mrb[0].mxu0
  %4214 = vmatprep.mubr.bf16.mxu0 0
  %4215 = vmatmul.mubr.bf16.gmra.mrb[0].mxu0 %v3924
  %v4216 = vpop.f32.mrb[0].mxu0
  %v4217 = vadd.f32 %v4072, %v4216
  %v4218 = vpop.f32.mrb[0].mxu0
  %v4219 = vpop.f32.mrb[0].mxu0
  %v4220 = vadd.f32 %v4075, %v4219
  %v4221 = vpop.f32.mrb[0].mxu0
  %4222 = vdwg.mxu0
  %v4224 = vsel %vm644, %v430, 0
  %v4227 = vsel %vm644, %v431, 0
  %v4230 = vsel %vm644, %v432, 0
  %v4233 = vsel %vm644, %v433, 0
  %v4236 = vsel %vm644, %v434, 0
  %v4239 = vsel %vm644, %v435, 0
  %v4242 = vsel %vm644, %v436, 0
  %v4245 = vsel %vm644, %v437, 0
  %v4248 = vsel %vm644, %v438, 0
  %v4251 = vsel %vm644, %v439, 0
  %v4254 = vsel %vm644, %v440, 0
  %v4257 = vsel %vm644, %v441, 0
  %v4260 = vsel %vm644, %v442, 0
  %v4263 = vsel %vm644, %v443, 0
  %v4266 = vsel %vm644, %v444, 0
  %v4269 = vsel %vm644, %v445, 0
  %v4272 = vsel %vm1299, %v779, 0
  %4274 = vmatprep.subr.mxu0 0.0
  %4275 = vmatpush1.msra.mxu0 %v4272
  %4276 = vmatprep.subr.mxu0 0.0
  %4277 = vmatpush1.msra.mxu0 0.0
  %4278 = vmatprep.subr.mxu0 0.0
  %4279 = vmatpush1.msra.mxu0 0.0
  %4280 = vmatprep.subr.mxu0 0.0
  %4281 = vmatpush1.msra.mxu0 0.0
  %4282 = vmatprep.subr.mxu0 0.0
  %4283 = vmatpush1.msra.mxu0 0.0
  %4284 = vmatprep.subr.mxu0 0.0
  %4285 = vmatpush1.msra.mxu0 0.0
  %4286 = vmatprep.subr.mxu0 0.0
  %4287 = vmatpush1.msra.mxu0 0.0
  %4288 = vmatprep.subr.mxu0 0.0
  %4289 = vmatpush1.msra.mxu0 0.0
  %4290 = vmatprep.subr.mxu0 0.0
  %4291 = vmatpush1.msra.mxu0 0.0
  %4292 = vmatprep.subr.mxu0 0.0
  %4293 = vmatpush1.msra.mxu0 0.0
  %4294 = vmatprep.subr.mxu0 0.0
  %4295 = vmatpush1.msra.mxu0 0.0
  %4296 = vmatprep.subr.mxu0 0.0
  %4297 = vmatpush1.msra.mxu0 0.0
  %4298 = vmatprep.subr.mxu0 0.0
  %4299 = vmatpush1.msra.mxu0 0.0
  %4300 = vmatprep.subr.mxu0 0.0
  %4301 = vmatpush1.msra.mxu0 0.0
  %4302 = vmatprep.subr.mxu0 0.0
  %4303 = vmatpush1.msra.mxu0 0.0
  %4304 = vmatprep.subr.mxu0 0.0
  %4305 = vmatpush1.msra.mxu0 0.0
  %4306 = vmatprep.subr.mxu0 0.0
  %4307 = vmatpush1.msra.mxu0 0.0
  %4308 = vmatprep.subr.mxu0 0.0
  %4309 = vmatpush1.msra.mxu0 0.0
  %4310 = vmatprep.subr.mxu0 0.0
  %4311 = vmatpush1.msra.mxu0 0.0
  %4312 = vmatprep.subr.mxu0 0.0
  %4313 = vmatpush1.msra.mxu0 0.0
  %4314 = vmatprep.subr.mxu0 0.0
  %4315 = vmatpush1.msra.mxu0 0.0
  %4316 = vmatprep.subr.mxu0 0.0
  %4317 = vmatpush1.msra.mxu0 0.0
  %4318 = vmatprep.subr.mxu0 0.0
  %4319 = vmatpush1.msra.mxu0 0.0
  %4320 = vmatprep.subr.mxu0 0.0
  %4321 = vmatpush1.msra.mxu0 0.0
  %4322 = vmatprep.subr.mxu0 0.0
  %4323 = vmatpush1.msra.mxu0 0.0
  %4324 = vmatprep.subr.mxu0 0.0
  %4325 = vmatpush1.msra.mxu0 0.0
  %4326 = vmatprep.subr.mxu0 0.0
  %4327 = vmatpush1.msra.mxu0 0.0
  %4328 = vmatprep.subr.mxu0 0.0
  %4329 = vmatpush1.msra.mxu0 0.0
  %4330 = vmatprep.subr.mxu0 0.0
  %4331 = vmatpush1.msra.mxu0 0.0
  %4332 = vmatprep.subr.mxu0 0.0
  %4333 = vmatpush1.msra.mxu0 0.0
  %4334 = vmatprep.subr.mxu0 0.0
  %4335 = vmatpush1.msra.mxu0 0.0
  %4336 = vmatprep.subr.mxu0 0.0
  %4337 = vmatpush1.msra.mxu0 0.0
  %4338 = vmatprep.mubr.f32.mxu0 0.0
  %4339 = vmatmul.mubr.f32.gmra.mrb[0].mxu0 %v4224
  %v4340 = vpop.f32.mrb[0].mxu0
  %v4341 = vadd.f32 0.0, %v4340
  %v4342 = vpop.f32.mrb[0].mxu0
  %4343 = vmatprep.mubr.f32.mxu0 0.0
  %4344 = vmatmul.mubr.f32.gmra.mrb[0].mxu0 %v4227
  %v4345 = vpop.f32.mrb[0].mxu0
  %v4346 = vadd.f32 0.0, %v4345
  %v4347 = vpop.f32.mrb[0].mxu0
  %4348 = vmatprep.mubr.f32.mxu0 0.0
  %4349 = vmatmul.mubr.f32.gmra.mrb[0].mxu0 %v4230
  %v4350 = vpop.f32.mrb[0].mxu0
  %v4351 = vadd.f32 0.0, %v4350
  %v4352 = vpop.f32.mrb[0].mxu0
  %4353 = vmatprep.mubr.f32.mxu0 0.0
  %4354 = vmatmul.mubr.f32.gmra.mrb[0].mxu0 %v4233
  %v4355 = vpop.f32.mrb[0].mxu0
  %v4356 = vadd.f32 0.0, %v4355
  %v4357 = vpop.f32.mrb[0].mxu0
  %4358 = vmatprep.mubr.f32.mxu0 0.0
  %4359 = vmatmul.mubr.f32.gmra.mrb[0].mxu0 %v4236
  %v4360 = vpop.f32.mrb[0].mxu0
  %v4361 = vadd.f32 0.0, %v4360
  %v4362 = vpop.f32.mrb[0].mxu0
  %4363 = vmatprep.mubr.f32.mxu0 0.0
  %4364 = vmatmul.mubr.f32.gmra.mrb[0].mxu0 %v4239
  %v4365 = vpop.f32.mrb[0].mxu0
  %v4366 = vadd.f32 0.0, %v4365
  %v4367 = vpop.f32.mrb[0].mxu0
  %4368 = vmatprep.mubr.f32.mxu0 0.0
  %4369 = vmatmul.mubr.f32.gmra.mrb[0].mxu0 %v4242
  %v4370 = vpop.f32.mrb[0].mxu0
  %v4371 = vadd.f32 0.0, %v4370
  %v4372 = vpop.f32.mrb[0].mxu0
  %4373 = vmatprep.mubr.f32.mxu0 0.0
  %4374 = vmatmul.mubr.f32.gmra.mrb[0].mxu0 %v4245
  %v4375 = vpop.f32.mrb[0].mxu0
  %v4376 = vadd.f32 0.0, %v4375
  %v4377 = vpop.f32.mrb[0].mxu0
  %4378 = vmatprep.mubr.f32.mxu0 0.0
  %4379 = vmatmul.mubr.f32.gmra.mrb[0].mxu0 %v4248
  %v4380 = vpop.f32.mrb[0].mxu0
  %v4381 = vadd.f32 0.0, %v4380
  %v4382 = vpop.f32.mrb[0].mxu0
  %4383 = vmatprep.mubr.f32.mxu0 0.0
  %4384 = vmatmul.mubr.f32.gmra.mrb[0].mxu0 %v4251
  %v4385 = vpop.f32.mrb[0].mxu0
  %v4386 = vadd.f32 0.0, %v4385
  %v4387 = vpop.f32.mrb[0].mxu0
  %4388 = vmatprep.mubr.f32.mxu0 0.0
  %4389 = vmatmul.mubr.f32.gmra.mrb[0].mxu0 %v4254
  %v4390 = vpop.f32.mrb[0].mxu0
  %v4391 = vadd.f32 0.0, %v4390
  %v4392 = vpop.f32.mrb[0].mxu0
  %4393 = vmatprep.mubr.f32.mxu0 0.0
  %4394 = vmatmul.mubr.f32.gmra.mrb[0].mxu0 %v4257
  %v4395 = vpop.f32.mrb[0].mxu0
  %v4396 = vadd.f32 0.0, %v4395
  %v4397 = vpop.f32.mrb[0].mxu0
  %4398 = vmatprep.mubr.f32.mxu0 0.0
  %4399 = vmatmul.mubr.f32.gmra.mrb[0].mxu0 %v4260
  %v4400 = vpop.f32.mrb[0].mxu0
  %v4401 = vadd.f32 0.0, %v4400
  %v4402 = vpop.f32.mrb[0].mxu0
  %4403 = vmatprep.mubr.f32.mxu0 0.0
  %4404 = vmatmul.mubr.f32.gmra.mrb[0].mxu0 %v4263
  %v4405 = vpop.f32.mrb[0].mxu0
  %v4406 = vadd.f32 0.0, %v4405
  %v4407 = vpop.f32.mrb[0].mxu0
  %4408 = vmatprep.mubr.f32.mxu0 0.0
  %4409 = vmatmul.mubr.f32.gmra.mrb[0].mxu0 %v4266
  %v4410 = vpop.f32.mrb[0].mxu0
  %v4411 = vadd.f32 0.0, %v4410
  %v4412 = vpop.f32.mrb[0].mxu0
  %4413 = vmatprep.mubr.f32.mxu0 0.0
  %4414 = vmatmul.mubr.f32.gmra.mrb[0].mxu0 %v4269
  %v4415 = vpop.f32.mrb[0].mxu0
  %v4416 = vadd.f32 0.0, %v4415
  %v4417 = vpop.f32.mrb[0].mxu0
  %4418 = vdwg.mxu0
  %v4419 = vadd.f32 %v4161, %v4341
  %v4420 = vadd.f32 %v4164, %v4346
  %v4421 = vadd.f32 %v4169, %v4351
  %v4422 = vadd.f32 %v4172, %v4356
  %v4423 = vadd.f32 %v4177, %v4361
  %v4424 = vadd.f32 %v4180, %v4366
  %v4425 = vadd.f32 %v4185, %v4371
  %v4426 = vadd.f32 %v4188, %v4376
  %v4427 = vadd.f32 %v4193, %v4381
  %v4428 = vadd.f32 %v4196, %v4386
  %v4429 = vadd.f32 %v4201, %v4391
  %v4430 = vadd.f32 %v4204, %v4396
  %v4431 = vadd.f32 %v4209, %v4401
  %v4432 = vadd.f32 %v4212, %v4406
  %v4433 = vadd.f32 %v4217, %v4411
  %v4434 = vadd.f32 %v4220, %v4416
  %v4435 = vlaneseq
  %v4436 = vshrl.u32 %v4435, 7
  %v4437 = vsub.s32 0, %v4436
  %v4438 = vrot.slane %v788, %v4437
  %v4439 = vadd.f32 %v4419, %v4438
  %v4440 = vadd.f32 %v4420, %v4438
  %v4441 = vadd.f32 %v4421, %v4438
  %v4442 = vadd.f32 %v4422, %v4438
  %v4443 = vadd.f32 %v4423, %v4438
  %v4444 = vadd.f32 %v4424, %v4438
  %v4445 = vadd.f32 %v4425, %v4438
  %v4446 = vadd.f32 %v4426, %v4438
  %v4447 = vadd.f32 %v4427, %v4438
  %v4448 = vadd.f32 %v4428, %v4438
  %v4449 = vadd.f32 %v4429, %v4438
  %v4450 = vadd.f32 %v4430, %v4438
  %v4451 = vadd.f32 %v4431, %v4438
  %v4452 = vadd.f32 %v4432, %v4438
  %v4453 = vadd.f32 %v4433, %v4438
  %v4454 = vadd.f32 %v4434, %v4438
  %v4455 = vmax.f32 %v4439, 0.0
  %v4456 = vmax.f32 %v4440, 0.0
  %v4457 = vmax.f32 %v4441, 0.0
  %v4458 = vmax.f32 %v4442, 0.0
  %v4459 = vmax.f32 %v4443, 0.0
  %v4460 = vmax.f32 %v4444, 0.0
  %v4461 = vmax.f32 %v4445, 0.0
  %v4462 = vmax.f32 %v4446, 0.0
  %v4463 = vmax.f32 %v4447, 0.0
  %v4464 = vmax.f32 %v4448, 0.0
  %v4465 = vmax.f32 %v4449, 0.0
  %v4466 = vmax.f32 %v4450, 0.0
  %v4467 = vmax.f32 %v4451, 0.0
  %v4468 = vmax.f32 %v4452, 0.0
  %v4469 = vmax.f32 %v4453, 0.0
  %v4470 = vmax.f32 %v4454, 0.0
  %4472 = vset.pattern.permute.xlu0 0
  %4473 = vperm.xlu0 %4472, %v790
  %v4474 = vpop.permute.xlu0 %4473
  %4476 = vmatprep.subr.mxu0 0.0
  %4477 = vmatpush1.xpose.msra.mxu0 %v4455
  %4478 = vmatprep.subr.mxu0 0.0
  %4479 = vmatpush1.xpose.msra.mxu0 %v4456
  %4480 = vmatprep.subr.mxu0 0.0
  %4481 = vmatpush1.xpose.msra.mxu0 %v4457
  %4482 = vmatprep.subr.mxu0 0.0
  %4483 = vmatpush1.xpose.msra.mxu0 %v4458
  %4484 = vmatprep.subr.mxu0 0.0
  %4485 = vmatpush1.xpose.msra.mxu0 %v4459
  %4486 = vmatprep.subr.mxu0 0.0
  %4487 = vmatpush1.xpose.msra.mxu0 %v4460
  %4488 = vmatprep.subr.mxu0 0.0
  %4489 = vmatpush1.xpose.msra.mxu0 %v4461
  %4490 = vmatprep.subr.mxu0 0.0
  %4491 = vmatpush1.xpose.msra.mxu0 %v4462
  %4492 = vmatprep.subr.mxu0 0.0
  %4493 = vmatpush1.xpose.msra.mxu0 %v4463
  %4494 = vmatprep.subr.mxu0 0.0
  %4495 = vmatpush1.xpose.msra.mxu0 %v4464
  %4496 = vmatprep.subr.mxu0 0.0
  %4497 = vmatpush1.xpose.msra.mxu0 %v4465
  %4498 = vmatprep.subr.mxu0 0.0
  %4499 = vmatpush1.xpose.msra.mxu0 %v4466
  %4500 = vmatprep.subr.mxu0 0.0
  %4501 = vmatpush1.xpose.msra.mxu0 %v4467
  %4502 = vmatprep.subr.mxu0 0.0
  %4503 = vmatpush1.xpose.msra.mxu0 %v4468
  %4504 = vmatprep.subr.mxu0 0.0
  %4505 = vmatpush1.xpose.msra.mxu0 %v4469
  %4506 = vmatprep.subr.mxu0 0.0
  %4507 = vmatpush1.xpose.msra.mxu0 %v4470
  %4508 = vmatprep.subr.mxu0 0.0
  %4509 = vmatpush1.xpose.msra.mxu0 0.0
  %4510 = vmatprep.subr.mxu0 0.0
  %4511 = vmatpush1.xpose.msra.mxu0 0.0
  %4512 = vmatprep.subr.mxu0 0.0
  %4513 = vmatpush1.xpose.msra.mxu0 0.0
  %4514 = vmatprep.subr.mxu0 0.0
  %4515 = vmatpush1.xpose.msra.mxu0 0.0
  %4516 = vmatprep.subr.mxu0 0.0
  %4517 = vmatpush1.xpose.msra.mxu0 0.0
  %4518 = vmatprep.subr.mxu0 0.0
  %4519 = vmatpush1.xpose.msra.mxu0 0.0
  %4520 = vmatprep.subr.mxu0 0.0
  %4521 = vmatpush1.xpose.msra.mxu0 0.0
  %4522 = vmatprep.subr.mxu0 0.0
  %4523 = vmatpush1.xpose.msra.mxu0 0.0
  %4524 = vmatprep.subr.mxu0 0.0
  %4525 = vmatpush1.xpose.msra.mxu0 0.0
  %4526 = vmatprep.subr.mxu0 0.0
  %4527 = vmatpush1.xpose.msra.mxu0 0.0
  %4528 = vmatprep.subr.mxu0 0.0
  %4529 = vmatpush1.xpose.msra.mxu0 0.0
  %4530 = vmatprep.subr.mxu0 0.0
  %4531 = vmatpush1.xpose.msra.mxu0 0.0
  %4532 = vmatprep.subr.mxu0 0.0
  %4533 = vmatpush1.xpose.msra.mxu0 0.0
  %4534 = vmatprep.subr.mxu0 0.0
  %4535 = vmatpush1.xpose.msra.mxu0 0.0
  %4536 = vmatprep.subr.mxu0 0.0
  %4537 = vmatpush1.xpose.msra.mxu0 0.0
  %4538 = vmatprep.subr.mxu0 0.0
  %4539 = vmatpush1.xpose.msra.mxu0 0.0
  %4540 = vmatprep.mubr.f32.mxu0 0.0
  %4541 = vmatmul.mubr.f32.gmra.mrb[0].mxu0 %v789
  %v4542 = vpop.f32.mrb[0].mxu0
  %v4543 = vadd.f32 %v4474, %v4542
  %v4544 = vpop.f32.mrb[0].mxu0
  %4545 = vdwg.mxu0
  %4546 = vst [vmem:[%s7] sm:$0x1] %v4543
  // Predicated region
  $region30: #{schedule_gnn_forward.1} parent=0 // pred_check
    _
  $region31: #{schedule_gnn_forward.1} parent=0 // pred_check_branch
    %4548 = sbr.rel (0) target = $region33
  $region32: #{schedule_gnn_forward.1} parent=0 // pred_region
    _
  $region33: #{schedule_gnn_forward.1} parent=0 // pred_fallthru
    _
  // Predicated region
  $region34: #{schedule_gnn_forward.1} parent=0 // pred_check
    _
  $region35: #{schedule_gnn_forward.1} parent=0 // pred_check_branch
    %4550 = sbr.rel (0) target = $region37
  $region36: #{schedule_gnn_forward.1} parent=0 // pred_region
    _
  $region37: #{schedule_gnn_forward.1} parent=0 // pred_fallthru
    _

</llo_original>
